<compile_context>
chip_gen: v6e
topology: v6e:2x2x1
jax: 0.10.0
libtpu: 0.0.40
codegen_flags: <defaults>
</compile_context>

<pallas_src>
import functools

import jax
import jax.numpy as jnp
import numpy as np
from jax.experimental import pallas as pl
from jax.experimental.pallas import tpu as pltpu

EPS = 1e-5          # nn.BatchNorm2d default eps
TM_DEFAULT = 1024   # lane tile over flattened spatial positions


def _round_up(x, m):
    return (x + m - 1) // m * m


@functools.lru_cache(maxsize=None)
def _vmem_limit_bytes():
    try:  # trace-time hardware query; adaptive per generation
        cap = int(pltpu.get_tpu_info().vmem_capacity_bytes)
        return max(32 << 20, min(cap * 7 // 8, 100 << 20))
    except Exception:
        return 56 << 20  # safe on every generation (v7x has 64 MiB physical VMEM)


def _compiler_params():
    return pltpu.CompilerParams(dimension_semantics=("parallel",),
                                vmem_limit_bytes=_vmem_limit_bytes())


def _pick_tm(mp, wp, tm):
    assert tm >= 128 and tm % 128 == 0
    while tm > 128 and (mp + tm - 1) // tm < 2:   # keep >= 2 grid steps (v7x megacore)
        tm //= 2
    tm = max(tm, _round_up(wp + 1, 128))          # halo |shift| <= wp+1 must fit one tile
    return tm


# ----------------------------- Pallas kernels ------------------------------ #

def _make_fused_conv_kernel(tm, wp, bn_relu):
    """3x3 stride-1 conv as 9 shifted MXU matmuls + masked BN partial stats.

    Layout: feature-major (C, M), M = flattened (N, Hp, Wp) padded grid; valid data
    sits in the top-left (Ho, Wo) corner of every image, zeros fill the 2-row/2-col
    bottom/right border, the tail and the +/-TM halos.  Output position p sums
    W[dy,dx] @ x[p + (dy-1)*Wp + (dx-1)].
    """
    offs = [(dy - 1) * wp + (dx - 1) for dy in range(3) for dx in range(3)]

    def body(cat, m_c, w_ref, y_ref, sum_ref, sq_ref):
        acc = None
        for t, s in enumerate(offs):
            shifted = cat[:, tm + s:2 * tm + s]                 # (Cin, tm) bf16
            d = jnp.dot(w_ref[t], shifted, preferred_element_type=jnp.float32)
            acc = d if acc is None else acc + d
        y_ref[...] = acc.astype(y_ref.dtype)                    # raw conv output (bf16)
        stats = acc * m_c                                       # mask garbage border/tail
        sum_ref[...] = jnp.sum(stats, axis=1, keepdims=True)[None]
        sq_ref[...] = jnp.sum(stats * stats, axis=1, keepdims=True)[None]

    if bn_relu:
        # conv2: fuse BN1-apply + ReLU + padding-ring masking of the *input* views.
        def kernel(xp_ref, xc_ref, xn_ref, mskp_ref, mskc_ref, mskn_ref,
                   sc_ref, shf_ref, w_ref, y_ref, sum_ref, sq_ref):
            ycat = jnp.concatenate([xp_ref[...], xc_ref[...], xn_ref[...]],
                                   axis=1).astype(jnp.float32)          # (C, 3*tm)
            mcat = jnp.concatenate([mskp_ref[...], mskc_ref[...], mskn_ref[...]], axis=1)
            hcat = (jnp.maximum(ycat * sc_ref[...] + shf_ref[...], 0.0)
                    * mcat).astype(jnp.bfloat16)
            body(hcat, mcat[:, tm:2 * tm], w_ref, y_ref, sum_ref, sq_ref)
    else:
        # conv1 (stride 1): input is already a masked, zero-halo'd bf16 activation.
        def kernel(xp_ref, xc_ref, xn_ref, mskc_ref, w_ref, y_ref, sum_ref, sq_ref):
            cat = jnp.concatenate([xp_ref[...], xc_ref[...], xn_ref[...]], axis=1)
            body(cat, mskc_ref[...], w_ref, y_ref, sum_ref, sq_ref)

    return kernel


def _im2col_conv_kernel(p_ref, w_ref, y_ref, sum_ref, sq_ref):
    # Stride-2 conv1: patch columns at invalid (border/tail) positions are exactly
    # zero, so the partial sums need no masking here.
    acc = jnp.dot(w_ref[...], p_ref[...], preferred_element_type=jnp.float32)
    y_ref[...] = acc.astype(y_ref.dtype)
    sum_ref[...] = jnp.sum(acc, axis=1, keepdims=True)[None]
    sq_ref[...] = jnp.sum(acc * acc, axis=1, keepdims=True)[None]


def _bn_add_relu_kernel(y_ref, sc_ref, sh_ref, r_ref, o_ref):
    # BN2 apply + identity residual + ReLU (stride == 1 path).
    o_ref[...] = jnp.maximum(y_ref[...].astype(jnp.float32) * sc_ref[...] + sh_ref[...]
                             + r_ref[...].astype(jnp.float32), 0.0)


def _bn_proj_relu_kernel(y_ref, sc_ref, sh_ref, xs_ref, w3_ref, b3_ref, o_ref):
    # BN2 apply + 1x1 stride-2 projection residual + ReLU (stride == 2 path).
    res = jnp.dot(w3_ref[...], xs_ref[...], preferred_element_type=jnp.float32) + b3_ref[...]
    o_ref[...] = jnp.maximum(y_ref[...].astype(jnp.float32) * sc_ref[...] + sh_ref[...] + res,
                             0.0)


# --------------------------- pallas_call wrappers --------------------------- #

def _conv1_fused_call(xin, maskx, w9, tm, wp):
    cin, total = xin.shape
    mp_pad = total - 2 * tm
    cout = w9.shape[1]
    grid = mp_pad // tm
    cost = pl.CostEstimate(
        flops=2 * 9 * cout * cin * mp_pad + 4 * cout * mp_pad, transcendentals=0,
        bytes_accessed=(3 * cin * mp_pad * 2 + int(w9.size) * 2 + cout * mp_pad * 2
                        + int(maskx.size) * 4 + 2 * grid * cout * 4))
    return pl.pallas_call(
        _make_fused_conv_kernel(tm, wp, bn_relu=False),
        out_shape=(jax.ShapeDtypeStruct((cout, mp_pad), jnp.bfloat16),
                   jax.ShapeDtypeStruct((grid, cout, 1), jnp.float32),
                   jax.ShapeDtypeStruct((grid, cout, 1), jnp.float32)),
        grid=(grid,),
        in_specs=[pl.BlockSpec((cin, tm), lambda i: (0, i)),        # left-halo tile
                  pl.BlockSpec((cin, tm), lambda i: (0, i + 1)),    # current tile
                  pl.BlockSpec((cin, tm), lambda i: (0, i + 2)),    # right-halo tile
                  pl.BlockSpec((1, tm), lambda i: (0, i + 1)),      # stats mask (center)
                  pl.BlockSpec((9, cout, cin), lambda i: (0, 0, 0))],
        out_specs=(pl.BlockSpec((cout, tm), lambda i: (0, i)),
                   pl.BlockSpec((1, cout, 1), lambda i: (i, 0, 0)),
                   pl.BlockSpec((1, cout, 1), lambda i: (i, 0, 0))),
        compiler_params=_compiler_params(),
        cost_estimate=cost,
    )(xin, xin, xin, maskx, w9)


def _conv2_fused_call(y1, maskx, sc, sh, w9, tm, wp):
    cin, mp_pad = y1.shape
    cout = w9.shape[1]
    grid = mp_pad // tm
    last = grid - 1
    cost = pl.CostEstimate(
        flops=2 * 9 * cout * cin * mp_pad + 12 * cin * mp_pad + 4 * cout * mp_pad,
        transcendentals=0,
        bytes_accessed=(3 * cin * mp_pad * 2 + int(w9.size) * 2 + cout * mp_pad * 2
                        + int(maskx.size) * 4 + 2 * grid * cout * 4))
    return pl.pallas_call(
        _make_fused_conv_kernel(tm, wp, bn_relu=True),
        out_shape=(jax.ShapeDtypeStruct((cout, mp_pad), jnp.bfloat16),
                   jax.ShapeDtypeStruct((grid, cout, 1), jnp.float32),
                   jax.ShapeDtypeStruct((grid, cout, 1), jnp.float32)),
        grid=(grid,),
        in_specs=[  # clamped y1 views; the halo'd masks zero the out-of-range positions
            pl.BlockSpec((cin, tm), lambda i: (0, jnp.maximum(i - 1, 0))),
            pl.BlockSpec((cin, tm), lambda i: (0, i)),
            pl.BlockSpec((cin, tm), lambda i: (0, jnp.minimum(i + 1, last))),
            pl.BlockSpec((1, tm), lambda i: (0, i)),
            pl.BlockSpec((1, tm), lambda i: (0, i + 1)),
            pl.BlockSpec((1, tm), lambda i: (0, i + 2)),
            pl.BlockSpec((cin, 1), lambda i: (0, 0)),               # BN1 scale
            pl.BlockSpec((cin, 1), lambda i: (0, 0)),               # BN1 shift
            pl.BlockSpec((9, cout, cin), lambda i: (0, 0, 0))],
        out_specs=(pl.BlockSpec((cout, tm), lambda i: (0, i)),
                   pl.BlockSpec((1, cout, 1), lambda i: (i, 0, 0)),
                   pl.BlockSpec((1, cout, 1), lambda i: (i, 0, 0))),
        compiler_params=_compiler_params(),
        cost_estimate=cost,
    )(y1, y1, y1, maskx, maskx, maskx, sc, sh, w9)


def _im2col_conv_call(p, w, tm):
    k, mp_pad = p.shape
    cout = w.shape[0]
    grid = mp_pad // tm
    cost = pl.CostEstimate(
        flops=2 * cout * k * mp_pad + 4 * cout * mp_pad, transcendentals=0,
        bytes_accessed=int(p.size) * 2 + int(w.size) * 2 + cout * mp_pad * 2
                       + 2 * grid * cout * 4)
    return pl.pallas_call(
        _im2col_conv_kernel,
        out_shape=(jax.ShapeDtypeStruct((cout, mp_pad), jnp.bfloat16),
                   jax.ShapeDtypeStruct((grid, cout, 1), jnp.float32),
                   jax.ShapeDtypeStruct((grid, cout, 1), jnp.float32)),
        grid=(grid,),
        in_specs=[pl.BlockSpec((k, tm), lambda i: (0, i)),
                  pl.BlockSpec((cout, k), lambda i: (0, 0))],
        out_specs=(pl.BlockSpec((cout, tm), lambda i: (0, i)),
                   pl.BlockSpec((1, cout, 1), lambda i: (i, 0, 0)),
                   pl.BlockSpec((1, cout, 1), lambda i: (i, 0, 0))),
        compiler_params=_compiler_params(),
        cost_estimate=cost,
    )(p, w)


def _bn_add_relu_call(y, sc, sh, xin, tm):
    cout, mp_pad = y.shape
    grid = mp_pad // tm
    return pl.pallas_call(
        _bn_add_relu_kernel,
        out_shape=jax.ShapeDtypeStruct((cout, mp_pad), jnp.float32),
        grid=(grid,),
        in_specs=[pl.BlockSpec((cout, tm), lambda i: (0, i)),
                  pl.BlockSpec((cout, 1), lambda i: (0, 0)),
                  pl.BlockSpec((cout, 1), lambda i: (0, 0)),
                  pl.BlockSpec((cout, tm), lambda i: (0, i + 1))],  # xin has a TM front halo
        out_specs=pl.BlockSpec((cout, tm), lambda i: (0, i)),
        compiler_params=_compiler_params(),
    )(y, sc, sh, xin)


def _bn_proj_relu_call(y, sc, sh, xs, w3, b3, tm):
    cout, mp_pad = y.shape
    cin = xs.shape[0]
    grid = mp_pad // tm
    return pl.pallas_call(
        _bn_proj_relu_kernel,
        out_shape=jax.ShapeDtypeStruct((cout, mp_pad), jnp.float32),
        grid=(grid,),
        in_specs=[pl.BlockSpec((cout, tm), lambda i: (0, i)),
                  pl.BlockSpec((cout, 1), lambda i: (0, 0)),
                  pl.BlockSpec((cout, 1), lambda i: (0, 0)),
                  pl.BlockSpec((cin, tm), lambda i: (0, i)),
                  pl.BlockSpec((cout, cin), lambda i: (0, 0)),
                  pl.BlockSpec((cout, 1), lambda i: (0, 0))],
        out_specs=pl.BlockSpec((cout, tm), lambda i: (0, i)),
        compiler_params=_compiler_params(),
    )(y, sc, sh, xs, w3, b3)


# ------------------------------ JAX-side glue ------------------------------ #

def _to_padded_cm(x_c, hp, wp):
    """(C, N, H, W) -> (C, N*Hp*Wp): data in the top-left corner of every (Hp, Wp)
    image, zeros in the 2-row/2-col right/bottom border."""
    c, n, h, w = x_c.shape
    xp = jnp.pad(x_c, ((0, 0), (0, 0), (0, hp - h), (0, wp - w)))
    return xp.reshape(c, n * hp * wp)


def _add_halo(a_cm, mp_pad, tm):
    """(C, Mp) -> (C, TM + Mp_pad + TM): zero front/back halos and zero tail."""
    c, mp = a_cm.shape
    return jnp.pad(a_cm, ((0, 0), (tm, mp_pad - mp + tm)))


def _valid_mask(n, ho, wo, hp, wp, mp_pad, tm):
    """Extended validity mask (1, TM + Mp_pad + TM): 1 at real output positions
    (row < Ho, col < Wo of each image), 0 at the border ring, tail and halos."""
    p = jnp.arange(n * hp * wp, dtype=jnp.int32)
    valid = ((p % wp) < wo) & (((p // wp) % hp) < ho)
    core = valid.astype(jnp.float32)[None, :]
    return jnp.pad(core, ((0, 0), (tm, mp_pad - n * hp * wp + tm)))


def _flatten_w3x3(w_oihw):
    # (Cout, Cin, 3, 3) -> (Cout, 9*Cin), column order (dy, dx, cin): matches im2col rows.
    return jnp.transpose(w_oihw, (0, 2, 3, 1)).reshape(w_oihw.shape[0], -1)


def _shifted_w3x3(w_oihw):
    # (Cout, Cin, 3, 3) -> (9, Cout, Cin), index t = dy*3 + dx: matches the fused kernel.
    cout, cin = w_oihw.shape[0], w_oihw.shape[1]
    return jnp.transpose(w_oihw, (2, 3, 0, 1)).reshape(9, cout, cin)


def _im2col_s2(x_c, ho, wo, hp, wp, mp_pad):
    """Stride-2 3x3 im2col whose columns land directly in the padded top-left layout."""
    c, n, h, w = x_c.shape
    xp = jnp.pad(x_c, ((0, 0), (0, 0), (1, 1), (1, 1)))
    cols = []
    for dy in range(3):
        for dx in range(3):
            v = xp[:, :, dy:dy + 2 * (ho - 1) + 1:2, dx:dx + 2 * (wo - 1) + 1:2]
            cols.append(jnp.pad(v, ((0, 0), (0, 0), (0, hp - ho), (0, wp - wo))))
    patches = jnp.stack(cols, axis=0).reshape(9 * c, n * hp * wp)
    return jnp.pad(patches, ((0, 0), (0, mp_pad - n * hp * wp)))


def _bn_scale_shift(psum, psq, m_valid, g, beta):
    # Batch statistics (biased variance), exactly like BatchNorm2d in train mode.
    # TODO(synk): one-pass E[x^2]-E[x]^2 in f32 can lose precision for large-mean inputs.
    mean = psum / m_valid
    var = jnp.maximum(psq / m_valid - mean * mean, 0.0)
    scale = g * jax.lax.rsqrt(var + EPS)
    return scale, beta - mean * scale


@functools.partial(jax.jit, static_argnames=("stride", "padding", "tm"))
def resnet_block_forward(x_nchw, params, stride=1, padding=1, tm=TM_DEFAULT):
    assert padding == 1, "only the module default padding=1 is supported"
    assert stride in (1, 2)
    n, cin, h, w = x_nchw.shape
    cout = params["w1"].shape[0]
    if stride == 1:
        assert cin == cout, "identity residual requires input_features == output_features"

    ho = (h + 2 * padding - 3) // stride + 1
    wo = (w + 2 * padding - 3) // stride + 1
    hp, wp = ho + 2, wo + 2                 # padded grid shared by conv1-out / conv2
    mp = n * hp * wp
    tm = _pick_tm(mp, wp, tm)
    mp_pad = _round_up(mp, tm)
    m_valid = float(n * ho * wo)

    x_c = jnp.transpose(x_nchw.astype(jnp.float32), (1, 0, 2, 3))   # (Cin, N, H, W)
    # TODO(synk): when chaining blocks, keep activations feature-major and only
    # transpose at network boundaries.

    maskx = _valid_mask(n, ho, wo, hp, wp, mp_pad, tm)              # (1, tm+mp_pad+tm)

    def colv(v):
        return v.reshape(-1, 1).astype(jnp.float32)

    # ---- conv1 (+ BN1 partial stats); conv bias cancelled by batch-stat BN ---- #
    if stride == 1:
        xin1 = _add_halo(_to_padded_cm(x_c, hp, wp), mp_pad, tm).astype(jnp.bfloat16)
        y1, s1, q1 = _conv1_fused_call(
            xin1, maskx, _shifted_w3x3(params["w1"]).astype(jnp.bfloat16), tm, wp)
    else:
        p1 = _im2col_s2(x_c, ho, wo, hp, wp, mp_pad).astype(jnp.bfloat16)
        y1, s1, q1 = _im2col_conv_call(
            p1, _flatten_w3x3(params["w1"]).astype(jnp.bfloat16), tm)
    sc1, sh1 = _bn_scale_shift(s1.sum(0), q1.sum(0), m_valid,
                               colv(params["g1"]), colv(params["beta1"]))

    # ---- conv2 with BN1-apply + ReLU fused into its input path (+ BN2 stats) -- #
    y2, s2, q2 = _conv2_fused_call(
        y1, maskx, sc1, sh1, _shifted_w3x3(params["w2"]).astype(jnp.bfloat16), tm, wp)
    sc2, sh2 = _bn_scale_shift(s2.sum(0), q2.sum(0), m_valid,
                               colv(params["g2"]), colv(params["beta2"]))

    # ---- BN2 apply + residual + ReLU ------------------------------------------ #
    if stride == 2:
        xs = _to_padded_cm(x_c[:, :, ::stride, ::stride], hp, wp)
        xs = jnp.pad(xs, ((0, 0), (0, mp_pad - mp))).astype(jnp.bfloat16)
        w3 = params["w3"][:, :, 0, 0].astype(jnp.bfloat16)
        out = _bn_proj_relu_call(y2, sc2, sh2, xs, w3, colv(params["b3"]), tm)
    else:
        out = _bn_add_relu_call(y2, sc2, sh2, xin1, tm)    # identity residual from xin1

    out = out[:, :mp].reshape(cout, n, hp, wp)[:, :, :ho, :wo]
    return jnp.transpose(out, (1, 0, 2, 3))                # back to NCHW


# -------------------------- pure-JAX reference ----------------------------- #

def reference_forward(x, params, stride=1, padding=1):
    def conv(x, w, b, s, p):
        y = jax.lax.conv_general_dilated(
            x, w, (s, s), ((p, p), (p, p)),
            dimension_numbers=("NCHW", "OIHW", "NCHW"),
            precision=jax.lax.Precision.HIGHEST)
        return y + b[None, :, None, None]

    def bn(x, g, beta):
        mean = jnp.mean(x, axis=(0, 2, 3), keepdims=True)
        var = jnp.mean((x - mean) ** 2, axis=(0, 2, 3), keepdims=True)
        return ((x - mean) * jax.lax.rsqrt(var + EPS)
                * g[None, :, None, None] + beta[None, :, None, None])

    hid = jax.nn.relu(bn(conv(x, params["w1"], params["b1"], stride, padding),
                         params["g1"], params["beta1"]))
    hid = bn(conv(hid, params["w2"], params["b2"], 1, padding),
             params["g2"], params["beta2"])
    if stride == 2:
        x = conv(x, params["w3"], params["b3"], stride, 0)
    return jax.nn.relu(hid + x)


# ------------------------- deterministic parameters ------------------------ #

def init_params(key, cin, cout):
    ks = jax.random.split(key, 8)
    return {
        "w1": 0.1 * jax.random.normal(ks[0], (cout, cin, 3, 3), jnp.float32),
        "b1": 0.1 * jax.random.normal(ks[1], (cout,), jnp.float32),
        "w2": 0.1 * jax.random.normal(ks[2], (cout, cout, 3, 3), jnp.float32),
        "b2": 0.1 * jax.random.normal(ks[3], (cout,), jnp.float32),
        "w3": 0.1 * jax.random.normal(ks[4], (cout, cin, 1, 1), jnp.float32),
        "b3": 0.1 * jax.random.normal(ks[5], (cout,), jnp.float32),
        "g1": 1.0 + 0.1 * jax.random.normal(ks[6], (cout,), jnp.float32),
        "beta1": jnp.full((cout,), 0.05, jnp.float32),
        "g2": jnp.full((cout,), 0.9, jnp.float32),
        "beta2": 0.1 * jax.random.normal(ks[7], (cout,), jnp.float32),
    }


if __name__ == "__main__":
    key = jax.random.PRNGKey(0)
    kx1, kx2, kp1, kp2 = jax.random.split(key, 4)

    # Case 1: stride=1, identity residual (8 -> 8 ch); tm auto-shrinks to 512 -> 2 tiles.
    x1 = jax.random.normal(kx1, (2, 8, 16, 16), jnp.float32)
    prm1 = init_params(kp1, 8, 8)
    out1 = resnet_block_forward(x1, prm1, stride=1)
    ref1 = reference_forward(x1, prm1, stride=1)

    # Case 1b: same data at tm=128 -> 6 tiles; stresses halo reads / clamped views.
    out1b = resnet_block_forward(x1, prm1, stride=1, tm=128)

    # Case 2: stride=2, 1x1 stride-2 projection residual (4 -> 8 ch); conv1 via im2col.
    x2 = jax.random.normal(kx2, (2, 4, 16, 16), jnp.float32)
    prm2 = init_params(kp2, 4, 8)
    out2 = resnet_block_forward(x2, prm2, stride=2)
    ref2 = reference_forward(x2, prm2, stride=2)

    jax.block_until_ready((out1, out1b, out2))
    assert out1.shape == (2, 8, 16, 16), out1.shape
    assert out2.shape == (2, 8, 8, 8), out2.shape
    # Precision contract: all inter-pass activations (y1, y2, residual read) are bf16 and
    # the MXU uses bf16 operands with f32 accumulation, vs the f32 HIGHEST reference.
    np.testing.assert_allclose(np.asarray(out1), np.asarray(ref1), rtol=4e-2, atol=4e-2)
    np.testing.assert_allclose(np.asarray(out1b), np.asarray(ref1), rtol=4e-2, atol=4e-2)
    np.testing.assert_allclose(np.asarray(out2), np.asarray(ref2), rtol=4e-2, atol=4e-2)
    print("KERNEL_OK")
</pallas_src>

<mosaic_0001>
module attributes {stable_mosaic.version = 11 : i64} {
  func.func @kernel(%arg0: i32, %arg1: memref<8x512xbf16, #tpu.memory_space<vmem>>, %arg2: memref<8x512xbf16, #tpu.memory_space<vmem>>, %arg3: memref<8x512xbf16, #tpu.memory_space<vmem>>, %arg4: memref<1x512xf32, #tpu.memory_space<vmem>>, %arg5: memref<9x8x8xbf16, #tpu.memory_space<vmem>>, %arg6: memref<8x512xbf16, #tpu.memory_space<vmem>>, %arg7: memref<1x8x1xf32, #tpu.memory_space<vmem>>, %arg8: memref<1x8x1xf32, #tpu.memory_space<vmem>>) attributes {dimension_semantics = [#tpu.dimension_semantics<parallel>], iteration_bounds = array<i64: 2>, scalar_prefetch = 0 : i64, scratch_operands = 0 : i64, tpu.core_type = #tpu.core_type<tc>, window_params = [{transform_indices = @transform_0, window_bounds = array<i64: 8, 512>}, {transform_indices = @transform_1, window_bounds = array<i64: 8, 512>}, {transform_indices = @transform_2, window_bounds = array<i64: 8, 512>}, {transform_indices = @transform_3, window_bounds = array<i64: 1, 512>}, {pipeline_mode = #tpu.pipeline_mode<synchronous>, transform_indices = @transform_4, window_bounds = array<i64: 9, 8, 8>}, {transform_indices = @transform_5, window_bounds = array<i64: 8, 512>}, {transform_indices = @transform_6, window_bounds = array<i64: 1, 8, 1>}, {transform_indices = @transform_7, window_bounds = array<i64: 1, 8, 1>}]} {
    %c0 = arith.constant 0 : index
    %c0_0 = arith.constant 0 : index
    %0 = vector.load %arg1[%c0, %c0_0] : memref<8x512xbf16, #tpu.memory_space<vmem>>, vector<8x512xbf16>
    %c0_1 = arith.constant 0 : index
    %c0_2 = arith.constant 0 : index
    %1 = vector.load %arg2[%c0_1, %c0_2] : memref<8x512xbf16, #tpu.memory_space<vmem>>, vector<8x512xbf16>
    %c0_3 = arith.constant 0 : index
    %c0_4 = arith.constant 0 : index
    %2 = vector.load %arg3[%c0_3, %c0_4] : memref<8x512xbf16, #tpu.memory_space<vmem>>, vector<8x512xbf16>
    %3 = tpu.concatenate %0, %1, %2 in 1 : vector<8x512xbf16>, vector<8x512xbf16>, vector<8x512xbf16> -> vector<8x1536xbf16>
    %c0_5 = arith.constant 0 : index
    %c0_6 = arith.constant 0 : index
    %4 = vector.load %arg4[%c0_5, %c0_6] : memref<1x512xf32, #tpu.memory_space<vmem>>, vector<1x512xf32>
    %5 = vector.extract_strided_slice %3 {offsets = [0, 493], sizes = [8, 512], strides = [1, 1]} : vector<8x1536xbf16> to vector<8x512xbf16>
    %c0_7 = arith.constant 0 : index
    %c0_8 = arith.constant 0 : index
    %c0_9 = arith.constant 0 : index
    %6 = vector.load %arg5[%c0_7, %c0_8, %c0_9] : memref<9x8x8xbf16, #tpu.memory_space<vmem>>, vector<1x8x8xbf16>
    %7 = vector.shape_cast %6 : vector<1x8x8xbf16> to vector<8x8xbf16>
    %cst = arith.constant dense<0.000000e+00> : vector<8x512xf32>
    %8 = tpu.matmul %7, %5, %cst {dimension_numbers = #tpu.dot_dimension_numbers<[1], [0], [0], [1], [0, 0, 1, 1], [], []>} : vector<8x8xbf16>, vector<8x512xbf16>, vector<8x512xf32> -> vector<8x512xf32>
    %9 = vector.extract_strided_slice %3 {offsets = [0, 494], sizes = [8, 512], strides = [1, 1]} : vector<8x1536xbf16> to vector<8x512xbf16>
    %c1 = arith.constant 1 : index
    %c0_10 = arith.constant 0 : index
    %c0_11 = arith.constant 0 : index
    %10 = vector.load %arg5[%c1, %c0_10, %c0_11] : memref<9x8x8xbf16, #tpu.memory_space<vmem>>, vector<1x8x8xbf16>
    %11 = vector.shape_cast %10 : vector<1x8x8xbf16> to vector<8x8xbf16>
    %cst_12 = arith.constant dense<0.000000e+00> : vector<8x512xf32>
    %12 = tpu.matmul %11, %9, %cst_12 {dimension_numbers = #tpu.dot_dimension_numbers<[1], [0], [0], [1], [0, 0, 1, 1], [], []>} : vector<8x8xbf16>, vector<8x512xbf16>, vector<8x512xf32> -> vector<8x512xf32>
    %13 = arith.addf %8, %12 : vector<8x512xf32>
    %14 = vector.extract_strided_slice %3 {offsets = [0, 495], sizes = [8, 512], strides = [1, 1]} : vector<8x1536xbf16> to vector<8x512xbf16>
    %c2 = arith.constant 2 : index
    %c0_13 = arith.constant 0 : index
    %c0_14 = arith.constant 0 : index
    %15 = vector.load %arg5[%c2, %c0_13, %c0_14] : memref<9x8x8xbf16, #tpu.memory_space<vmem>>, vector<1x8x8xbf16>
    %16 = vector.shape_cast %15 : vector<1x8x8xbf16> to vector<8x8xbf16>
    %cst_15 = arith.constant dense<0.000000e+00> : vector<8x512xf32>
    %17 = tpu.matmul %16, %14, %cst_15 {dimension_numbers = #tpu.dot_dimension_numbers<[1], [0], [0], [1], [0, 0, 1, 1], [], []>} : vector<8x8xbf16>, vector<8x512xbf16>, vector<8x512xf32> -> vector<8x512xf32>
    %18 = arith.addf %13, %17 : vector<8x512xf32>
    %19 = vector.extract_strided_slice %3 {offsets = [0, 511], sizes = [8, 512], strides = [1, 1]} : vector<8x1536xbf16> to vector<8x512xbf16>
    %c3 = arith.constant 3 : index
    %c0_16 = arith.constant 0 : index
    %c0_17 = arith.constant 0 : index
    %20 = vector.load %arg5[%c3, %c0_16, %c0_17] : memref<9x8x8xbf16, #tpu.memory_space<vmem>>, vector<1x8x8xbf16>
    %21 = vector.shape_cast %20 : vector<1x8x8xbf16> to vector<8x8xbf16>
    %cst_18 = arith.constant dense<0.000000e+00> : vector<8x512xf32>
    %22 = tpu.matmul %21, %19, %cst_18 {dimension_numbers = #tpu.dot_dimension_numbers<[1], [0], [0], [1], [0, 0, 1, 1], [], []>} : vector<8x8xbf16>, vector<8x512xbf16>, vector<8x512xf32> -> vector<8x512xf32>
    %23 = arith.addf %18, %22 : vector<8x512xf32>
    %24 = vector.extract_strided_slice %3 {offsets = [0, 512], sizes = [8, 512], strides = [1, 1]} : vector<8x1536xbf16> to vector<8x512xbf16>
    %c4 = arith.constant 4 : index
    %c0_19 = arith.constant 0 : index
    %c0_20 = arith.constant 0 : index
    %25 = vector.load %arg5[%c4, %c0_19, %c0_20] : memref<9x8x8xbf16, #tpu.memory_space<vmem>>, vector<1x8x8xbf16>
    %26 = vector.shape_cast %25 : vector<1x8x8xbf16> to vector<8x8xbf16>
    %cst_21 = arith.constant dense<0.000000e+00> : vector<8x512xf32>
    %27 = tpu.matmul %26, %24, %cst_21 {dimension_numbers = #tpu.dot_dimension_numbers<[1], [0], [0], [1], [0, 0, 1, 1], [], []>} : vector<8x8xbf16>, vector<8x512xbf16>, vector<8x512xf32> -> vector<8x512xf32>
    %28 = arith.addf %23, %27 : vector<8x512xf32>
    %29 = vector.extract_strided_slice %3 {offsets = [0, 513], sizes = [8, 512], strides = [1, 1]} : vector<8x1536xbf16> to vector<8x512xbf16>
    %c5 = arith.constant 5 : index
    %c0_22 = arith.constant 0 : index
    %c0_23 = arith.constant 0 : index
    %30 = vector.load %arg5[%c5, %c0_22, %c0_23] : memref<9x8x8xbf16, #tpu.memory_space<vmem>>, vector<1x8x8xbf16>
    %31 = vector.shape_cast %30 : vector<1x8x8xbf16> to vector<8x8xbf16>
    %cst_24 = arith.constant dense<0.000000e+00> : vector<8x512xf32>
    %32 = tpu.matmul %31, %29, %cst_24 {dimension_numbers = #tpu.dot_dimension_numbers<[1], [0], [0], [1], [0, 0, 1, 1], [], []>} : vector<8x8xbf16>, vector<8x512xbf16>, vector<8x512xf32> -> vector<8x512xf32>
    %33 = arith.addf %28, %32 : vector<8x512xf32>
    %34 = vector.extract_strided_slice %3 {offsets = [0, 529], sizes = [8, 512], strides = [1, 1]} : vector<8x1536xbf16> to vector<8x512xbf16>
    %c6 = arith.constant 6 : index
    %c0_25 = arith.constant 0 : index
    %c0_26 = arith.constant 0 : index
    %35 = vector.load %arg5[%c6, %c0_25, %c0_26] : memref<9x8x8xbf16, #tpu.memory_space<vmem>>, vector<1x8x8xbf16>
    %36 = vector.shape_cast %35 : vector<1x8x8xbf16> to vector<8x8xbf16>
    %cst_27 = arith.constant dense<0.000000e+00> : vector<8x512xf32>
    %37 = tpu.matmul %36, %34, %cst_27 {dimension_numbers = #tpu.dot_dimension_numbers<[1], [0], [0], [1], [0, 0, 1, 1], [], []>} : vector<8x8xbf16>, vector<8x512xbf16>, vector<8x512xf32> -> vector<8x512xf32>
    %38 = arith.addf %33, %37 : vector<8x512xf32>
    %39 = vector.extract_strided_slice %3 {offsets = [0, 530], sizes = [8, 512], strides = [1, 1]} : vector<8x1536xbf16> to vector<8x512xbf16>
    %c7 = arith.constant 7 : index
    %c0_28 = arith.constant 0 : index
    %c0_29 = arith.constant 0 : index
    %40 = vector.load %arg5[%c7, %c0_28, %c0_29] : memref<9x8x8xbf16, #tpu.memory_space<vmem>>, vector<1x8x8xbf16>
    %41 = vector.shape_cast %40 : vector<1x8x8xbf16> to vector<8x8xbf16>
    %cst_30 = arith.constant dense<0.000000e+00> : vector<8x512xf32>
    %42 = tpu.matmul %41, %39, %cst_30 {dimension_numbers = #tpu.dot_dimension_numbers<[1], [0], [0], [1], [0, 0, 1, 1], [], []>} : vector<8x8xbf16>, vector<8x512xbf16>, vector<8x512xf32> -> vector<8x512xf32>
    %43 = arith.addf %38, %42 : vector<8x512xf32>
    %44 = vector.extract_strided_slice %3 {offsets = [0, 531], sizes = [8, 512], strides = [1, 1]} : vector<8x1536xbf16> to vector<8x512xbf16>
    %c8 = arith.constant 8 : index
    %c0_31 = arith.constant 0 : index
    %c0_32 = arith.constant 0 : index
    %45 = vector.load %arg5[%c8, %c0_31, %c0_32] : memref<9x8x8xbf16, #tpu.memory_space<vmem>>, vector<1x8x8xbf16>
    %46 = vector.shape_cast %45 : vector<1x8x8xbf16> to vector<8x8xbf16>
    %cst_33 = arith.constant dense<0.000000e+00> : vector<8x512xf32>
    %47 = tpu.matmul %46, %44, %cst_33 {dimension_numbers = #tpu.dot_dimension_numbers<[1], [0], [0], [1], [0, 0, 1, 1], [], []>} : vector<8x8xbf16>, vector<8x512xbf16>, vector<8x512xf32> -> vector<8x512xf32>
    %48 = arith.addf %43, %47 : vector<8x512xf32>
    %49 = arith.truncf %48 : vector<8x512xf32> to vector<8x512xbf16>
    %c0_34 = arith.constant 0 : index
    %c0_35 = arith.constant 0 : index
    %50 = vector.load %arg6[%c0_34, %c0_35] : memref<8x512xbf16, #tpu.memory_space<vmem>>, vector<8x512xbf16>
    tpu.vector_store %arg6[%c0_34, %c0_35], %49 {strides = array<i32>} : memref<8x512xbf16, #tpu.memory_space<vmem>>, vector<8x512xbf16>,
    %51 = vector.broadcast %4 : vector<1x512xf32> to vector<8x512xf32>
    %52 = arith.mulf %48, %51 : vector<8x512xf32>
    %cst_36 = arith.constant dense<0.000000e+00> : vector<8xf32>
    %53 = vector.multi_reduction <add>, %52, %cst_36 [1] : vector<8x512xf32> to vector<8xf32>
    %54 = vector.shape_cast %53 : vector<8xf32> to vector<8x1xf32>
    %55 = vector.shape_cast %54 : vector<8x1xf32> to vector<1x8x1xf32>
    %c0_37 = arith.constant 0 : index
    %c0_38 = arith.constant 0 : index
    %c0_39 = arith.constant 0 : index
    %56 = vector.load %arg7[%c0_37, %c0_38, %c0_39] : memref<1x8x1xf32, #tpu.memory_space<vmem>>, vector<1x8x1xf32>
    tpu.vector_store %arg7[%c0_37, %c0_38, %c0_39], %55 {strides = array<i32>} : memref<1x8x1xf32, #tpu.memory_space<vmem>>, vector<1x8x1xf32>,
    %57 = arith.mulf %52, %52 : vector<8x512xf32>
    %cst_40 = arith.constant dense<0.000000e+00> : vector<8xf32>
    %58 = vector.multi_reduction <add>, %57, %cst_40 [1] : vector<8x512xf32> to vector<8xf32>
    %59 = vector.shape_cast %58 : vector<8xf32> to vector<8x1xf32>
    %60 = vector.shape_cast %59 : vector<8x1xf32> to vector<1x8x1xf32>
    %c0_41 = arith.constant 0 : index
    %c0_42 = arith.constant 0 : index
    %c0_43 = arith.constant 0 : index
    %61 = vector.load %arg8[%c0_41, %c0_42, %c0_43] : memref<1x8x1xf32, #tpu.memory_space<vmem>>, vector<1x8x1xf32>
    tpu.vector_store %arg8[%c0_41, %c0_42, %c0_43], %60 {strides = array<i32>} : memref<1x8x1xf32, #tpu.memory_space<vmem>>, vector<1x8x1xf32>,
    return
  }
  func.func @transform_0(%arg0: i32) -> (i32, i32) {
    %c0_i32 = arith.constant 0 : i32
    %c0_i32_0 = arith.constant 0 : i32
    return %c0_i32, %arg0 : i32, i32
  }
  func.func @transform_1(%arg0: i32) -> (i32, i32) {
    %c1_i32 = arith.constant 1 : i32
    %0 = arith.addi %arg0, %c1_i32 : i32
    %c0_i32 = arith.constant 0 : i32
    %c0_i32_0 = arith.constant 0 : i32
    return %c0_i32, %0 : i32, i32
  }
  func.func @transform_2(%arg0: i32) -> (i32, i32) {
    %c2_i32 = arith.constant 2 : i32
    %0 = arith.addi %arg0, %c2_i32 : i32
    %c0_i32 = arith.constant 0 : i32
    %c0_i32_0 = arith.constant 0 : i32
    return %c0_i32, %0 : i32, i32
  }
  func.func @transform_3(%arg0: i32) -> (i32, i32) {
    %c1_i32 = arith.constant 1 : i32
    %0 = arith.addi %arg0, %c1_i32 : i32
    %c0_i32 = arith.constant 0 : i32
    %c0_i32_0 = arith.constant 0 : i32
    return %c0_i32, %0 : i32, i32
  }
  func.func @transform_4(%arg0: i32) -> (i32, i32, i32) {
    %c0_i32 = arith.constant 0 : i32
    %c0_i32_0 = arith.constant 0 : i32
    %c0_i32_1 = arith.constant 0 : i32
    %c0_i32_2 = arith.constant 0 : i32
    return %c0_i32, %c0_i32_0, %c0_i32_1 : i32, i32, i32
  }
  func.func @transform_5(%arg0: i32) -> (i32, i32) {
    %c0_i32 = arith.constant 0 : i32
    %c0_i32_0 = arith.constant 0 : i32
    return %c0_i32, %arg0 : i32, i32
  }
  func.func @transform_6(%arg0: i32) -> (i32, i32, i32) {
    %c0_i32 = arith.constant 0 : i32
    %c0_i32_0 = arith.constant 0 : i32
    %c0_i32_1 = arith.constant 0 : i32
    return %arg0, %c0_i32, %c0_i32_0 : i32, i32, i32
  }
  func.func @transform_7(%arg0: i32) -> (i32, i32, i32) {
    %c0_i32 = arith.constant 0 : i32
    %c0_i32_0 = arith.constant 0 : i32
    %c0_i32_1 = arith.constant 0 : i32
    return %arg0, %c0_i32, %c0_i32_0 : i32, i32, i32
  }
}

module attributes {stable_mosaic.version = 11 : i64} {
  func.func @kernel(%arg0: i32, %arg1: memref<8x512xbf16, #tpu.memory_space<vmem>>, %arg2: memref<8x512xbf16, #tpu.memory_space<vmem>>, %arg3: memref<8x512xbf16, #tpu.memory_space<vmem>>, %arg4: memref<1x512xf32, #tpu.memory_space<vmem>>, %arg5: memref<1x512xf32, #tpu.memory_space<vmem>>, %arg6: memref<1x512xf32, #tpu.memory_space<vmem>>, %arg7: memref<8x1xf32, #tpu.memory_space<vmem>>, %arg8: memref<8x1xf32, #tpu.memory_space<vmem>>, %arg9: memref<9x8x8xbf16, #tpu.memory_space<vmem>>, %arg10: memref<8x512xbf16, #tpu.memory_space<vmem>>, %arg11: memref<1x8x1xf32, #tpu.memory_space<vmem>>, %arg12: memref<1x8x1xf32, #tpu.memory_space<vmem>>) attributes {dimension_semantics = [#tpu.dimension_semantics<parallel>], iteration_bounds = array<i64: 2>, scalar_prefetch = 0 : i64, scratch_operands = 0 : i64, tpu.core_type = #tpu.core_type<tc>, window_params = [{transform_indices = @transform_0, window_bounds = array<i64: 8, 512>}, {transform_indices = @transform_1, window_bounds = array<i64: 8, 512>}, {transform_indices = @transform_2, window_bounds = array<i64: 8, 512>}, {transform_indices = @transform_3, window_bounds = array<i64: 1, 512>}, {transform_indices = @transform_4, window_bounds = array<i64: 1, 512>}, {transform_indices = @transform_5, window_bounds = array<i64: 1, 512>}, {pipeline_mode = #tpu.pipeline_mode<synchronous>, transform_indices = @transform_6, window_bounds = array<i64: 8, 1>}, {pipeline_mode = #tpu.pipeline_mode<synchronous>, transform_indices = @transform_7, window_bounds = array<i64: 8, 1>}, {pipeline_mode = #tpu.pipeline_mode<synchronous>, transform_indices = @transform_8, window_bounds = array<i64: 9, 8, 8>}, {transform_indices = @transform_9, window_bounds = array<i64: 8, 512>}, {transform_indices = @transform_10, window_bounds = array<i64: 1, 8, 1>}, {transform_indices = @transform_11, window_bounds = array<i64: 1, 8, 1>}]} {
    %c0 = arith.constant 0 : index
    %c0_0 = arith.constant 0 : index
    %0 = vector.load %arg1[%c0, %c0_0] : memref<8x512xbf16, #tpu.memory_space<vmem>>, vector<8x512xbf16>
    %c0_1 = arith.constant 0 : index
    %c0_2 = arith.constant 0 : index
    %1 = vector.load %arg2[%c0_1, %c0_2] : memref<8x512xbf16, #tpu.memory_space<vmem>>, vector<8x512xbf16>
    %c0_3 = arith.constant 0 : index
    %c0_4 = arith.constant 0 : index
    %2 = vector.load %arg3[%c0_3, %c0_4] : memref<8x512xbf16, #tpu.memory_space<vmem>>, vector<8x512xbf16>
    %3 = tpu.concatenate %0, %1, %2 in 1 : vector<8x512xbf16>, vector<8x512xbf16>, vector<8x512xbf16> -> vector<8x1536xbf16>
    %4 = arith.extf %3 : vector<8x1536xbf16> to vector<8x1536xf32>
    %c0_5 = arith.constant 0 : index
    %c0_6 = arith.constant 0 : index
    %5 = vector.load %arg4[%c0_5, %c0_6] : memref<1x512xf32, #tpu.memory_space<vmem>>, vector<1x512xf32>
    %c0_7 = arith.constant 0 : index
    %c0_8 = arith.constant 0 : index
    %6 = vector.load %arg5[%c0_7, %c0_8] : memref<1x512xf32, #tpu.memory_space<vmem>>, vector<1x512xf32>
    %c0_9 = arith.constant 0 : index
    %c0_10 = arith.constant 0 : index
    %7 = vector.load %arg6[%c0_9, %c0_10] : memref<1x512xf32, #tpu.memory_space<vmem>>, vector<1x512xf32>
    %8 = tpu.concatenate %5, %6, %7 in 1 : vector<1x512xf32>, vector<1x512xf32>, vector<1x512xf32> -> vector<1x1536xf32>
    %c0_11 = arith.constant 0 : index
    %c0_12 = arith.constant 0 : index
    %9 = vector.load %arg7[%c0_11, %c0_12] : memref<8x1xf32, #tpu.memory_space<vmem>>, vector<8x1xf32>
    %10 = vector.broadcast %9 : vector<8x1xf32> to vector<8x1536xf32>
    %11 = arith.mulf %4, %10 : vector<8x1536xf32>
    %c0_13 = arith.constant 0 : index
    %c0_14 = arith.constant 0 : index
    %12 = vector.load %arg8[%c0_13, %c0_14] : memref<8x1xf32, #tpu.memory_space<vmem>>, vector<8x1xf32>
    %13 = vector.broadcast %12 : vector<8x1xf32> to vector<8x1536xf32>
    %14 = arith.addf %11, %13 : vector<8x1536xf32>
    %cst = arith.constant 0.000000e+00 : f32
    %15 = vector.broadcast %cst : f32 to vector<8x1536xf32>
    %16 = arith.maximumf %14, %15 : vector<8x1536xf32>
    %17 = vector.broadcast %8 : vector<1x1536xf32> to vector<8x1536xf32>
    %18 = arith.mulf %16, %17 : vector<8x1536xf32>
    %19 = arith.truncf %18 : vector<8x1536xf32> to vector<8x1536xbf16>
    %20 = vector.extract_strided_slice %8 {offsets = [0, 512], sizes = [1, 512], strides = [1, 1]} : vector<1x1536xf32> to vector<1x512xf32>
    %21 = vector.extract_strided_slice %19 {offsets = [0, 493], sizes = [8, 512], strides = [1, 1]} : vector<8x1536xbf16> to vector<8x512xbf16>
    %c0_15 = arith.constant 0 : index
    %c0_16 = arith.constant 0 : index
    %c0_17 = arith.constant 0 : index
    %22 = vector.load %arg9[%c0_15, %c0_16, %c0_17] : memref<9x8x8xbf16, #tpu.memory_space<vmem>>, vector<1x8x8xbf16>
    %23 = vector.shape_cast %22 : vector<1x8x8xbf16> to vector<8x8xbf16>
    %cst_18 = arith.constant dense<0.000000e+00> : vector<8x512xf32>
    %24 = tpu.matmul %23, %21, %cst_18 {dimension_numbers = #tpu.dot_dimension_numbers<[1], [0], [0], [1], [0, 0, 1, 1], [], []>} : vector<8x8xbf16>, vector<8x512xbf16>, vector<8x512xf32> -> vector<8x512xf32>
    %25 = vector.extract_strided_slice %19 {offsets = [0, 494], sizes = [8, 512], strides = [1, 1]} : vector<8x1536xbf16> to vector<8x512xbf16>
    %c1 = arith.constant 1 : index
    %c0_19 = arith.constant 0 : index
    %c0_20 = arith.constant 0 : index
    %26 = vector.load %arg9[%c1, %c0_19, %c0_20] : memref<9x8x8xbf16, #tpu.memory_space<vmem>>, vector<1x8x8xbf16>
    %27 = vector.shape_cast %26 : vector<1x8x8xbf16> to vector<8x8xbf16>
    %cst_21 = arith.constant dense<0.000000e+00> : vector<8x512xf32>
    %28 = tpu.matmul %27, %25, %cst_21 {dimension_numbers = #tpu.dot_dimension_numbers<[1], [0], [0], [1], [0, 0, 1, 1], [], []>} : vector<8x8xbf16>, vector<8x512xbf16>, vector<8x512xf32> -> vector<8x512xf32>
    %29 = arith.addf %24, %28 : vector<8x512xf32>
    %30 = vector.extract_strided_slice %19 {offsets = [0, 495], sizes = [8, 512], strides = [1, 1]} : vector<8x1536xbf16> to vector<8x512xbf16>
    %c2 = arith.constant 2 : index
    %c0_22 = arith.constant 0 : index
    %c0_23 = arith.constant 0 : index
    %31 = vector.load %arg9[%c2, %c0_22, %c0_23] : memref<9x8x8xbf16, #tpu.memory_space<vmem>>, vector<1x8x8xbf16>
    %32 = vector.shape_cast %31 : vector<1x8x8xbf16> to vector<8x8xbf16>
    %cst_24 = arith.constant dense<0.000000e+00> : vector<8x512xf32>
    %33 = tpu.matmul %32, %30, %cst_24 {dimension_numbers = #tpu.dot_dimension_numbers<[1], [0], [0], [1], [0, 0, 1, 1], [], []>} : vector<8x8xbf16>, vector<8x512xbf16>, vector<8x512xf32> -> vector<8x512xf32>
    %34 = arith.addf %29, %33 : vector<8x512xf32>
    %35 = vector.extract_strided_slice %19 {offsets = [0, 511], sizes = [8, 512], strides = [1, 1]} : vector<8x1536xbf16> to vector<8x512xbf16>
    %c3 = arith.constant 3 : index
    %c0_25 = arith.constant 0 : index
    %c0_26 = arith.constant 0 : index
    %36 = vector.load %arg9[%c3, %c0_25, %c0_26] : memref<9x8x8xbf16, #tpu.memory_space<vmem>>, vector<1x8x8xbf16>
    %37 = vector.shape_cast %36 : vector<1x8x8xbf16> to vector<8x8xbf16>
    %cst_27 = arith.constant dense<0.000000e+00> : vector<8x512xf32>
    %38 = tpu.matmul %37, %35, %cst_27 {dimension_numbers = #tpu.dot_dimension_numbers<[1], [0], [0], [1], [0, 0, 1, 1], [], []>} : vector<8x8xbf16>, vector<8x512xbf16>, vector<8x512xf32> -> vector<8x512xf32>
    %39 = arith.addf %34, %38 : vector<8x512xf32>
    %40 = vector.extract_strided_slice %19 {offsets = [0, 512], sizes = [8, 512], strides = [1, 1]} : vector<8x1536xbf16> to vector<8x512xbf16>
    %c4 = arith.constant 4 : index
    %c0_28 = arith.constant 0 : index
    %c0_29 = arith.constant 0 : index
    %41 = vector.load %arg9[%c4, %c0_28, %c0_29] : memref<9x8x8xbf16, #tpu.memory_space<vmem>>, vector<1x8x8xbf16>
    %42 = vector.shape_cast %41 : vector<1x8x8xbf16> to vector<8x8xbf16>
    %cst_30 = arith.constant dense<0.000000e+00> : vector<8x512xf32>
    %43 = tpu.matmul %42, %40, %cst_30 {dimension_numbers = #tpu.dot_dimension_numbers<[1], [0], [0], [1], [0, 0, 1, 1], [], []>} : vector<8x8xbf16>, vector<8x512xbf16>, vector<8x512xf32> -> vector<8x512xf32>
    %44 = arith.addf %39, %43 : vector<8x512xf32>
    %45 = vector.extract_strided_slice %19 {offsets = [0, 513], sizes = [8, 512], strides = [1, 1]} : vector<8x1536xbf16> to vector<8x512xbf16>
    %c5 = arith.constant 5 : index
    %c0_31 = arith.constant 0 : index
    %c0_32 = arith.constant 0 : index
    %46 = vector.load %arg9[%c5, %c0_31, %c0_32] : memref<9x8x8xbf16, #tpu.memory_space<vmem>>, vector<1x8x8xbf16>
    %47 = vector.shape_cast %46 : vector<1x8x8xbf16> to vector<8x8xbf16>
    %cst_33 = arith.constant dense<0.000000e+00> : vector<8x512xf32>
    %48 = tpu.matmul %47, %45, %cst_33 {dimension_numbers = #tpu.dot_dimension_numbers<[1], [0], [0], [1], [0, 0, 1, 1], [], []>} : vector<8x8xbf16>, vector<8x512xbf16>, vector<8x512xf32> -> vector<8x512xf32>
    %49 = arith.addf %44, %48 : vector<8x512xf32>
    %50 = vector.extract_strided_slice %19 {offsets = [0, 529], sizes = [8, 512], strides = [1, 1]} : vector<8x1536xbf16> to vector<8x512xbf16>
    %c6 = arith.constant 6 : index
    %c0_34 = arith.constant 0 : index
    %c0_35 = arith.constant 0 : index
    %51 = vector.load %arg9[%c6, %c0_34, %c0_35] : memref<9x8x8xbf16, #tpu.memory_space<vmem>>, vector<1x8x8xbf16>
    %52 = vector.shape_cast %51 : vector<1x8x8xbf16> to vector<8x8xbf16>
    %cst_36 = arith.constant dense<0.000000e+00> : vector<8x512xf32>
    %53 = tpu.matmul %52, %50, %cst_36 {dimension_numbers = #tpu.dot_dimension_numbers<[1], [0], [0], [1], [0, 0, 1, 1], [], []>} : vector<8x8xbf16>, vector<8x512xbf16>, vector<8x512xf32> -> vector<8x512xf32>
    %54 = arith.addf %49, %53 : vector<8x512xf32>
    %55 = vector.extract_strided_slice %19 {offsets = [0, 530], sizes = [8, 512], strides = [1, 1]} : vector<8x1536xbf16> to vector<8x512xbf16>
    %c7 = arith.constant 7 : index
    %c0_37 = arith.constant 0 : index
    %c0_38 = arith.constant 0 : index
    %56 = vector.load %arg9[%c7, %c0_37, %c0_38] : memref<9x8x8xbf16, #tpu.memory_space<vmem>>, vector<1x8x8xbf16>
    %57 = vector.shape_cast %56 : vector<1x8x8xbf16> to vector<8x8xbf16>
    %cst_39 = arith.constant dense<0.000000e+00> : vector<8x512xf32>
    %58 = tpu.matmul %57, %55, %cst_39 {dimension_numbers = #tpu.dot_dimension_numbers<[1], [0], [0], [1], [0, 0, 1, 1], [], []>} : vector<8x8xbf16>, vector<8x512xbf16>, vector<8x512xf32> -> vector<8x512xf32>
    %59 = arith.addf %54, %58 : vector<8x512xf32>
    %60 = vector.extract_strided_slice %19 {offsets = [0, 531], sizes = [8, 512], strides = [1, 1]} : vector<8x1536xbf16> to vector<8x512xbf16>
    %c8 = arith.constant 8 : index
    %c0_40 = arith.constant 0 : index
    %c0_41 = arith.constant 0 : index
    %61 = vector.load %arg9[%c8, %c0_40, %c0_41] : memref<9x8x8xbf16, #tpu.memory_space<vmem>>, vector<1x8x8xbf16>
    %62 = vector.shape_cast %61 : vector<1x8x8xbf16> to vector<8x8xbf16>
    %cst_42 = arith.constant dense<0.000000e+00> : vector<8x512xf32>
    %63 = tpu.matmul %62, %60, %cst_42 {dimension_numbers = #tpu.dot_dimension_numbers<[1], [0], [0], [1], [0, 0, 1, 1], [], []>} : vector<8x8xbf16>, vector<8x512xbf16>, vector<8x512xf32> -> vector<8x512xf32>
    %64 = arith.addf %59, %63 : vector<8x512xf32>
    %65 = arith.truncf %64 : vector<8x512xf32> to vector<8x512xbf16>
    %c0_43 = arith.constant 0 : index
    %c0_44 = arith.constant 0 : index
    %66 = vector.load %arg10[%c0_43, %c0_44] : memref<8x512xbf16, #tpu.memory_space<vmem>>, vector<8x512xbf16>
    tpu.vector_store %arg10[%c0_43, %c0_44], %65 {strides = array<i32>} : memref<8x512xbf16, #tpu.memory_space<vmem>>, vector<8x512xbf16>,
    %67 = vector.broadcast %20 : vector<1x512xf32> to vector<8x512xf32>
    %68 = arith.mulf %64, %67 : vector<8x512xf32>
    %cst_45 = arith.constant dense<0.000000e+00> : vector<8xf32>
    %69 = vector.multi_reduction <add>, %68, %cst_45 [1] : vector<8x512xf32> to vector<8xf32>
    %70 = vector.shape_cast %69 : vector<8xf32> to vector<8x1xf32>
    %71 = vector.shape_cast %70 : vector<8x1xf32> to vector<1x8x1xf32>
    %c0_46 = arith.constant 0 : index
    %c0_47 = arith.constant 0 : index
    %c0_48 = arith.constant 0 : index
    %72 = vector.load %arg11[%c0_46, %c0_47, %c0_48] : memref<1x8x1xf32, #tpu.memory_space<vmem>>, vector<1x8x1xf32>
    tpu.vector_store %arg11[%c0_46, %c0_47, %c0_48], %71 {strides = array<i32>} : memref<1x8x1xf32, #tpu.memory_space<vmem>>, vector<1x8x1xf32>,
    %73 = arith.mulf %68, %68 : vector<8x512xf32>
    %cst_49 = arith.constant dense<0.000000e+00> : vector<8xf32>
    %74 = vector.multi_reduction <add>, %73, %cst_49 [1] : vector<8x512xf32> to vector<8xf32>
    %75 = vector.shape_cast %74 : vector<8xf32> to vector<8x1xf32>
    %76 = vector.shape_cast %75 : vector<8x1xf32> to vector<1x8x1xf32>
    %c0_50 = arith.constant 0 : index
    %c0_51 = arith.constant 0 : index
    %c0_52 = arith.constant 0 : index
    %77 = vector.load %arg12[%c0_50, %c0_51, %c0_52] : memref<1x8x1xf32, #tpu.memory_space<vmem>>, vector<1x8x1xf32>
    tpu.vector_store %arg12[%c0_50, %c0_51, %c0_52], %76 {strides = array<i32>} : memref<1x8x1xf32, #tpu.memory_space<vmem>>, vector<1x8x1xf32>,
    return
  }
  func.func @transform_0(%arg0: i32) -> (i32, i32) {
    %c1_i32 = arith.constant 1 : i32
    %0 = arith.subi %arg0, %c1_i32 : i32
    %c0_i32 = arith.constant 0 : i32
    %1 = arith.maxsi %0, %c0_i32 : i32
    %c0_i32_0 = arith.constant 0 : i32
    %c0_i32_1 = arith.constant 0 : i32
    return %c0_i32_0, %1 : i32, i32
  }
  func.func @transform_1(%arg0: i32) -> (i32, i32) {
    %c0_i32 = arith.constant 0 : i32
    %c0_i32_0 = arith.constant 0 : i32
    return %c0_i32, %arg0 : i32, i32
  }
  func.func @transform_2(%arg0: i32) -> (i32, i32) {
    %c1_i32 = arith.constant 1 : i32
    %0 = arith.addi %arg0, %c1_i32 : i32
    %c1_i32_0 = arith.constant 1 : i32
    %1 = arith.minsi %0, %c1_i32_0 : i32
    %c0_i32 = arith.constant 0 : i32
    %c0_i32_1 = arith.constant 0 : i32
    return %c0_i32, %1 : i32, i32
  }
  func.func @transform_3(%arg0: i32) -> (i32, i32) {
    %c0_i32 = arith.constant 0 : i32
    %c0_i32_0 = arith.constant 0 : i32
    return %c0_i32, %arg0 : i32, i32
  }
  func.func @transform_4(%arg0: i32) -> (i32, i32) {
    %c1_i32 = arith.constant 1 : i32
    %0 = arith.addi %arg0, %c1_i32 : i32
    %c0_i32 = arith.constant 0 : i32
    %c0_i32_0 = arith.constant 0 : i32
    return %c0_i32, %0 : i32, i32
  }
  func.func @transform_5(%arg0: i32) -> (i32, i32) {
    %c2_i32 = arith.constant 2 : i32
    %0 = arith.addi %arg0, %c2_i32 : i32
    %c0_i32 = arith.constant 0 : i32
    %c0_i32_0 = arith.constant 0 : i32
    return %c0_i32, %0 : i32, i32
  }
  func.func @transform_6(%arg0: i32) -> (i32, i32) {
    %c0_i32 = arith.constant 0 : i32
    %c0_i32_0 = arith.constant 0 : i32
    %c0_i32_1 = arith.constant 0 : i32
    return %c0_i32, %c0_i32_0 : i32, i32
  }
  func.func @transform_7(%arg0: i32) -> (i32, i32) {
    %c0_i32 = arith.constant 0 : i32
    %c0_i32_0 = arith.constant 0 : i32
    %c0_i32_1 = arith.constant 0 : i32
    return %c0_i32, %c0_i32_0 : i32, i32
  }
  func.func @transform_8(%arg0: i32) -> (i32, i32, i32) {
    %c0_i32 = arith.constant 0 : i32
    %c0_i32_0 = arith.constant 0 : i32
    %c0_i32_1 = arith.constant 0 : i32
    %c0_i32_2 = arith.constant 0 : i32
    return %c0_i32, %c0_i32_0, %c0_i32_1 : i32, i32, i32
  }
  func.func @transform_9(%arg0: i32) -> (i32, i32) {
    %c0_i32 = arith.constant 0 : i32
    %c0_i32_0 = arith.constant 0 : i32
    return %c0_i32, %arg0 : i32, i32
  }
  func.func @transform_10(%arg0: i32) -> (i32, i32, i32) {
    %c0_i32 = arith.constant 0 : i32
    %c0_i32_0 = arith.constant 0 : i32
    %c0_i32_1 = arith.constant 0 : i32
    return %arg0, %c0_i32, %c0_i32_0 : i32, i32, i32
  }
  func.func @transform_11(%arg0: i32) -> (i32, i32, i32) {
    %c0_i32 = arith.constant 0 : i32
    %c0_i32_0 = arith.constant 0 : i32
    %c0_i32_1 = arith.constant 0 : i32
    return %arg0, %c0_i32, %c0_i32_0 : i32, i32, i32
  }
}

module attributes {stable_mosaic.version = 11 : i64} {
  func.func @_bn_add_relu_kernel(%arg0: i32, %arg1: memref<8x512xbf16, #tpu.memory_space<vmem>>, %arg2: memref<8x1xf32, #tpu.memory_space<vmem>>, %arg3: memref<8x1xf32, #tpu.memory_space<vmem>>, %arg4: memref<8x512xbf16, #tpu.memory_space<vmem>>, %arg5: memref<8x512xf32, #tpu.memory_space<vmem>>) attributes {dimension_semantics = [#tpu.dimension_semantics<parallel>], iteration_bounds = array<i64: 2>, scalar_prefetch = 0 : i64, scratch_operands = 0 : i64, tpu.core_type = #tpu.core_type<tc>, window_params = [{transform_indices = @transform_0, window_bounds = array<i64: 8, 512>}, {pipeline_mode = #tpu.pipeline_mode<synchronous>, transform_indices = @transform_1, window_bounds = array<i64: 8, 1>}, {pipeline_mode = #tpu.pipeline_mode<synchronous>, transform_indices = @transform_2, window_bounds = array<i64: 8, 1>}, {transform_indices = @transform_3, window_bounds = array<i64: 8, 512>}, {transform_indices = @transform_4, window_bounds = array<i64: 8, 512>}]} {
    %c0 = arith.constant 0 : index
    %c0_0 = arith.constant 0 : index
    %0 = vector.load %arg1[%c0, %c0_0] : memref<8x512xbf16, #tpu.memory_space<vmem>>, vector<8x512xbf16>
    %1 = arith.extf %0 : vector<8x512xbf16> to vector<8x512xf32>
    %c0_1 = arith.constant 0 : index
    %c0_2 = arith.constant 0 : index
    %2 = vector.load %arg2[%c0_1, %c0_2] : memref<8x1xf32, #tpu.memory_space<vmem>>, vector<8x1xf32>
    %3 = vector.broadcast %2 : vector<8x1xf32> to vector<8x512xf32>
    %4 = arith.mulf %1, %3 : vector<8x512xf32>
    %c0_3 = arith.constant 0 : index
    %c0_4 = arith.constant 0 : index
    %5 = vector.load %arg3[%c0_3, %c0_4] : memref<8x1xf32, #tpu.memory_space<vmem>>, vector<8x1xf32>
    %6 = vector.broadcast %5 : vector<8x1xf32> to vector<8x512xf32>
    %7 = arith.addf %4, %6 : vector<8x512xf32>
    %c0_5 = arith.constant 0 : index
    %c0_6 = arith.constant 0 : index
    %8 = vector.load %arg4[%c0_5, %c0_6] : memref<8x512xbf16, #tpu.memory_space<vmem>>, vector<8x512xbf16>
    %9 = arith.extf %8 : vector<8x512xbf16> to vector<8x512xf32>
    %10 = arith.addf %7, %9 : vector<8x512xf32>
    %cst = arith.constant 0.000000e+00 : f32
    %11 = vector.broadcast %cst : f32 to vector<8x512xf32>
    %12 = arith.maximumf %10, %11 : vector<8x512xf32>
    %c0_7 = arith.constant 0 : index
    %c0_8 = arith.constant 0 : index
    %13 = vector.load %arg5[%c0_7, %c0_8] : memref<8x512xf32, #tpu.memory_space<vmem>>, vector<8x512xf32>
    tpu.vector_store %arg5[%c0_7, %c0_8], %12 {strides = array<i32>} : memref<8x512xf32, #tpu.memory_space<vmem>>, vector<8x512xf32>,
    return
  }
  func.func @transform_0(%arg0: i32) -> (i32, i32) {
    %c0_i32 = arith.constant 0 : i32
    %c0_i32_0 = arith.constant 0 : i32
    return %c0_i32, %arg0 : i32, i32
  }
  func.func @transform_1(%arg0: i32) -> (i32, i32) {
    %c0_i32 = arith.constant 0 : i32
    %c0_i32_0 = arith.constant 0 : i32
    %c0_i32_1 = arith.constant 0 : i32
    return %c0_i32, %c0_i32_0 : i32, i32
  }
  func.func @transform_2(%arg0: i32) -> (i32, i32) {
    %c0_i32 = arith.constant 0 : i32
    %c0_i32_0 = arith.constant 0 : i32
    %c0_i32_1 = arith.constant 0 : i32
    return %c0_i32, %c0_i32_0 : i32, i32
  }
  func.func @transform_3(%arg0: i32) -> (i32, i32) {
    %c1_i32 = arith.constant 1 : i32
    %0 = arith.addi %arg0, %c1_i32 : i32
    %c0_i32 = arith.constant 0 : i32
    %c0_i32_0 = arith.constant 0 : i32
    return %c0_i32, %0 : i32, i32
  }
  func.func @transform_4(%arg0: i32) -> (i32, i32) {
    %c0_i32 = arith.constant 0 : i32
    %c0_i32_0 = arith.constant 0 : i32
    return %c0_i32, %arg0 : i32, i32
  }
}

</mosaic_0001>

<llo_original>
// kernel: resnet_block_forward.5
$region0: #{resnet_block_forward.5}
  #allocation0 [shape = 'u32[]', space=smem, size = 0x4, offset = 0x4, fixed_abs, tag = 'smem constant byte address 0x4 - core index']
  #allocation1 [shape = 'u32[144,128]{1,0:T(1,128)}', space=vmem, size = 0x12000, scoped, tag = 'internal scratch']
  %s0 = inlined_call_operand.vmem [shape: bf16[8,1024], index: 0, kind: input, shape index: {}]
  %s1 = inlined_call_operand.vmem [shape: f32[8,1], index: 1, kind: input, shape index: {}]
  %s2 = inlined_call_operand.vmem [shape: f32[8,1], index: 2, kind: input, shape index: {}]
  %s3 = inlined_call_operand.vmem [shape: bf16[8,2048], index: 3, kind: input, shape index: {}]
  %s4 = inlined_call_operand.vmem [shape: f32[8,1024], index: 4, kind: output, shape index: {}]
  %s5 = sld [smem:[#allocation0]]
  $region49: #{resnet_block_forward.5} parent=0
    _
  %s7 = ssub.s32 1, %s5
  %s8 = scalar_select 0, %s7, %s5
  loop: start=0, step=1, limit=4
  $region2: #{resnet_block_forward.5} parent=0 // loop_pre_header
    _
  $region3: #{resnet_block_forward.5} parent=0 // loop_header
    %s10 = sphi 0, %s14
    %p11 = scmp.ge.s32.totalorder %s10, 4
    %s20 = sphi 0, %s22
    %s23 = sphi 0, %s20
    %s24 = sphi 0, %s23
    %s40 = sphi 0, %s24
    %s44 = sphi 0, %s44
    %s46 = sphi 0, %s44
    %s47 = sphi 0, %s46
    %s61 = sphi 0, %s47
    %s65 = sphi 0, %s65
    %s67 = sphi 0, %s65
    %s68 = sphi 0, %s67
    %s82 = sphi 0, %s68
    %s90 = sphi 0, %s92
    %s93 = sphi 0, %s90
    %s94 = sphi 0, %s93
    %s110 = sphi 0, %s94
    %s116 = sphi 0, %s118
    %s119 = sphi 0, %s116
    %s120 = sphi 0, %s119
    %s136 = sphi 0, %s120
  $region4: #{resnet_block_forward.5} parent=0 // loop_header_branch
    %13 = sbr.rel (%p11) target = $region8
  $region5: #{resnet_block_forward.5} parent=0 // loop_body
    %s15 = ssub.s32 %s10, 1
    %s16 = ssub.s32 %s10, 2
    %s17 = sadd.s32 %s10, 1
    %s18 = ssub.s32 %s10, %s17
    %p19 = scmp.eq.s32.totalorder %s18, 0
    %s21 = sadd.s32 %s20, 1
    %s22 = scalar_select %p19, %s20, %s21
    %p25 = pneg %p19
    %p26 = scmp.eq.s32.totalorder %s10, 1
    %p27 = por %p25, %p26
    %p28 = scmp.ne.s32.totalorder %s20, %s23
    %p29 = scmp.eq.s32.totalorder %s10, 0
    %p30 = por %p28, %p29
    %p31 = scmp.ne.s32.totalorder %s20, %s23
    %p32 = scmp.eq.s32.totalorder %s15, 1
    %p33 = por %p31, %p32
    %p34 = scmp.ne.s32.totalorder %s23, %s24
    %p35 = scmp.eq.s32.totalorder %s15, 0
    %p36 = por %p34, %p35
    %p37 = scmp.ne.s32.totalorder %s23, %s24
    %p38 = scmp.eq.s32.totalorder %s16, 1
    %p39 = por %p37, %p38
    %p41 = scmp.ne.s32.totalorder %s24, %s40
    %p42 = scmp.eq.s32.totalorder %s16, 0
    %p43 = por %p41, %p42
    %s45 = sadd.s32 %s44, 1
    %p48 = scmp.eq.s32.totalorder %s10, 1
    %p49 = scmp.ne.s32.totalorder %s44, %s46
    %p50 = scmp.eq.s32.totalorder %s10, 0
    %p51 = por %p49, %p50
    %p52 = scmp.ne.s32.totalorder %s44, %s46
    %p53 = scmp.eq.s32.totalorder %s15, 1
    %p54 = por %p52, %p53
    %p55 = scmp.ne.s32.totalorder %s46, %s47
    %p56 = scmp.eq.s32.totalorder %s15, 0
    %p57 = por %p55, %p56
    %p58 = scmp.ne.s32.totalorder %s46, %s47
    %p59 = scmp.eq.s32.totalorder %s16, 1
    %p60 = por %p58, %p59
    %p62 = scmp.ne.s32.totalorder %s47, %s61
    %p63 = scmp.eq.s32.totalorder %s16, 0
    %p64 = por %p62, %p63
    %s66 = sadd.s32 %s65, 1
    %p69 = scmp.eq.s32.totalorder %s10, 1
    %p70 = scmp.ne.s32.totalorder %s65, %s67
    %p71 = scmp.eq.s32.totalorder %s10, 0
    %p72 = por %p70, %p71
    %p73 = scmp.ne.s32.totalorder %s65, %s67
    %p74 = scmp.eq.s32.totalorder %s15, 1
    %p75 = por %p73, %p74
    %p76 = scmp.ne.s32.totalorder %s67, %s68
    %p77 = scmp.eq.s32.totalorder %s15, 0
    %p78 = por %p76, %p77
    %p79 = scmp.ne.s32.totalorder %s67, %s68
    %p80 = scmp.eq.s32.totalorder %s16, 1
    %p81 = por %p79, %p80
    %p83 = scmp.ne.s32.totalorder %s68, %s82
    %p84 = scmp.eq.s32.totalorder %s16, 0
    %p85 = por %p83, %p84
    %s86 = sadd.s32 %s10, 1
    %s87 = sadd.s32 %s17, 1
    %s88 = ssub.s32 %s86, %s87
    %p89 = scmp.eq.s32.totalorder %s88, 0
    %s91 = sadd.s32 %s90, 1
    %s92 = scalar_select %p89, %s90, %s91
    %p95 = pneg %p89
    %p96 = scmp.eq.s32.totalorder %s10, 1
    %p97 = por %p95, %p96
    %p98 = scmp.ne.s32.totalorder %s90, %s93
    %p99 = scmp.eq.s32.totalorder %s10, 0
    %p100 = por %p98, %p99
    %p101 = scmp.ne.s32.totalorder %s90, %s93
    %p102 = scmp.eq.s32.totalorder %s15, 1
    %p103 = por %p101, %p102
    %p104 = scmp.ne.s32.totalorder %s93, %s94
    %p105 = scmp.eq.s32.totalorder %s15, 0
    %p106 = por %p104, %p105
    %p107 = scmp.ne.s32.totalorder %s93, %s94
    %p108 = scmp.eq.s32.totalorder %s16, 1
    %p109 = por %p107, %p108
    %p111 = scmp.ne.s32.totalorder %s94, %s110
    %p112 = scmp.eq.s32.totalorder %s16, 0
    %p113 = por %p111, %p112
    %s114 = ssub.s32 %s10, %s17
    %p115 = scmp.eq.s32.totalorder %s114, 0
    %s117 = sadd.s32 %s116, 1
    %s118 = scalar_select %p115, %s116, %s117
    %p121 = pneg %p115
    %p122 = scmp.eq.s32.totalorder %s10, 1
    %p123 = por %p121, %p122
    %p124 = scmp.ne.s32.totalorder %s116, %s119
    %p125 = scmp.eq.s32.totalorder %s10, 0
    %p126 = por %p124, %p125
    %p127 = scmp.ne.s32.totalorder %s116, %s119
    %p128 = scmp.eq.s32.totalorder %s15, 1
    %p129 = por %p127, %p128
    %p130 = scmp.ne.s32.totalorder %s119, %s120
    %p131 = scmp.eq.s32.totalorder %s15, 0
    %p132 = por %p130, %p131
    %p133 = scmp.ne.s32.totalorder %s119, %s120
    %p134 = scmp.eq.s32.totalorder %s16, 1
    %p135 = por %p133, %p134
    %p137 = scmp.ne.s32.totalorder %s120, %s136
    %p138 = scmp.eq.s32.totalorder %s16, 0
    %p139 = por %p137, %p138
    %p140 = scmp.le.s32.totalorder 1, %s10
    %p141 = scmp.lt.s32.totalorder %s10, 3
    %p142 = pnand %p140, %p141
    %p143 = pneg %p142
    // Predicated region
    $region9: #{resnet_block_forward.5} parent=5 // pred_check
      _
    $region10: #{resnet_block_forward.5} parent=5 // pred_check_branch
      %145 = sbr.rel (%p142) target = $region12
    $region11: #{resnet_block_forward.5} parent=5 // pred_region
      %s146 = ssub.s32 %s10, 1
      // Predicated region
      $region13: #{resnet_block_forward.5} parent=11 // pred_check
        %p147 = pneg %p57
      $region14: #{resnet_block_forward.5} parent=11 // pred_check_branch
        %149 = sbr.rel (%p147) target = $region16
      $region15: #{resnet_block_forward.5} parent=11 // pred_region
        _
      $region16: #{resnet_block_forward.5} parent=11 // pred_fallthru
        _
      // Predicated region
      $region17: #{resnet_block_forward.5} parent=11 // pred_check
        %p150 = pneg %p78
      $region18: #{resnet_block_forward.5} parent=11 // pred_check_branch
        %152 = sbr.rel (%p150) target = $region20
      $region19: #{resnet_block_forward.5} parent=11 // pred_region
        _
      $region20: #{resnet_block_forward.5} parent=11 // pred_fallthru
        _
    $region12: #{resnet_block_forward.5} parent=5 // pred_fallthru
      _
    %p153 = scmp.lt.s32.totalorder %s10, 2
    // Predicated region
    $region21: #{resnet_block_forward.5} parent=5 // pred_check
      %p154 = pneg %p153
    $region22: #{resnet_block_forward.5} parent=5 // pred_check_branch
      %156 = sbr.rel (%p154) target = $region24
    $region23: #{resnet_block_forward.5} parent=5 // pred_region
      // Predicated region
      $region25: #{resnet_block_forward.5} parent=23 // pred_check
        %p157 = pneg %p30
      $region26: #{resnet_block_forward.5} parent=23 // pred_check_branch
        %159 = sbr.rel (%p157) target = $region28
      $region27: #{resnet_block_forward.5} parent=23 // pred_region
        %s160 = smul.u32 4, %s10
        %p161 = scmp.lt.s32.totalorder %s160, 7
        %s162 = scalar_select %p161, %s160, 7
        %s163 = smul.addr %s162, 4
        %s164 = scalar_lea.vmem %s0, %s163
        %s165 = smul.u32 4, %s10
      $region28: #{resnet_block_forward.5} parent=23 // pred_fallthru
        _
      // Predicated region
      $region29: #{resnet_block_forward.5} parent=23 // pred_check
        %p166 = pneg %p100
      $region30: #{resnet_block_forward.5} parent=23 // pred_check_branch
        %168 = sbr.rel (%p166) target = $region32
      $region31: #{resnet_block_forward.5} parent=23 // pred_region
        %s169 = sadd.s32 %s10, 1
        %s170 = smul.u32 4, %s169
        %p171 = scmp.lt.s32.totalorder %s170, 15
        %s172 = scalar_select %p171, %s170, 15
        %s173 = smul.addr %s172, 4
        %s174 = scalar_lea.vmem %s3, %s173
        %s175 = sadd.s32 %s10, 1
        %s176 = smul.u32 4, %s175
      $region32: #{resnet_block_forward.5} parent=23 // pred_fallthru
        _
    $region24: #{resnet_block_forward.5} parent=5 // pred_fallthru
      _
    %p177 = scmp.le.s32.totalorder 1, %s10
    %p178 = scmp.lt.s32.totalorder %s10, 3
    %p179 = pnand %p177, %p178
    %p180 = pneg %p179
    // Predicated region
    $region33: #{resnet_block_forward.5} parent=5 // pred_check
      _
    $region34: #{resnet_block_forward.5} parent=5 // pred_check_branch
      %182 = sbr.rel (%p179) target = $region36
    $region35: #{resnet_block_forward.5} parent=5 // pred_region
      %s183 = ssub.s32 %s10, 1
      %s184 = smul.u32 4, %s15
      %p185 = scmp.lt.s32.totalorder %s184, 7
      %s186 = scalar_select %p185, %s184, 7
      %s187 = smul.addr %s186, 4
      %s188 = scalar_lea.vmem %s0, %s187
      %p189 = pneg %p36
      %p190 = pneg %p33
      %p191 = pneg %p57
      %p192 = pneg %p54
      %p193 = pneg %p78
      %p194 = pneg %p75
      %s195 = sadd.s32 %s15, 1
      %s196 = smul.u32 4, %s195
      %p197 = scmp.lt.s32.totalorder %s196, 15
      %s198 = scalar_select %p197, %s196, 15
      %s199 = smul.addr %s198, 4
      %s200 = scalar_lea.vmem %s3, %s199
      %p201 = pneg %p106
      %p202 = pneg %p103
      %p203 = pneg %p132
      %p204 = pneg %p129
      %s205 = smul.u32 4, %s15
      %p206 = scmp.lt.s32.totalorder %s205, 7
      %s207 = scalar_select %p206, %s205, 7
      %s208 = smul.addr %s207, 8
      %s209 = scalar_lea.vmem %s4, %s208
      %s210 = smul.u32 4, %s15
      %p211 = scmp.lt.s32.totalorder %s210, 7
      %s212 = scalar_select %p211, %s210, 7
      %s213 = smul.addr %s212, 4
      %s214 = scalar_lea.vmem %s0, %s213
      %s215 = smul.u32 4, %s15
      %s216 = sadd.s32 %s15, 1
      %s217 = smul.u32 4, %s216
      %p218 = scmp.lt.s32.totalorder %s217, 15
      %s219 = scalar_select %p218, %s217, 15
      %s220 = smul.addr %s219, 4
      %s221 = scalar_lea.vmem %s3, %s220
      %s222 = sadd.s32 %s15, 1
      %s223 = smul.u32 4, %s222
      %s224 = smul.u32 4, %s15
      %p225 = scmp.lt.s32.totalorder %s224, 7
      %s226 = scalar_select %p225, %s224, 7
      %s227 = smul.addr %s226, 8
      %s228 = scalar_lea.vmem %s4, %s227
      %s229 = smul.u32 4, %s15
      %v230 = vld [vmem:[%s214] sm:$0xff]
      %v231 = vld [vmem:[%s214 + $0x8] sm:$0xff]
      %v232 = vunpack.c.l.bf16 %v230
      %v233 = vunpack.c.h.bf16 %v230
      %v234 = vunpack.c.l.bf16 %v231
      %v235 = vunpack.c.h.bf16 %v231
      %v236 = vld [vmem:[%s1] sm:$0xff]
      %238 = vset.pattern.permute.xlu0 0
      %239 = vperm.xlu0 %238, %v236
      %v240 = vpop.permute.xlu0 %239
      %v242 = vmul.f32 %v232, %v240
      %v243 = vmul.f32 %v233, %v240
      %v244 = vmul.f32 %v234, %v240
      %v245 = vmul.f32 %v235, %v240
      %v246 = vld [vmem:[%s2] sm:$0xff]
      %248 = vset.pattern.permute.xlu0 0
      %249 = vperm.xlu0 %248, %v246
      %v250 = vpop.permute.xlu0 %249
      %v252 = vadd.f32 %v242, %v250
      %v253 = vadd.f32 %v243, %v250
      %v254 = vadd.f32 %v244, %v250
      %v255 = vadd.f32 %v245, %v250
      %v256 = vld [vmem:[%s221] sm:$0xff]
      %v257 = vld [vmem:[%s221 + $0x8] sm:$0xff]
      %v258 = vunpack.c.l.bf16 %v256
      %v259 = vunpack.c.h.bf16 %v256
      %v260 = vunpack.c.l.bf16 %v257
      %v261 = vunpack.c.h.bf16 %v257
      %v262 = vadd.f32 %v252, %v258
      %v263 = vadd.f32 %v253, %v259
      %v264 = vadd.f32 %v254, %v260
      %v265 = vadd.f32 %v255, %v261
      %v266 = vmax.f32 %v262, 0.0
      %v267 = vmax.f32 %v263, 0.0
      %v268 = vmax.f32 %v264, 0.0
      %v269 = vmax.f32 %v265, 0.0
      %270 = vst [vmem:[%s228] sm:$0xff] %v266
      %271 = vst [vmem:[%s228 + $0x8] sm:$0xff] %v267
      %272 = vst [vmem:[%s228 + $0x10] sm:$0xff] %v268
      %273 = vst [vmem:[%s228 + $0x18] sm:$0xff] %v269
      %s274 = smul.u32 4, %s15
      %p275 = scmp.lt.s32.totalorder %s274, 7
      %s276 = scalar_select %p275, %s274, 7
      %s277 = smul.addr %s276, 8
      %s278 = scalar_lea.vmem %s4, %s277
      // Predicated region
      $region37: #{resnet_block_forward.5} parent=35 // pred_check
        %p279 = pneg %p129
      $region38: #{resnet_block_forward.5} parent=35 // pred_check_branch
        %281 = sbr.rel (%p279) target = $region40
      $region39: #{resnet_block_forward.5} parent=35 // pred_region
        %s282 = smul.u32 4, %s15
      $region40: #{resnet_block_forward.5} parent=35 // pred_fallthru
        _
    $region36: #{resnet_block_forward.5} parent=5 // pred_fallthru
      _
    %p283 = scmp.le.s32.totalorder 2, %s10
    // Predicated region
    $region41: #{resnet_block_forward.5} parent=5 // pred_check
      %p284 = pneg %p283
    $region42: #{resnet_block_forward.5} parent=5 // pred_check_branch
      %286 = sbr.rel (%p284) target = $region44
    $region43: #{resnet_block_forward.5} parent=5 // pred_region
      %s287 = ssub.s32 %s10, 2
      // Predicated region
      $region45: #{resnet_block_forward.5} parent=43 // pred_check
        %p288 = pneg %p135
      $region46: #{resnet_block_forward.5} parent=43 // pred_check_branch
        %290 = sbr.rel (%p288) target = $region48
      $region47: #{resnet_block_forward.5} parent=43 // pred_region
        %s291 = smul.u32 4, %s16
        %p292 = scmp.lt.s32.totalorder %s291, 7
        %s293 = scalar_select %p292, %s291, 7
        %s294 = smul.addr %s293, 8
        %s295 = scalar_lea.vmem %s4, %s294
      $region48: #{resnet_block_forward.5} parent=43 // pred_fallthru
        _
    $region44: #{resnet_block_forward.5} parent=5 // pred_fallthru
      _
  $region6: #{resnet_block_forward.5} parent=0 // loop_footer
    %s14 = sadd.s32 1, %s10
  $region7: #{resnet_block_forward.5} parent=0 // loop_footer_branch
    %9 = sbr.rel target = $region3
  $region8: #{resnet_block_forward.5} parent=0 // loop_exit
    _

// kernel: resnet_block_forward.4
$region0: #{resnet_block_forward.4}
  #allocation0 [shape = 'u32[]', space=smem, size = 0x4, offset = 0x4, fixed_abs, tag = 'smem constant byte address 0x4 - core index']
  #allocation1 [shape = 'u32[144,128]{1,0:T(1,128)}', space=vmem, size = 0x12000, scoped, tag = 'internal scratch']
  %s0 = inlined_call_operand.vmem [shape: bf16[8,1024], index: 0, kind: input, shape index: {}, may-alias: {0,1,2}]
  %s1 = inlined_call_operand.vmem [shape: bf16[8,1024], index: 1, kind: input, shape index: {}, may-alias: {0,1,2}]
  %s2 = inlined_call_operand.vmem [shape: bf16[8,1024], index: 2, kind: input, shape index: {}, may-alias: {0,1,2}]
  %s3 = inlined_call_operand.vmem [shape: f32[1,2048], index: 3, kind: input, shape index: {}, may-alias: {3,4,5}]
  %s4 = inlined_call_operand.vmem [shape: f32[1,2048], index: 4, kind: input, shape index: {}, may-alias: {3,4,5}]
  %s5 = inlined_call_operand.vmem [shape: f32[1,2048], index: 5, kind: input, shape index: {}, may-alias: {3,4,5}]
  %s6 = inlined_call_operand.vmem [shape: f32[8,1], index: 6, kind: input, shape index: {}]
  %s7 = inlined_call_operand.vmem [shape: f32[8,1], index: 7, kind: input, shape index: {}]
  %s8 = inlined_call_operand.vmem [shape: bf16[9,8,8], index: 8, kind: input, shape index: {}]
  %s9 = inlined_call_operand.vmem [shape: bf16[8,1024], index: 9, kind: output, shape index: {0}]
  %s10 = inlined_call_operand.vmem [shape: f32[2,8,1], index: 10, kind: output, shape index: {1}]
  %s11 = inlined_call_operand.vmem [shape: f32[2,8,1], index: 11, kind: output, shape index: {2}]
  %12 = xla_tuple %s9, %s10, %s11
  %s13 = sld [smem:[#allocation0]]
  $region85: #{resnet_block_forward.4} parent=0
    _
  %s15 = ssub.s32 1, %s13
  %s16 = scalar_select 0, %s15, %s13
  loop: start=0, step=1, limit=4
  $region2: #{resnet_block_forward.4} parent=0 // loop_pre_header
    _
  $region3: #{resnet_block_forward.4} parent=0 // loop_header
    %s18 = sphi 0, %s22
    %p19 = scmp.ge.s32.totalorder %s18, 4
    %s34 = sphi 0, %s36
    %s37 = sphi 0, %s34
    %s38 = sphi 0, %s37
    %s54 = sphi 0, %s38
    %s60 = sphi 0, %s62
    %s63 = sphi 0, %s60
    %s64 = sphi 0, %s63
    %s80 = sphi 0, %s64
    %s92 = sphi 0, %s94
    %s95 = sphi 0, %s92
    %s96 = sphi 0, %s95
    %s112 = sphi 0, %s96
    %s118 = sphi 0, %s120
    %s121 = sphi 0, %s118
    %s122 = sphi 0, %s121
    %s138 = sphi 0, %s122
    %s146 = sphi 0, %s148
    %s149 = sphi 0, %s146
    %s150 = sphi 0, %s149
    %s166 = sphi 0, %s150
    %s174 = sphi 0, %s176
    %s177 = sphi 0, %s174
    %s178 = sphi 0, %s177
    %s194 = sphi 0, %s178
    %s198 = sphi 0, %s198
    %s200 = sphi 0, %s198
    %s201 = sphi 0, %s200
    %s215 = sphi 0, %s201
    %s219 = sphi 0, %s219
    %s221 = sphi 0, %s219
    %s222 = sphi 0, %s221
    %s236 = sphi 0, %s222
    %s240 = sphi 0, %s240
    %s242 = sphi 0, %s240
    %s243 = sphi 0, %s242
    %s257 = sphi 0, %s243
    %s263 = sphi 0, %s265
    %s266 = sphi 0, %s263
    %s267 = sphi 0, %s266
    %s283 = sphi 0, %s267
    %s289 = sphi 0, %s291
    %s292 = sphi 0, %s289
    %s293 = sphi 0, %s292
    %s309 = sphi 0, %s293
    %s315 = sphi 0, %s317
    %s318 = sphi 0, %s315
    %s319 = sphi 0, %s318
    %s335 = sphi 0, %s319
  $region4: #{resnet_block_forward.4} parent=0 // loop_header_branch
    %21 = sbr.rel (%p19) target = $region8
  $region5: #{resnet_block_forward.4} parent=0 // loop_body
    %s23 = ssub.s32 %s18, 1
    %s24 = ssub.s32 %s18, 2
    %s25 = sadd.s32 %s18, 1
    %s26 = ssub.s32 %s18, 1
    %p27 = scmp.gt.s32.totalorder %s26, 0
    %s28 = scalar_select %p27, %s26, 0
    %s29 = ssub.s32 %s25, 1
    %p30 = scmp.gt.s32.totalorder %s29, 0
    %s31 = scalar_select %p30, %s29, 0
    %s32 = ssub.s32 %s28, %s31
    %p33 = scmp.eq.s32.totalorder %s32, 0
    %s35 = sadd.s32 %s34, 1
    %s36 = scalar_select %p33, %s34, %s35
    %p39 = pneg %p33
    %p40 = scmp.eq.s32.totalorder %s18, 1
    %p41 = por %p39, %p40
    %p42 = scmp.ne.s32.totalorder %s34, %s37
    %p43 = scmp.eq.s32.totalorder %s18, 0
    %p44 = por %p42, %p43
    %p45 = scmp.ne.s32.totalorder %s34, %s37
    %p46 = scmp.eq.s32.totalorder %s23, 1
    %p47 = por %p45, %p46
    %p48 = scmp.ne.s32.totalorder %s37, %s38
    %p49 = scmp.eq.s32.totalorder %s23, 0
    %p50 = por %p48, %p49
    %p51 = scmp.ne.s32.totalorder %s37, %s38
    %p52 = scmp.eq.s32.totalorder %s24, 1
    %p53 = por %p51, %p52
    %p55 = scmp.ne.s32.totalorder %s38, %s54
    %p56 = scmp.eq.s32.totalorder %s24, 0
    %p57 = por %p55, %p56
    %s58 = ssub.s32 %s18, %s25
    %p59 = scmp.eq.s32.totalorder %s58, 0
    %s61 = sadd.s32 %s60, 1
    %s62 = scalar_select %p59, %s60, %s61
    %p65 = pneg %p59
    %p66 = scmp.eq.s32.totalorder %s18, 1
    %p67 = por %p65, %p66
    %p68 = scmp.ne.s32.totalorder %s60, %s63
    %p69 = scmp.eq.s32.totalorder %s18, 0
    %p70 = por %p68, %p69
    %p71 = scmp.ne.s32.totalorder %s60, %s63
    %p72 = scmp.eq.s32.totalorder %s23, 1
    %p73 = por %p71, %p72
    %p74 = scmp.ne.s32.totalorder %s63, %s64
    %p75 = scmp.eq.s32.totalorder %s23, 0
    %p76 = por %p74, %p75
    %p77 = scmp.ne.s32.totalorder %s63, %s64
    %p78 = scmp.eq.s32.totalorder %s24, 1
    %p79 = por %p77, %p78
    %p81 = scmp.ne.s32.totalorder %s64, %s80
    %p82 = scmp.eq.s32.totalorder %s24, 0
    %p83 = por %p81, %p82
    %s84 = sadd.s32 %s18, 1
    %p85 = scmp.lt.s32.totalorder %s84, 1
    %s86 = scalar_select %p85, %s84, 1
    %s87 = sadd.s32 %s25, 1
    %p88 = scmp.lt.s32.totalorder %s87, 1
    %s89 = scalar_select %p88, %s87, 1
    %s90 = ssub.s32 %s86, %s89
    %p91 = scmp.eq.s32.totalorder %s90, 0
    %s93 = sadd.s32 %s92, 1
    %s94 = scalar_select %p91, %s92, %s93
    %p97 = pneg %p91
    %p98 = scmp.eq.s32.totalorder %s18, 1
    %p99 = por %p97, %p98
    %p100 = scmp.ne.s32.totalorder %s92, %s95
    %p101 = scmp.eq.s32.totalorder %s18, 0
    %p102 = por %p100, %p101
    %p103 = scmp.ne.s32.totalorder %s92, %s95
    %p104 = scmp.eq.s32.totalorder %s23, 1
    %p105 = por %p103, %p104
    %p106 = scmp.ne.s32.totalorder %s95, %s96
    %p107 = scmp.eq.s32.totalorder %s23, 0
    %p108 = por %p106, %p107
    %p109 = scmp.ne.s32.totalorder %s95, %s96
    %p110 = scmp.eq.s32.totalorder %s24, 1
    %p111 = por %p109, %p110
    %p113 = scmp.ne.s32.totalorder %s96, %s112
    %p114 = scmp.eq.s32.totalorder %s24, 0
    %p115 = por %p113, %p114
    %s116 = ssub.s32 %s18, %s25
    %p117 = scmp.eq.s32.totalorder %s116, 0
    %s119 = sadd.s32 %s118, 1
    %s120 = scalar_select %p117, %s118, %s119
    %p123 = pneg %p117
    %p124 = scmp.eq.s32.totalorder %s18, 1
    %p125 = por %p123, %p124
    %p126 = scmp.ne.s32.totalorder %s118, %s121
    %p127 = scmp.eq.s32.totalorder %s18, 0
    %p128 = por %p126, %p127
    %p129 = scmp.ne.s32.totalorder %s118, %s121
    %p130 = scmp.eq.s32.totalorder %s23, 1
    %p131 = por %p129, %p130
    %p132 = scmp.ne.s32.totalorder %s121, %s122
    %p133 = scmp.eq.s32.totalorder %s23, 0
    %p134 = por %p132, %p133
    %p135 = scmp.ne.s32.totalorder %s121, %s122
    %p136 = scmp.eq.s32.totalorder %s24, 1
    %p137 = por %p135, %p136
    %p139 = scmp.ne.s32.totalorder %s122, %s138
    %p140 = scmp.eq.s32.totalorder %s24, 0
    %p141 = por %p139, %p140
    %s142 = sadd.s32 %s18, 1
    %s143 = sadd.s32 %s25, 1
    %s144 = ssub.s32 %s142, %s143
    %p145 = scmp.eq.s32.totalorder %s144, 0
    %s147 = sadd.s32 %s146, 1
    %s148 = scalar_select %p145, %s146, %s147
    %p151 = pneg %p145
    %p152 = scmp.eq.s32.totalorder %s18, 1
    %p153 = por %p151, %p152
    %p154 = scmp.ne.s32.totalorder %s146, %s149
    %p155 = scmp.eq.s32.totalorder %s18, 0
    %p156 = por %p154, %p155
    %p157 = scmp.ne.s32.totalorder %s146, %s149
    %p158 = scmp.eq.s32.totalorder %s23, 1
    %p159 = por %p157, %p158
    %p160 = scmp.ne.s32.totalorder %s149, %s150
    %p161 = scmp.eq.s32.totalorder %s23, 0
    %p162 = por %p160, %p161
    %p163 = scmp.ne.s32.totalorder %s149, %s150
    %p164 = scmp.eq.s32.totalorder %s24, 1
    %p165 = por %p163, %p164
    %p167 = scmp.ne.s32.totalorder %s150, %s166
    %p168 = scmp.eq.s32.totalorder %s24, 0
    %p169 = por %p167, %p168
    %s170 = sadd.s32 %s18, 2
    %s171 = sadd.s32 %s25, 2
    %s172 = ssub.s32 %s170, %s171
    %p173 = scmp.eq.s32.totalorder %s172, 0
    %s175 = sadd.s32 %s174, 1
    %s176 = scalar_select %p173, %s174, %s175
    %p179 = pneg %p173
    %p180 = scmp.eq.s32.totalorder %s18, 1
    %p181 = por %p179, %p180
    %p182 = scmp.ne.s32.totalorder %s174, %s177
    %p183 = scmp.eq.s32.totalorder %s18, 0
    %p184 = por %p182, %p183
    %p185 = scmp.ne.s32.totalorder %s174, %s177
    %p186 = scmp.eq.s32.totalorder %s23, 1
    %p187 = por %p185, %p186
    %p188 = scmp.ne.s32.totalorder %s177, %s178
    %p189 = scmp.eq.s32.totalorder %s23, 0
    %p190 = por %p188, %p189
    %p191 = scmp.ne.s32.totalorder %s177, %s178
    %p192 = scmp.eq.s32.totalorder %s24, 1
    %p193 = por %p191, %p192
    %p195 = scmp.ne.s32.totalorder %s178, %s194
    %p196 = scmp.eq.s32.totalorder %s24, 0
    %p197 = por %p195, %p196
    %s199 = sadd.s32 %s198, 1
    %p202 = scmp.eq.s32.totalorder %s18, 1
    %p203 = scmp.ne.s32.totalorder %s198, %s200
    %p204 = scmp.eq.s32.totalorder %s18, 0
    %p205 = por %p203, %p204
    %p206 = scmp.ne.s32.totalorder %s198, %s200
    %p207 = scmp.eq.s32.totalorder %s23, 1
    %p208 = por %p206, %p207
    %p209 = scmp.ne.s32.totalorder %s200, %s201
    %p210 = scmp.eq.s32.totalorder %s23, 0
    %p211 = por %p209, %p210
    %p212 = scmp.ne.s32.totalorder %s200, %s201
    %p213 = scmp.eq.s32.totalorder %s24, 1
    %p214 = por %p212, %p213
    %p216 = scmp.ne.s32.totalorder %s201, %s215
    %p217 = scmp.eq.s32.totalorder %s24, 0
    %p218 = por %p216, %p217
    %s220 = sadd.s32 %s219, 1
    %p223 = scmp.eq.s32.totalorder %s18, 1
    %p224 = scmp.ne.s32.totalorder %s219, %s221
    %p225 = scmp.eq.s32.totalorder %s18, 0
    %p226 = por %p224, %p225
    %p227 = scmp.ne.s32.totalorder %s219, %s221
    %p228 = scmp.eq.s32.totalorder %s23, 1
    %p229 = por %p227, %p228
    %p230 = scmp.ne.s32.totalorder %s221, %s222
    %p231 = scmp.eq.s32.totalorder %s23, 0
    %p232 = por %p230, %p231
    %p233 = scmp.ne.s32.totalorder %s221, %s222
    %p234 = scmp.eq.s32.totalorder %s24, 1
    %p235 = por %p233, %p234
    %p237 = scmp.ne.s32.totalorder %s222, %s236
    %p238 = scmp.eq.s32.totalorder %s24, 0
    %p239 = por %p237, %p238
    %s241 = sadd.s32 %s240, 1
    %p244 = scmp.eq.s32.totalorder %s18, 1
    %p245 = scmp.ne.s32.totalorder %s240, %s242
    %p246 = scmp.eq.s32.totalorder %s18, 0
    %p247 = por %p245, %p246
    %p248 = scmp.ne.s32.totalorder %s240, %s242
    %p249 = scmp.eq.s32.totalorder %s23, 1
    %p250 = por %p248, %p249
    %p251 = scmp.ne.s32.totalorder %s242, %s243
    %p252 = scmp.eq.s32.totalorder %s23, 0
    %p253 = por %p251, %p252
    %p254 = scmp.ne.s32.totalorder %s242, %s243
    %p255 = scmp.eq.s32.totalorder %s24, 1
    %p256 = por %p254, %p255
    %p258 = scmp.ne.s32.totalorder %s243, %s257
    %p259 = scmp.eq.s32.totalorder %s24, 0
    %p260 = por %p258, %p259
    %s261 = ssub.s32 %s18, %s25
    %p262 = scmp.eq.s32.totalorder %s261, 0
    %s264 = sadd.s32 %s263, 1
    %s265 = scalar_select %p262, %s263, %s264
    %p268 = pneg %p262
    %p269 = scmp.eq.s32.totalorder %s18, 1
    %p270 = por %p268, %p269
    %p271 = scmp.ne.s32.totalorder %s263, %s266
    %p272 = scmp.eq.s32.totalorder %s18, 0
    %p273 = por %p271, %p272
    %p274 = scmp.ne.s32.totalorder %s263, %s266
    %p275 = scmp.eq.s32.totalorder %s23, 1
    %p276 = por %p274, %p275
    %p277 = scmp.ne.s32.totalorder %s266, %s267
    %p278 = scmp.eq.s32.totalorder %s23, 0
    %p279 = por %p277, %p278
    %p280 = scmp.ne.s32.totalorder %s266, %s267
    %p281 = scmp.eq.s32.totalorder %s24, 1
    %p282 = por %p280, %p281
    %p284 = scmp.ne.s32.totalorder %s267, %s283
    %p285 = scmp.eq.s32.totalorder %s24, 0
    %p286 = por %p284, %p285
    %s287 = ssub.s32 %s18, %s25
    %p288 = scmp.eq.s32.totalorder %s287, 0
    %s290 = sadd.s32 %s289, 1
    %s291 = scalar_select %p288, %s289, %s290
    %p294 = pneg %p288
    %p295 = scmp.eq.s32.totalorder %s18, 1
    %p296 = por %p294, %p295
    %p297 = scmp.ne.s32.totalorder %s289, %s292
    %p298 = scmp.eq.s32.totalorder %s18, 0
    %p299 = por %p297, %p298
    %p300 = scmp.ne.s32.totalorder %s289, %s292
    %p301 = scmp.eq.s32.totalorder %s23, 1
    %p302 = por %p300, %p301
    %p303 = scmp.ne.s32.totalorder %s292, %s293
    %p304 = scmp.eq.s32.totalorder %s23, 0
    %p305 = por %p303, %p304
    %p306 = scmp.ne.s32.totalorder %s292, %s293
    %p307 = scmp.eq.s32.totalorder %s24, 1
    %p308 = por %p306, %p307
    %p310 = scmp.ne.s32.totalorder %s293, %s309
    %p311 = scmp.eq.s32.totalorder %s24, 0
    %p312 = por %p310, %p311
    %s313 = ssub.s32 %s18, %s25
    %p314 = scmp.eq.s32.totalorder %s313, 0
    %s316 = sadd.s32 %s315, 1
    %s317 = scalar_select %p314, %s315, %s316
    %p320 = pneg %p314
    %p321 = scmp.eq.s32.totalorder %s18, 1
    %p322 = por %p320, %p321
    %p323 = scmp.ne.s32.totalorder %s315, %s318
    %p324 = scmp.eq.s32.totalorder %s18, 0
    %p325 = por %p323, %p324
    %p326 = scmp.ne.s32.totalorder %s315, %s318
    %p327 = scmp.eq.s32.totalorder %s23, 1
    %p328 = por %p326, %p327
    %p329 = scmp.ne.s32.totalorder %s318, %s319
    %p330 = scmp.eq.s32.totalorder %s23, 0
    %p331 = por %p329, %p330
    %p332 = scmp.ne.s32.totalorder %s318, %s319
    %p333 = scmp.eq.s32.totalorder %s24, 1
    %p334 = por %p332, %p333
    %p336 = scmp.ne.s32.totalorder %s319, %s335
    %p337 = scmp.eq.s32.totalorder %s24, 0
    %p338 = por %p336, %p337
    %p339 = scmp.le.s32.totalorder 1, %s18
    %p340 = scmp.lt.s32.totalorder %s18, 3
    %p341 = pnand %p339, %p340
    %p342 = pneg %p341
    // Predicated region
    $region9: #{resnet_block_forward.4} parent=5 // pred_check
      _
    $region10: #{resnet_block_forward.4} parent=5 // pred_check_branch
      %344 = sbr.rel (%p341) target = $region12
    $region11: #{resnet_block_forward.4} parent=5 // pred_region
      %s345 = ssub.s32 %s18, 1
      // Predicated region
      $region13: #{resnet_block_forward.4} parent=11 // pred_check
        %p346 = pneg %p211
      $region14: #{resnet_block_forward.4} parent=11 // pred_check_branch
        %348 = sbr.rel (%p346) target = $region16
      $region15: #{resnet_block_forward.4} parent=11 // pred_region
        _
      $region16: #{resnet_block_forward.4} parent=11 // pred_fallthru
        _
      // Predicated region
      $region17: #{resnet_block_forward.4} parent=11 // pred_check
        %p349 = pneg %p232
      $region18: #{resnet_block_forward.4} parent=11 // pred_check_branch
        %351 = sbr.rel (%p349) target = $region20
      $region19: #{resnet_block_forward.4} parent=11 // pred_region
        _
      $region20: #{resnet_block_forward.4} parent=11 // pred_fallthru
        _
      // Predicated region
      $region21: #{resnet_block_forward.4} parent=11 // pred_check
        %p352 = pneg %p253
      $region22: #{resnet_block_forward.4} parent=11 // pred_check_branch
        %354 = sbr.rel (%p352) target = $region24
      $region23: #{resnet_block_forward.4} parent=11 // pred_region
        _
      $region24: #{resnet_block_forward.4} parent=11 // pred_fallthru
        _
    $region12: #{resnet_block_forward.4} parent=5 // pred_fallthru
      _
    %p355 = scmp.lt.s32.totalorder %s18, 2
    // Predicated region
    $region25: #{resnet_block_forward.4} parent=5 // pred_check
      %p356 = pneg %p355
    $region26: #{resnet_block_forward.4} parent=5 // pred_check_branch
      %358 = sbr.rel (%p356) target = $region28
    $region27: #{resnet_block_forward.4} parent=5 // pred_region
      // Predicated region
      $region29: #{resnet_block_forward.4} parent=27 // pred_check
        %p359 = pneg %p44
      $region30: #{resnet_block_forward.4} parent=27 // pred_check_branch
        %361 = sbr.rel (%p359) target = $region32
      $region31: #{resnet_block_forward.4} parent=27 // pred_region
        %s362 = ssub.s32 %s18, 1
        %p363 = scmp.gt.s32.totalorder %s362, 0
        %s364 = scalar_select %p363, %s362, 0
        %s365 = smul.u32 4, %s364
        %p366 = scmp.lt.s32.totalorder %s365, 7
        %s367 = scalar_select %p366, %s365, 7
        %s368 = smul.addr %s367, 4
        %s369 = scalar_lea.vmem %s0, %s368
        %s370 = ssub.s32 %s18, 1
        %p371 = scmp.gt.s32.totalorder %s370, 0
        %s372 = scalar_select %p371, %s370, 0
        %s373 = smul.u32 4, %s372
      $region32: #{resnet_block_forward.4} parent=27 // pred_fallthru
        _
      // Predicated region
      $region33: #{resnet_block_forward.4} parent=27 // pred_check
        %p374 = pneg %p70
      $region34: #{resnet_block_forward.4} parent=27 // pred_check_branch
        %376 = sbr.rel (%p374) target = $region36
      $region35: #{resnet_block_forward.4} parent=27 // pred_region
        %s377 = smul.u32 4, %s18
        %p378 = scmp.lt.s32.totalorder %s377, 7
        %s379 = scalar_select %p378, %s377, 7
        %s380 = smul.addr %s379, 4
        %s381 = scalar_lea.vmem %s1, %s380
        %s382 = smul.u32 4, %s18
      $region36: #{resnet_block_forward.4} parent=27 // pred_fallthru
        _
      // Predicated region
      $region37: #{resnet_block_forward.4} parent=27 // pred_check
        %p383 = pneg %p102
      $region38: #{resnet_block_forward.4} parent=27 // pred_check_branch
        %385 = sbr.rel (%p383) target = $region40
      $region39: #{resnet_block_forward.4} parent=27 // pred_region
        %s386 = sadd.s32 %s18, 1
        %p387 = scmp.lt.s32.totalorder %s386, 1
        %s388 = scalar_select %p387, %s386, 1
        %s389 = smul.u32 4, %s388
        %p390 = scmp.lt.s32.totalorder %s389, 7
        %s391 = scalar_select %p390, %s389, 7
        %s392 = smul.addr %s391, 4
        %s393 = scalar_lea.vmem %s2, %s392
        %s394 = sadd.s32 %s18, 1
        %p395 = scmp.lt.s32.totalorder %s394, 1
        %s396 = scalar_select %p395, %s394, 1
        %s397 = smul.u32 4, %s396
      $region40: #{resnet_block_forward.4} parent=27 // pred_fallthru
        _
      // Predicated region
      $region41: #{resnet_block_forward.4} parent=27 // pred_check
        %p398 = pneg %p128
      $region42: #{resnet_block_forward.4} parent=27 // pred_check_branch
        %400 = sbr.rel (%p398) target = $region44
      $region43: #{resnet_block_forward.4} parent=27 // pred_region
        %s401 = smul.u32 4, %s18
        %p402 = scmp.lt.s32.totalorder %s401, 15
        %s403 = scalar_select %p402, %s401, 15
        %s404 = scalar_lea.vmem %s3, %s403
        %s405 = smul.u32 4, %s18
      $region44: #{resnet_block_forward.4} parent=27 // pred_fallthru
        _
      // Predicated region
      $region45: #{resnet_block_forward.4} parent=27 // pred_check
        %p406 = pneg %p156
      $region46: #{resnet_block_forward.4} parent=27 // pred_check_branch
        %408 = sbr.rel (%p406) target = $region48
      $region47: #{resnet_block_forward.4} parent=27 // pred_region
        %s409 = sadd.s32 %s18, 1
        %s410 = smul.u32 4, %s409
        %p411 = scmp.lt.s32.totalorder %s410, 15
        %s412 = scalar_select %p411, %s410, 15
        %s413 = scalar_lea.vmem %s4, %s412
        %s414 = sadd.s32 %s18, 1
        %s415 = smul.u32 4, %s414
      $region48: #{resnet_block_forward.4} parent=27 // pred_fallthru
        _
      // Predicated region
      $region49: #{resnet_block_forward.4} parent=27 // pred_check
        %p416 = pneg %p184
      $region50: #{resnet_block_forward.4} parent=27 // pred_check_branch
        %418 = sbr.rel (%p416) target = $region52
      $region51: #{resnet_block_forward.4} parent=27 // pred_region
        %s419 = sadd.s32 %s18, 2
        %s420 = smul.u32 4, %s419
        %p421 = scmp.lt.s32.totalorder %s420, 15
        %s422 = scalar_select %p421, %s420, 15
        %s423 = scalar_lea.vmem %s5, %s422
        %s424 = sadd.s32 %s18, 2
        %s425 = smul.u32 4, %s424
      $region52: #{resnet_block_forward.4} parent=27 // pred_fallthru
        _
    $region28: #{resnet_block_forward.4} parent=5 // pred_fallthru
      _
    %p426 = scmp.le.s32.totalorder 1, %s18
    %p427 = scmp.lt.s32.totalorder %s18, 3
    %p428 = pnand %p426, %p427
    %p429 = pneg %p428
    // Predicated region
    $region53: #{resnet_block_forward.4} parent=5 // pred_check
      _
    $region54: #{resnet_block_forward.4} parent=5 // pred_check_branch
      %431 = sbr.rel (%p428) target = $region56
    $region55: #{resnet_block_forward.4} parent=5 // pred_region
      %s432 = ssub.s32 %s18, 1
      %s433 = ssub.s32 %s23, 1
      %p434 = scmp.gt.s32.totalorder %s433, 0
      %s435 = scalar_select %p434, %s433, 0
      %s436 = smul.u32 4, %s435
      %p437 = scmp.lt.s32.totalorder %s436, 7
      %s438 = scalar_select %p437, %s436, 7
      %s439 = smul.addr %s438, 4
      %s440 = scalar_lea.vmem %s0, %s439
      %p441 = pneg %p50
      %p442 = pneg %p47
      %s443 = smul.u32 4, %s23
      %p444 = scmp.lt.s32.totalorder %s443, 7
      %s445 = scalar_select %p444, %s443, 7
      %s446 = smul.addr %s445, 4
      %s447 = scalar_lea.vmem %s1, %s446
      %p448 = pneg %p76
      %p449 = pneg %p73
      %s450 = sadd.s32 %s23, 1
      %p451 = scmp.lt.s32.totalorder %s450, 1
      %s452 = scalar_select %p451, %s450, 1
      %s453 = smul.u32 4, %s452
      %p454 = scmp.lt.s32.totalorder %s453, 7
      %s455 = scalar_select %p454, %s453, 7
      %s456 = smul.addr %s455, 4
      %s457 = scalar_lea.vmem %s2, %s456
      %p458 = pneg %p108
      %p459 = pneg %p105
      %s460 = smul.u32 4, %s23
      %p461 = scmp.lt.s32.totalorder %s460, 15
      %s462 = scalar_select %p461, %s460, 15
      %s463 = scalar_lea.vmem %s3, %s462
      %p464 = pneg %p134
      %p465 = pneg %p131
      %s466 = sadd.s32 %s23, 1
      %s467 = smul.u32 4, %s466
      %p468 = scmp.lt.s32.totalorder %s467, 15
      %s469 = scalar_select %p468, %s467, 15
      %s470 = scalar_lea.vmem %s4, %s469
      %p471 = pneg %p162
      %p472 = pneg %p159
      %s473 = sadd.s32 %s23, 2
      %s474 = smul.u32 4, %s473
      %p475 = scmp.lt.s32.totalorder %s474, 15
      %s476 = scalar_select %p475, %s474, 15
      %s477 = scalar_lea.vmem %s5, %s476
      %p478 = pneg %p190
      %p479 = pneg %p187
      %p480 = pneg %p211
      %p481 = pneg %p208
      %p482 = pneg %p232
      %p483 = pneg %p229
      %p484 = pneg %p253
      %p485 = pneg %p250
      %p486 = pneg %p279
      %p487 = pneg %p276
      %s488 = smul.u32 4, %s23
      %p489 = scmp.lt.s32.totalorder %s488, 7
      %s490 = scalar_select %p489, %s488, 7
      %s491 = smul.addr %s490, 4
      %s492 = scalar_lea.vmem %s9, %s491
      %p493 = pneg %p305
      %p494 = pneg %p302
      %p495 = scmp.lt.s32.totalorder %s23, 1
      %s496 = scalar_select %p495, %s23, 1
      %s497 = smul.addr %s496, 8
      %s498 = scalar_lea.vmem %s10, %s497
      %p499 = pneg %p331
      %p500 = pneg %p328
      %p501 = scmp.lt.s32.totalorder %s23, 1
      %s502 = scalar_select %p501, %s23, 1
      %s503 = smul.addr %s502, 8
      %s504 = scalar_lea.vmem %s11, %s503
      %s505 = ssub.s32 %s23, 1
      %p506 = scmp.gt.s32.totalorder %s505, 0
      %s507 = scalar_select %p506, %s505, 0
      %s508 = smul.u32 4, %s507
      %p509 = scmp.lt.s32.totalorder %s508, 7
      %s510 = scalar_select %p509, %s508, 7
      %s511 = smul.addr %s510, 4
      %s512 = scalar_lea.vmem %s0, %s511
      %s513 = ssub.s32 %s23, 1
      %p514 = scmp.gt.s32.totalorder %s513, 0
      %s515 = scalar_select %p514, %s513, 0
      %s516 = smul.u32 4, %s515
      %s517 = smul.u32 4, %s23
      %p518 = scmp.lt.s32.totalorder %s517, 7
      %s519 = scalar_select %p518, %s517, 7
      %s520 = smul.addr %s519, 4
      %s521 = scalar_lea.vmem %s1, %s520
      %s522 = smul.u32 4, %s23
      %s523 = sadd.s32 %s23, 1
      %p524 = scmp.lt.s32.totalorder %s523, 1
      %s525 = scalar_select %p524, %s523, 1
      %s526 = smul.u32 4, %s525
      %p527 = scmp.lt.s32.totalorder %s526, 7
      %s528 = scalar_select %p527, %s526, 7
      %s529 = smul.addr %s528, 4
      %s530 = scalar_lea.vmem %s2, %s529
      %s531 = sadd.s32 %s23, 1
      %p532 = scmp.lt.s32.totalorder %s531, 1
      %s533 = scalar_select %p532, %s531, 1
      %s534 = smul.u32 4, %s533
      %s535 = smul.u32 4, %s23
      %p536 = scmp.lt.s32.totalorder %s535, 15
      %s537 = scalar_select %p536, %s535, 15
      %s538 = scalar_lea.vmem %s3, %s537
      %s539 = smul.u32 4, %s23
      %s540 = sadd.s32 %s23, 1
      %s541 = smul.u32 4, %s540
      %p542 = scmp.lt.s32.totalorder %s541, 15
      %s543 = scalar_select %p542, %s541, 15
      %s544 = scalar_lea.vmem %s4, %s543
      %s545 = sadd.s32 %s23, 1
      %s546 = smul.u32 4, %s545
      %s547 = sadd.s32 %s23, 2
      %s548 = smul.u32 4, %s547
      %p549 = scmp.lt.s32.totalorder %s548, 15
      %s550 = scalar_select %p549, %s548, 15
      %s551 = scalar_lea.vmem %s5, %s550
      %s552 = sadd.s32 %s23, 2
      %s553 = smul.u32 4, %s552
      %s554 = smul.u32 4, %s23
      %p555 = scmp.lt.s32.totalorder %s554, 7
      %s556 = scalar_select %p555, %s554, 7
      %s557 = smul.addr %s556, 4
      %s558 = scalar_lea.vmem %s9, %s557
      %s559 = smul.u32 4, %s23
      %p560 = scmp.lt.s32.totalorder %s23, 1
      %s561 = scalar_select %p560, %s23, 1
      %s562 = smul.addr %s561, 8
      %s563 = scalar_lea.vmem %s10, %s562
      %p564 = scmp.lt.s32.totalorder %s23, 1
      %s565 = scalar_select %p564, %s23, 1
      %s566 = smul.addr %s565, 8
      %s567 = scalar_lea.vmem %s11, %s566
      %v569 = vld [vmem:[%s512 + $0x8] sm:$0xff]
      %v570 = vld [vmem:[%s521] sm:$0xff]
      %v571 = vld [vmem:[%s521 + $0x8] sm:$0xff]
      %v572 = vld [vmem:[%s530] sm:$0xff]
      %v574 = vunpack.c.h.b16 %v569
      %v575 = vpack.c.b16 %v574, %v574
      %v579 = vunpack.c.l.b16 %v570
      %v580 = vunpack.c.h.b16 %v570
      %v581 = vunpack.c.l.b16 %v571
      %v582 = vunpack.c.h.b16 %v571
      %v583 = vpack.c.b16 %v579, %v579
      %v584 = vpack.c.b16 %v580, %v580
      %v585 = vpack.c.b16 %v581, %v581
      %v586 = vpack.c.b16 %v582, %v582
      %v592 = vunpack.c.l.b16 %v572
      %v593 = vpack.c.b16 %v592, %v592
      %v595 = vunpack.c.l.bf16 %v575
      %v596 = vunpack.c.l.bf16 %v583
      %v597 = vunpack.c.l.bf16 %v584
      %v598 = vunpack.c.l.bf16 %v585
      %v599 = vunpack.c.l.bf16 %v586
      %v600 = vunpack.c.l.bf16 %v593
      %v601 = vld [vmem:[%s538] sm:$0xf]
      %v602 = vld [vmem:[%s544] sm:$0xf]
      %v603 = vld [vmem:[%s551] sm:$0xf]
      %v605 = vlaneseq
      %v606 = vshrl.u32 %v605, 7
      %v607 = vsub.s32 3, %v606
      %v608 = vrot.slane %v601, %v607
      %v611 = vlaneseq
      %v612 = vshrl.u32 %v611, 7
      %v613 = vsub.s32 0, %v612
      %v614 = vrot.slane %v602, %v613
      %v615 = vlaneseq
      %v616 = vshrl.u32 %v615, 7
      %v617 = vsub.s32 1, %v616
      %v618 = vrot.slane %v602, %v617
      %v619 = vlaneseq
      %v620 = vshrl.u32 %v619, 7
      %v621 = vsub.s32 2, %v620
      %v622 = vrot.slane %v602, %v621
      %v623 = vlaneseq
      %v624 = vshrl.u32 %v623, 7
      %v625 = vsub.s32 3, %v624
      %v626 = vrot.slane %v602, %v625
      %v632 = vlaneseq
      %v633 = vshrl.u32 %v632, 7
      %v634 = vsub.s32 0, %v633
      %v635 = vrot.slane %v603, %v634
      %v637 = vld [vmem:[%s6] sm:$0xff]
      %639 = vset.pattern.permute.xlu0 0
      %640 = vperm.xlu0 %639, %v637
      %v641 = vpop.permute.xlu0 %640
      %v643 = vmul.f32 %v595, %v641
      %v644 = vmul.f32 %v596, %v641
      %v645 = vmul.f32 %v597, %v641
      %v646 = vmul.f32 %v598, %v641
      %v647 = vmul.f32 %v599, %v641
      %v648 = vmul.f32 %v600, %v641
      %v649 = vld [vmem:[%s7] sm:$0xff]
      %651 = vset.pattern.permute.xlu0 0
      %652 = vperm.xlu0 %651, %v649
      %v653 = vpop.permute.xlu0 %652
      %v655 = vadd.f32 %v643, %v653
      %v656 = vadd.f32 %v644, %v653
      %v657 = vadd.f32 %v645, %v653
      %v658 = vadd.f32 %v646, %v653
      %v659 = vadd.f32 %v647, %v653
      %v660 = vadd.f32 %v648, %v653
      %v661 = vmax.f32 %v655, 0.0
      %v662 = vmax.f32 %v656, 0.0
      %v663 = vmax.f32 %v657, 0.0
      %v664 = vmax.f32 %v658, 0.0
      %v665 = vmax.f32 %v659, 0.0
      %v666 = vmax.f32 %v660, 0.0
      %v667 = vlaneseq
      %v668 = vshrl.u32 %v667, 7
      %v669 = vsub.s32 0, %v668
      %v670 = vrot.slane %v608, %v669
      %v671 = vlaneseq
      %v672 = vshrl.u32 %v671, 7
      %v673 = vsub.s32 0, %v672
      %v674 = vrot.slane %v614, %v673
      %v675 = vlaneseq
      %v676 = vshrl.u32 %v675, 7
      %v677 = vsub.s32 0, %v676
      %v678 = vrot.slane %v618, %v677
      %v679 = vlaneseq
      %v680 = vshrl.u32 %v679, 7
      %v681 = vsub.s32 0, %v680
      %v682 = vrot.slane %v622, %v681
      %v683 = vlaneseq
      %v684 = vshrl.u32 %v683, 7
      %v685 = vsub.s32 0, %v684
      %v686 = vrot.slane %v626, %v685
      %v687 = vlaneseq
      %v688 = vshrl.u32 %v687, 7
      %v689 = vsub.s32 0, %v688
      %v690 = vrot.slane %v635, %v689
      %v691 = vmul.f32 %v661, %v670
      %v692 = vmul.f32 %v662, %v674
      %v693 = vmul.f32 %v663, %v678
      %v694 = vmul.f32 %v664, %v682
      %v695 = vmul.f32 %v665, %v686
      %v696 = vmul.f32 %v666, %v690
      %v697 = vpack.c.bf16 %v691, %v691
      %v698 = vpack.c.bf16 %v692, %v692
      %v699 = vpack.c.bf16 %v693, %v693
      %v700 = vpack.c.bf16 %v694, %v694
      %v701 = vpack.c.bf16 %v695, %v695
      %v702 = vpack.c.bf16 %v696, %v696
      %v703 = vld [vmem:[%s8] sm:$0xf]
      %s704 = scalar_lea.vmem %s8, 4
      %v705 = vld [vmem:[%s704] sm:$0xf]
      %711 = vrot.lane.b32.xlu0 %v697, 18
      %v712 = vpop.permute.xlu0 %711
      %713 = vrot.lane.b32.xlu0 %v698, 18
      %v714 = vpop.permute.xlu0 %713
      %715 = vrot.lane.b32.xlu0 %v699, 18
      %v716 = vpop.permute.xlu0 %715
      %717 = vrot.lane.b32.xlu0 %v700, 18
      %v718 = vpop.permute.xlu0 %717
      %719 = vrot.lane.b32.xlu0 %v701, 18
      %v720 = vpop.permute.xlu0 %719
      %vm721 = vcmask 146432
      %v722 = vsel %vm721, %v712, %v714
      %v723 = vsel %vm721, %v714, %v716
      %v724 = vsel %vm721, %v716, %v718
      %v725 = vsel %vm721, %v718, %v720
      %vm726 = vcmask 64512
      %v728 = vsel %vm726, %v705, 0
      %vm730 = vcmask 1043456
      %v732 = vsel %vm730, %v722, 0
      %v735 = vsel %vm730, %v723, 0
      %v738 = vsel %vm730, %v724, 0
      %v741 = vsel %vm730, %v725, 0
      %743 = vmatprep.subr.bf16.mxu0 0
      %744 = vmatpush1.bf16.msra.mxu0 0
      %745 = vmatprep.subr.bf16.mxu0 0
      %746 = vmatpush1.bf16.msra.mxu0 0
      %747 = vmatprep.subr.bf16.mxu0 0
      %748 = vmatpush1.bf16.msra.mxu0 0
      %749 = vmatprep.subr.bf16.mxu0 0
      %750 = vmatpush1.bf16.msra.mxu0 0
      %751 = vmatprep.subr.bf16.mxu0 0
      %752 = vmatpush1.bf16.msra.mxu0 0
      %753 = vmatprep.subr.bf16.mxu0 0
      %754 = vmatpush1.bf16.msra.mxu0 0
      %755 = vmatprep.subr.bf16.mxu0 0
      %756 = vmatpush1.bf16.msra.mxu0 0
      %757 = vmatprep.subr.bf16.mxu0 %v735
      %758 = vmatpush1.bf16.msra.mxu0 %v732
      %759 = vmatprep.subr.bf16.mxu0 0
      %760 = vmatpush2.bf16.msra.mxu0 0
      %761 = vmatprep.subr.bf16.mxu0 0
      %762 = vmatpush2.bf16.msra.mxu0 0
      %763 = vmatprep.subr.bf16.mxu0 0
      %764 = vmatpush2.bf16.msra.mxu0 0
      %765 = vmatprep.subr.bf16.mxu0 0
      %766 = vmatpush2.bf16.msra.mxu0 0
      %767 = vmatprep.subr.bf16.mxu0 0
      %768 = vmatpush2.bf16.msra.mxu0 0
      %769 = vmatprep.subr.bf16.mxu0 0
      %770 = vmatpush2.bf16.msra.mxu0 0
      %771 = vmatprep.subr.bf16.mxu0 0
      %772 = vmatpush2.bf16.msra.mxu0 0
      %773 = vmatprep.subr.bf16.mxu0 0
      %774 = vmatpush2.bf16.msra.mxu0 0
      %775 = vmatprep.mubr.bf16.mxu0 0
      %776 = vmatmul.mubr.bf16.gmra.mxu0 %v728
      %v777 = vpop.f32.mrf.mxu0
      %v778 = vadd.f32 0.0, %v777
      %v779 = vpop.f32.mrf.mxu0
      %v780 = vadd.f32 0.0, %v779
      %v781 = vpop.f32.mrf.mxu0
      %v782 = vpop.f32.mrf.mxu0
      %783 = vdwg.mxu0
      %784 = vmatprep.subr.bf16.mxu0 0
      %785 = vmatpush1.bf16.msra.mxu0 0
      %786 = vmatprep.subr.bf16.mxu0 0
      %787 = vmatpush1.bf16.msra.mxu0 0
      %788 = vmatprep.subr.bf16.mxu0 0
      %789 = vmatpush1.bf16.msra.mxu0 0
      %790 = vmatprep.subr.bf16.mxu0 0
      %791 = vmatpush1.bf16.msra.mxu0 0
      %792 = vmatprep.subr.bf16.mxu0 0
      %793 = vmatpush1.bf16.msra.mxu0 0
      %794 = vmatprep.subr.bf16.mxu0 0
      %795 = vmatpush1.bf16.msra.mxu0 0
      %796 = vmatprep.subr.bf16.mxu0 0
      %797 = vmatpush1.bf16.msra.mxu0 0
      %798 = vmatprep.subr.bf16.mxu0 %v741
      %799 = vmatpush1.bf16.msra.mxu0 %v738
      %800 = vmatprep.subr.bf16.mxu0 0
      %801 = vmatpush2.bf16.msra.mxu0 0
      %802 = vmatprep.subr.bf16.mxu0 0
      %803 = vmatpush2.bf16.msra.mxu0 0
      %804 = vmatprep.subr.bf16.mxu0 0
      %805 = vmatpush2.bf16.msra.mxu0 0
      %806 = vmatprep.subr.bf16.mxu0 0
      %807 = vmatpush2.bf16.msra.mxu0 0
      %808 = vmatprep.subr.bf16.mxu0 0
      %809 = vmatpush2.bf16.msra.mxu0 0
      %810 = vmatprep.subr.bf16.mxu0 0
      %811 = vmatpush2.bf16.msra.mxu0 0
      %812 = vmatprep.subr.bf16.mxu0 0
      %813 = vmatpush2.bf16.msra.mxu0 0
      %814 = vmatprep.subr.bf16.mxu0 0
      %815 = vmatpush2.bf16.msra.mxu0 0
      %816 = vmatprep.mubr.bf16.mxu0 0
      %817 = vmatmul.mubr.bf16.gmra.mxu0 %v728
      %v818 = vpop.f32.mrf.mxu0
      %v819 = vadd.f32 0.0, %v818
      %v820 = vpop.f32.mrf.mxu0
      %v821 = vadd.f32 0.0, %v820
      %v822 = vpop.f32.mrf.mxu0
      %v823 = vpop.f32.mrf.mxu0
      %824 = vdwg.mxu0
      %825 = vrot.lane.b32.xlu0 %v697, 19
      %v826 = vpop.permute.xlu0 %825
      %827 = vrot.lane.b32.xlu0 %v698, 19
      %v828 = vpop.permute.xlu0 %827
      %829 = vrot.lane.b32.xlu0 %v699, 19
      %v830 = vpop.permute.xlu0 %829
      %831 = vrot.lane.b32.xlu0 %v700, 19
      %v832 = vpop.permute.xlu0 %831
      %833 = vrot.lane.b32.xlu0 %v701, 19
      %v834 = vpop.permute.xlu0 %833
      %vm835 = vcmask 154624
      %v836 = vsel %vm835, %v826, %v828
      %v837 = vsel %vm835, %v828, %v830
      %v838 = vsel %vm835, %v830, %v832
      %v839 = vsel %vm835, %v832, %v834
      %v841 = vsel %vm726, %v703, 0
      %v844 = vsel %vm730, %v836, 0
      %v847 = vsel %vm730, %v837, 0
      %v850 = vsel %vm730, %v838, 0
      %v853 = vsel %vm730, %v839, 0
      %855 = vmatprep.subr.bf16.mxu0 0
      %856 = vmatpush1.bf16.msra.mxu0 0
      %857 = vmatprep.subr.bf16.mxu0 0
      %858 = vmatpush1.bf16.msra.mxu0 0
      %859 = vmatprep.subr.bf16.mxu0 0
      %860 = vmatpush1.bf16.msra.mxu0 0
      %861 = vmatprep.subr.bf16.mxu0 0
      %862 = vmatpush1.bf16.msra.mxu0 0
      %863 = vmatprep.subr.bf16.mxu0 0
      %864 = vmatpush1.bf16.msra.mxu0 0
      %865 = vmatprep.subr.bf16.mxu0 0
      %866 = vmatpush1.bf16.msra.mxu0 0
      %867 = vmatprep.subr.bf16.mxu0 0
      %868 = vmatpush1.bf16.msra.mxu0 0
      %869 = vmatprep.subr.bf16.mxu0 %v847
      %870 = vmatpush1.bf16.msra.mxu0 %v844
      %871 = vmatprep.subr.bf16.mxu0 0
      %872 = vmatpush2.bf16.msra.mxu0 0
      %873 = vmatprep.subr.bf16.mxu0 0
      %874 = vmatpush2.bf16.msra.mxu0 0
      %875 = vmatprep.subr.bf16.mxu0 0
      %876 = vmatpush2.bf16.msra.mxu0 0
      %877 = vmatprep.subr.bf16.mxu0 0
      %878 = vmatpush2.bf16.msra.mxu0 0
      %879 = vmatprep.subr.bf16.mxu0 0
      %880 = vmatpush2.bf16.msra.mxu0 0
      %881 = vmatprep.subr.bf16.mxu0 0
      %882 = vmatpush2.bf16.msra.mxu0 0
      %883 = vmatprep.subr.bf16.mxu0 0
      %884 = vmatpush2.bf16.msra.mxu0 0
      %885 = vmatprep.subr.bf16.mxu0 0
      %886 = vmatpush2.bf16.msra.mxu0 0
      %887 = vmatprep.mubr.bf16.mxu0 0
      %888 = vmatmul.mubr.bf16.gmra.mxu0 %v841
      %v889 = vpop.f32.mrf.mxu0
      %v890 = vadd.f32 %v778, %v889
      %v891 = vpop.f32.mrf.mxu0
      %v892 = vadd.f32 %v780, %v891
      %v893 = vpop.f32.mrf.mxu0
      %v894 = vpop.f32.mrf.mxu0
      %895 = vdwg.mxu0
      %896 = vmatprep.subr.bf16.mxu0 0
      %897 = vmatpush1.bf16.msra.mxu0 0
      %898 = vmatprep.subr.bf16.mxu0 0
      %899 = vmatpush1.bf16.msra.mxu0 0
      %900 = vmatprep.subr.bf16.mxu0 0
      %901 = vmatpush1.bf16.msra.mxu0 0
      %902 = vmatprep.subr.bf16.mxu0 0
      %903 = vmatpush1.bf16.msra.mxu0 0
      %904 = vmatprep.subr.bf16.mxu0 0
      %905 = vmatpush1.bf16.msra.mxu0 0
      %906 = vmatprep.subr.bf16.mxu0 0
      %907 = vmatpush1.bf16.msra.mxu0 0
      %908 = vmatprep.subr.bf16.mxu0 0
      %909 = vmatpush1.bf16.msra.mxu0 0
      %910 = vmatprep.subr.bf16.mxu0 %v853
      %911 = vmatpush1.bf16.msra.mxu0 %v850
      %912 = vmatprep.subr.bf16.mxu0 0
      %913 = vmatpush2.bf16.msra.mxu0 0
      %914 = vmatprep.subr.bf16.mxu0 0
      %915 = vmatpush2.bf16.msra.mxu0 0
      %916 = vmatprep.subr.bf16.mxu0 0
      %917 = vmatpush2.bf16.msra.mxu0 0
      %918 = vmatprep.subr.bf16.mxu0 0
      %919 = vmatpush2.bf16.msra.mxu0 0
      %920 = vmatprep.subr.bf16.mxu0 0
      %921 = vmatpush2.bf16.msra.mxu0 0
      %922 = vmatprep.subr.bf16.mxu0 0
      %923 = vmatpush2.bf16.msra.mxu0 0
      %924 = vmatprep.subr.bf16.mxu0 0
      %925 = vmatpush2.bf16.msra.mxu0 0
      %926 = vmatprep.subr.bf16.mxu0 0
      %927 = vmatpush2.bf16.msra.mxu0 0
      %928 = vmatprep.mubr.bf16.mxu0 0
      %929 = vmatmul.mubr.bf16.gmra.mxu0 %v841
      %v930 = vpop.f32.mrf.mxu0
      %v931 = vadd.f32 %v819, %v930
      %v932 = vpop.f32.mrf.mxu0
      %v933 = vadd.f32 %v821, %v932
      %v934 = vpop.f32.mrf.mxu0
      %v935 = vpop.f32.mrf.mxu0
      %936 = vdwg.mxu0
      %s937 = scalar_lea.vmem %s8, 8
      %v938 = vld [vmem:[%s937] sm:$0xf]
      %939 = vrot.lane.b32.xlu0 %v697, 17
      %v940 = vpop.permute.xlu0 %939
      %941 = vrot.lane.b32.xlu0 %v698, 17
      %v942 = vpop.permute.xlu0 %941
      %943 = vrot.lane.b32.xlu0 %v699, 17
      %v944 = vpop.permute.xlu0 %943
      %945 = vrot.lane.b32.xlu0 %v700, 17
      %v946 = vpop.permute.xlu0 %945
      %947 = vrot.lane.b32.xlu0 %v701, 17
      %v948 = vpop.permute.xlu0 %947
      %vm949 = vcmask 138240
      %v950 = vsel %vm949, %v940, %v942
      %v951 = vsel %vm949, %v942, %v944
      %v952 = vsel %vm949, %v944, %v946
      %v953 = vsel %vm949, %v946, %v948
      %v955 = vsel %vm726, %v938, 0
      %v958 = vsel %vm730, %v950, 0
      %v961 = vsel %vm730, %v951, 0
      %v964 = vsel %vm730, %v952, 0
      %v967 = vsel %vm730, %v953, 0
      %969 = vmatprep.subr.bf16.mxu0 0
      %970 = vmatpush1.bf16.msra.mxu0 0
      %971 = vmatprep.subr.bf16.mxu0 0
      %972 = vmatpush1.bf16.msra.mxu0 0
      %973 = vmatprep.subr.bf16.mxu0 0
      %974 = vmatpush1.bf16.msra.mxu0 0
      %975 = vmatprep.subr.bf16.mxu0 0
      %976 = vmatpush1.bf16.msra.mxu0 0
      %977 = vmatprep.subr.bf16.mxu0 0
      %978 = vmatpush1.bf16.msra.mxu0 0
      %979 = vmatprep.subr.bf16.mxu0 0
      %980 = vmatpush1.bf16.msra.mxu0 0
      %981 = vmatprep.subr.bf16.mxu0 0
      %982 = vmatpush1.bf16.msra.mxu0 0
      %983 = vmatprep.subr.bf16.mxu0 %v961
      %984 = vmatpush1.bf16.msra.mxu0 %v958
      %985 = vmatprep.subr.bf16.mxu0 0
      %986 = vmatpush2.bf16.msra.mxu0 0
      %987 = vmatprep.subr.bf16.mxu0 0
      %988 = vmatpush2.bf16.msra.mxu0 0
      %989 = vmatprep.subr.bf16.mxu0 0
      %990 = vmatpush2.bf16.msra.mxu0 0
      %991 = vmatprep.subr.bf16.mxu0 0
      %992 = vmatpush2.bf16.msra.mxu0 0
      %993 = vmatprep.subr.bf16.mxu0 0
      %994 = vmatpush2.bf16.msra.mxu0 0
      %995 = vmatprep.subr.bf16.mxu0 0
      %996 = vmatpush2.bf16.msra.mxu0 0
      %997 = vmatprep.subr.bf16.mxu0 0
      %998 = vmatpush2.bf16.msra.mxu0 0
      %999 = vmatprep.subr.bf16.mxu0 0
      %1000 = vmatpush2.bf16.msra.mxu0 0
      %1001 = vmatprep.mubr.bf16.mxu0 0
      %1002 = vmatmul.mubr.bf16.gmra.mxu0 %v955
      %v1003 = vpop.f32.mrf.mxu0
      %v1004 = vadd.f32 0.0, %v1003
      %v1005 = vpop.f32.mrf.mxu0
      %v1006 = vadd.f32 0.0, %v1005
      %v1007 = vpop.f32.mrf.mxu0
      %v1008 = vpop.f32.mrf.mxu0
      %1009 = vdwg.mxu0
      %1010 = vmatprep.subr.bf16.mxu0 0
      %1011 = vmatpush1.bf16.msra.mxu0 0
      %1012 = vmatprep.subr.bf16.mxu0 0
      %1013 = vmatpush1.bf16.msra.mxu0 0
      %1014 = vmatprep.subr.bf16.mxu0 0
      %1015 = vmatpush1.bf16.msra.mxu0 0
      %1016 = vmatprep.subr.bf16.mxu0 0
      %1017 = vmatpush1.bf16.msra.mxu0 0
      %1018 = vmatprep.subr.bf16.mxu0 0
      %1019 = vmatpush1.bf16.msra.mxu0 0
      %1020 = vmatprep.subr.bf16.mxu0 0
      %1021 = vmatpush1.bf16.msra.mxu0 0
      %1022 = vmatprep.subr.bf16.mxu0 0
      %1023 = vmatpush1.bf16.msra.mxu0 0
      %1024 = vmatprep.subr.bf16.mxu0 %v967
      %1025 = vmatpush1.bf16.msra.mxu0 %v964
      %1026 = vmatprep.subr.bf16.mxu0 0
      %1027 = vmatpush2.bf16.msra.mxu0 0
      %1028 = vmatprep.subr.bf16.mxu0 0
      %1029 = vmatpush2.bf16.msra.mxu0 0
      %1030 = vmatprep.subr.bf16.mxu0 0
      %1031 = vmatpush2.bf16.msra.mxu0 0
      %1032 = vmatprep.subr.bf16.mxu0 0
      %1033 = vmatpush2.bf16.msra.mxu0 0
      %1034 = vmatprep.subr.bf16.mxu0 0
      %1035 = vmatpush2.bf16.msra.mxu0 0
      %1036 = vmatprep.subr.bf16.mxu0 0
      %1037 = vmatpush2.bf16.msra.mxu0 0
      %1038 = vmatprep.subr.bf16.mxu0 0
      %1039 = vmatpush2.bf16.msra.mxu0 0
      %1040 = vmatprep.subr.bf16.mxu0 0
      %1041 = vmatpush2.bf16.msra.mxu0 0
      %1042 = vmatprep.mubr.bf16.mxu0 0
      %1043 = vmatmul.mubr.bf16.gmra.mxu0 %v955
      %v1044 = vpop.f32.mrf.mxu0
      %v1045 = vadd.f32 0.0, %v1044
      %v1046 = vpop.f32.mrf.mxu0
      %v1047 = vadd.f32 0.0, %v1046
      %v1048 = vpop.f32.mrf.mxu0
      %v1049 = vpop.f32.mrf.mxu0
      %1050 = vdwg.mxu0
      %v1051 = vadd.f32 %v890, %v1004
      %v1052 = vadd.f32 %v892, %v1006
      %v1053 = vadd.f32 %v931, %v1045
      %v1054 = vadd.f32 %v933, %v1047
      %s1055 = scalar_lea.vmem %s8, 12
      %v1056 = vld [vmem:[%s1055] sm:$0xf]
      %1057 = vrot.lane.b32.xlu0 %v697, 1
      %v1058 = vpop.permute.xlu0 %1057
      %1059 = vrot.lane.b32.xlu0 %v698, 1
      %v1060 = vpop.permute.xlu0 %1059
      %1061 = vrot.lane.b32.xlu0 %v699, 1
      %v1062 = vpop.permute.xlu0 %1061
      %1063 = vrot.lane.b32.xlu0 %v700, 1
      %v1064 = vpop.permute.xlu0 %1063
      %1065 = vrot.lane.b32.xlu0 %v701, 1
      %v1066 = vpop.permute.xlu0 %1065
      %vm1067 = vcmask 7168
      %v1068 = vsel %vm1067, %v1058, %v1060
      %v1069 = vsel %vm1067, %v1060, %v1062
      %v1070 = vsel %vm1067, %v1062, %v1064
      %v1071 = vsel %vm1067, %v1064, %v1066
      %v1073 = vsel %vm726, %v1056, 0
      %v1076 = vsel %vm730, %v1068, 0
      %v1079 = vsel %vm730, %v1069, 0
      %v1082 = vsel %vm730, %v1070, 0
      %v1085 = vsel %vm730, %v1071, 0
      %1087 = vmatprep.subr.bf16.mxu0 0
      %1088 = vmatpush1.bf16.msra.mxu0 0
      %1089 = vmatprep.subr.bf16.mxu0 0
      %1090 = vmatpush1.bf16.msra.mxu0 0
      %1091 = vmatprep.subr.bf16.mxu0 0
      %1092 = vmatpush1.bf16.msra.mxu0 0
      %1093 = vmatprep.subr.bf16.mxu0 0
      %1094 = vmatpush1.bf16.msra.mxu0 0
      %1095 = vmatprep.subr.bf16.mxu0 0
      %1096 = vmatpush1.bf16.msra.mxu0 0
      %1097 = vmatprep.subr.bf16.mxu0 0
      %1098 = vmatpush1.bf16.msra.mxu0 0
      %1099 = vmatprep.subr.bf16.mxu0 0
      %1100 = vmatpush1.bf16.msra.mxu0 0
      %1101 = vmatprep.subr.bf16.mxu0 %v1079
      %1102 = vmatpush1.bf16.msra.mxu0 %v1076
      %1103 = vmatprep.subr.bf16.mxu0 0
      %1104 = vmatpush2.bf16.msra.mxu0 0
      %1105 = vmatprep.subr.bf16.mxu0 0
      %1106 = vmatpush2.bf16.msra.mxu0 0
      %1107 = vmatprep.subr.bf16.mxu0 0
      %1108 = vmatpush2.bf16.msra.mxu0 0
      %1109 = vmatprep.subr.bf16.mxu0 0
      %1110 = vmatpush2.bf16.msra.mxu0 0
      %1111 = vmatprep.subr.bf16.mxu0 0
      %1112 = vmatpush2.bf16.msra.mxu0 0
      %1113 = vmatprep.subr.bf16.mxu0 0
      %1114 = vmatpush2.bf16.msra.mxu0 0
      %1115 = vmatprep.subr.bf16.mxu0 0
      %1116 = vmatpush2.bf16.msra.mxu0 0
      %1117 = vmatprep.subr.bf16.mxu0 0
      %1118 = vmatpush2.bf16.msra.mxu0 0
      %1119 = vmatprep.mubr.bf16.mxu0 0
      %1120 = vmatmul.mubr.bf16.gmra.mxu0 %v1073
      %v1121 = vpop.f32.mrf.mxu0
      %v1122 = vadd.f32 0.0, %v1121
      %v1123 = vpop.f32.mrf.mxu0
      %v1124 = vadd.f32 0.0, %v1123
      %v1125 = vpop.f32.mrf.mxu0
      %v1126 = vpop.f32.mrf.mxu0
      %1127 = vdwg.mxu0
      %1128 = vmatprep.subr.bf16.mxu0 0
      %1129 = vmatpush1.bf16.msra.mxu0 0
      %1130 = vmatprep.subr.bf16.mxu0 0
      %1131 = vmatpush1.bf16.msra.mxu0 0
      %1132 = vmatprep.subr.bf16.mxu0 0
      %1133 = vmatpush1.bf16.msra.mxu0 0
      %1134 = vmatprep.subr.bf16.mxu0 0
      %1135 = vmatpush1.bf16.msra.mxu0 0
      %1136 = vmatprep.subr.bf16.mxu0 0
      %1137 = vmatpush1.bf16.msra.mxu0 0
      %1138 = vmatprep.subr.bf16.mxu0 0
      %1139 = vmatpush1.bf16.msra.mxu0 0
      %1140 = vmatprep.subr.bf16.mxu0 0
      %1141 = vmatpush1.bf16.msra.mxu0 0
      %1142 = vmatprep.subr.bf16.mxu0 %v1085
      %1143 = vmatpush1.bf16.msra.mxu0 %v1082
      %1144 = vmatprep.subr.bf16.mxu0 0
      %1145 = vmatpush2.bf16.msra.mxu0 0
      %1146 = vmatprep.subr.bf16.mxu0 0
      %1147 = vmatpush2.bf16.msra.mxu0 0
      %1148 = vmatprep.subr.bf16.mxu0 0
      %1149 = vmatpush2.bf16.msra.mxu0 0
      %1150 = vmatprep.subr.bf16.mxu0 0
      %1151 = vmatpush2.bf16.msra.mxu0 0
      %1152 = vmatprep.subr.bf16.mxu0 0
      %1153 = vmatpush2.bf16.msra.mxu0 0
      %1154 = vmatprep.subr.bf16.mxu0 0
      %1155 = vmatpush2.bf16.msra.mxu0 0
      %1156 = vmatprep.subr.bf16.mxu0 0
      %1157 = vmatpush2.bf16.msra.mxu0 0
      %1158 = vmatprep.subr.bf16.mxu0 0
      %1159 = vmatpush2.bf16.msra.mxu0 0
      %1160 = vmatprep.mubr.bf16.mxu0 0
      %1161 = vmatmul.mubr.bf16.gmra.mxu0 %v1073
      %v1162 = vpop.f32.mrf.mxu0
      %v1163 = vadd.f32 0.0, %v1162
      %v1164 = vpop.f32.mrf.mxu0
      %v1165 = vadd.f32 0.0, %v1164
      %v1166 = vpop.f32.mrf.mxu0
      %v1167 = vpop.f32.mrf.mxu0
      %1168 = vdwg.mxu0
      %v1169 = vadd.f32 %v1051, %v1122
      %v1170 = vadd.f32 %v1052, %v1124
      %v1171 = vadd.f32 %v1053, %v1163
      %v1172 = vadd.f32 %v1054, %v1165
      %s1173 = scalar_lea.vmem %s8, 16
      %v1174 = vld [vmem:[%s1173] sm:$0xf]
      %v1176 = vsel %vm726, %v1174, 0
      %v1179 = vsel %vm730, %v698, 0
      %v1182 = vsel %vm730, %v699, 0
      %v1185 = vsel %vm730, %v700, 0
      %v1188 = vsel %vm730, %v701, 0
      %1190 = vmatprep.subr.bf16.mxu0 0
      %1191 = vmatpush1.bf16.msra.mxu0 0
      %1192 = vmatprep.subr.bf16.mxu0 0
      %1193 = vmatpush1.bf16.msra.mxu0 0
      %1194 = vmatprep.subr.bf16.mxu0 0
      %1195 = vmatpush1.bf16.msra.mxu0 0
      %1196 = vmatprep.subr.bf16.mxu0 0
      %1197 = vmatpush1.bf16.msra.mxu0 0
      %1198 = vmatprep.subr.bf16.mxu0 0
      %1199 = vmatpush1.bf16.msra.mxu0 0
      %1200 = vmatprep.subr.bf16.mxu0 0
      %1201 = vmatpush1.bf16.msra.mxu0 0
      %1202 = vmatprep.subr.bf16.mxu0 0
      %1203 = vmatpush1.bf16.msra.mxu0 0
      %1204 = vmatprep.subr.bf16.mxu0 %v1182
      %1205 = vmatpush1.bf16.msra.mxu0 %v1179
      %1206 = vmatprep.subr.bf16.mxu0 0
      %1207 = vmatpush2.bf16.msra.mxu0 0
      %1208 = vmatprep.subr.bf16.mxu0 0
      %1209 = vmatpush2.bf16.msra.mxu0 0
      %1210 = vmatprep.subr.bf16.mxu0 0
      %1211 = vmatpush2.bf16.msra.mxu0 0
      %1212 = vmatprep.subr.bf16.mxu0 0
      %1213 = vmatpush2.bf16.msra.mxu0 0
      %1214 = vmatprep.subr.bf16.mxu0 0
      %1215 = vmatpush2.bf16.msra.mxu0 0
      %1216 = vmatprep.subr.bf16.mxu0 0
      %1217 = vmatpush2.bf16.msra.mxu0 0
      %1218 = vmatprep.subr.bf16.mxu0 0
      %1219 = vmatpush2.bf16.msra.mxu0 0
      %1220 = vmatprep.subr.bf16.mxu0 0
      %1221 = vmatpush2.bf16.msra.mxu0 0
      %1222 = vmatprep.mubr.bf16.mxu0 0
      %1223 = vmatmul.mubr.bf16.gmra.mxu0 %v1176
      %v1224 = vpop.f32.mrf.mxu0
      %v1225 = vadd.f32 0.0, %v1224
      %v1226 = vpop.f32.mrf.mxu0
      %v1227 = vadd.f32 0.0, %v1226
      %v1228 = vpop.f32.mrf.mxu0
      %v1229 = vpop.f32.mrf.mxu0
      %1230 = vdwg.mxu0
      %1231 = vmatprep.subr.bf16.mxu0 0
      %1232 = vmatpush1.bf16.msra.mxu0 0
      %1233 = vmatprep.subr.bf16.mxu0 0
      %1234 = vmatpush1.bf16.msra.mxu0 0
      %1235 = vmatprep.subr.bf16.mxu0 0
      %1236 = vmatpush1.bf16.msra.mxu0 0
      %1237 = vmatprep.subr.bf16.mxu0 0
      %1238 = vmatpush1.bf16.msra.mxu0 0
      %1239 = vmatprep.subr.bf16.mxu0 0
      %1240 = vmatpush1.bf16.msra.mxu0 0
      %1241 = vmatprep.subr.bf16.mxu0 0
      %1242 = vmatpush1.bf16.msra.mxu0 0
      %1243 = vmatprep.subr.bf16.mxu0 0
      %1244 = vmatpush1.bf16.msra.mxu0 0
      %1245 = vmatprep.subr.bf16.mxu0 %v1188
      %1246 = vmatpush1.bf16.msra.mxu0 %v1185
      %1247 = vmatprep.subr.bf16.mxu0 0
      %1248 = vmatpush2.bf16.msra.mxu0 0
      %1249 = vmatprep.subr.bf16.mxu0 0
      %1250 = vmatpush2.bf16.msra.mxu0 0
      %1251 = vmatprep.subr.bf16.mxu0 0
      %1252 = vmatpush2.bf16.msra.mxu0 0
      %1253 = vmatprep.subr.bf16.mxu0 0
      %1254 = vmatpush2.bf16.msra.mxu0 0
      %1255 = vmatprep.subr.bf16.mxu0 0
      %1256 = vmatpush2.bf16.msra.mxu0 0
      %1257 = vmatprep.subr.bf16.mxu0 0
      %1258 = vmatpush2.bf16.msra.mxu0 0
      %1259 = vmatprep.subr.bf16.mxu0 0
      %1260 = vmatpush2.bf16.msra.mxu0 0
      %1261 = vmatprep.subr.bf16.mxu0 0
      %1262 = vmatpush2.bf16.msra.mxu0 0
      %1263 = vmatprep.mubr.bf16.mxu0 0
      %1264 = vmatmul.mubr.bf16.gmra.mxu0 %v1176
      %v1265 = vpop.f32.mrf.mxu0
      %v1266 = vadd.f32 0.0, %v1265
      %v1267 = vpop.f32.mrf.mxu0
      %v1268 = vadd.f32 0.0, %v1267
      %v1269 = vpop.f32.mrf.mxu0
      %v1270 = vpop.f32.mrf.mxu0
      %1271 = vdwg.mxu0
      %v1272 = vadd.f32 %v1169, %v1225
      %v1273 = vadd.f32 %v1170, %v1227
      %v1274 = vadd.f32 %v1171, %v1266
      %v1275 = vadd.f32 %v1172, %v1268
      %s1276 = scalar_lea.vmem %s8, 20
      %v1277 = vld [vmem:[%s1276] sm:$0xf]
      %1279 = vrot.lane.b32.xlu0 %v698, 127
      %v1280 = vpop.permute.xlu0 %1279
      %1281 = vrot.lane.b32.xlu0 %v699, 127
      %v1282 = vpop.permute.xlu0 %1281
      %1283 = vrot.lane.b32.xlu0 %v700, 127
      %v1284 = vpop.permute.xlu0 %1283
      %1285 = vrot.lane.b32.xlu0 %v701, 127
      %v1286 = vpop.permute.xlu0 %1285
      %1287 = vrot.lane.b32.xlu0 %v702, 127
      %v1288 = vpop.permute.xlu0 %1287
      %vm1289 = vcmask 1039360
      %v1290 = vsel %vm1289, %v1280, %v1282
      %v1291 = vsel %vm1289, %v1282, %v1284
      %v1292 = vsel %vm1289, %v1284, %v1286
      %v1293 = vsel %vm1289, %v1286, %v1288
      %v1295 = vsel %vm726, %v1277, 0
      %v1298 = vsel %vm730, %v1290, 0
      %v1301 = vsel %vm730, %v1291, 0
      %v1304 = vsel %vm730, %v1292, 0
      %v1307 = vsel %vm730, %v1293, 0
      %1309 = vmatprep.subr.bf16.mxu0 0
      %1310 = vmatpush1.bf16.msra.mxu0 0
      %1311 = vmatprep.subr.bf16.mxu0 0
      %1312 = vmatpush1.bf16.msra.mxu0 0
      %1313 = vmatprep.subr.bf16.mxu0 0
      %1314 = vmatpush1.bf16.msra.mxu0 0
      %1315 = vmatprep.subr.bf16.mxu0 0
      %1316 = vmatpush1.bf16.msra.mxu0 0
      %1317 = vmatprep.subr.bf16.mxu0 0
      %1318 = vmatpush1.bf16.msra.mxu0 0
      %1319 = vmatprep.subr.bf16.mxu0 0
      %1320 = vmatpush1.bf16.msra.mxu0 0
      %1321 = vmatprep.subr.bf16.mxu0 0
      %1322 = vmatpush1.bf16.msra.mxu0 0
      %1323 = vmatprep.subr.bf16.mxu0 %v1301
      %1324 = vmatpush1.bf16.msra.mxu0 %v1298
      %1325 = vmatprep.subr.bf16.mxu0 0
      %1326 = vmatpush2.bf16.msra.mxu0 0
      %1327 = vmatprep.subr.bf16.mxu0 0
      %1328 = vmatpush2.bf16.msra.mxu0 0
      %1329 = vmatprep.subr.bf16.mxu0 0
      %1330 = vmatpush2.bf16.msra.mxu0 0
      %1331 = vmatprep.subr.bf16.mxu0 0
      %1332 = vmatpush2.bf16.msra.mxu0 0
      %1333 = vmatprep.subr.bf16.mxu0 0
      %1334 = vmatpush2.bf16.msra.mxu0 0
      %1335 = vmatprep.subr.bf16.mxu0 0
      %1336 = vmatpush2.bf16.msra.mxu0 0
      %1337 = vmatprep.subr.bf16.mxu0 0
      %1338 = vmatpush2.bf16.msra.mxu0 0
      %1339 = vmatprep.subr.bf16.mxu0 0
      %1340 = vmatpush2.bf16.msra.mxu0 0
      %1341 = vmatprep.mubr.bf16.mxu0 0
      %1342 = vmatmul.mubr.bf16.gmra.mxu0 %v1295
      %v1343 = vpop.f32.mrf.mxu0
      %v1344 = vadd.f32 0.0, %v1343
      %v1345 = vpop.f32.mrf.mxu0
      %v1346 = vadd.f32 0.0, %v1345
      %v1347 = vpop.f32.mrf.mxu0
      %v1348 = vpop.f32.mrf.mxu0
      %1349 = vdwg.mxu0
      %1350 = vmatprep.subr.bf16.mxu0 0
      %1351 = vmatpush1.bf16.msra.mxu0 0
      %1352 = vmatprep.subr.bf16.mxu0 0
      %1353 = vmatpush1.bf16.msra.mxu0 0
      %1354 = vmatprep.subr.bf16.mxu0 0
      %1355 = vmatpush1.bf16.msra.mxu0 0
      %1356 = vmatprep.subr.bf16.mxu0 0
      %1357 = vmatpush1.bf16.msra.mxu0 0
      %1358 = vmatprep.subr.bf16.mxu0 0
      %1359 = vmatpush1.bf16.msra.mxu0 0
      %1360 = vmatprep.subr.bf16.mxu0 0
      %1361 = vmatpush1.bf16.msra.mxu0 0
      %1362 = vmatprep.subr.bf16.mxu0 0
      %1363 = vmatpush1.bf16.msra.mxu0 0
      %1364 = vmatprep.subr.bf16.mxu0 %v1307
      %1365 = vmatpush1.bf16.msra.mxu0 %v1304
      %1366 = vmatprep.subr.bf16.mxu0 0
      %1367 = vmatpush2.bf16.msra.mxu0 0
      %1368 = vmatprep.subr.bf16.mxu0 0
      %1369 = vmatpush2.bf16.msra.mxu0 0
      %1370 = vmatprep.subr.bf16.mxu0 0
      %1371 = vmatpush2.bf16.msra.mxu0 0
      %1372 = vmatprep.subr.bf16.mxu0 0
      %1373 = vmatpush2.bf16.msra.mxu0 0
      %1374 = vmatprep.subr.bf16.mxu0 0
      %1375 = vmatpush2.bf16.msra.mxu0 0
      %1376 = vmatprep.subr.bf16.mxu0 0
      %1377 = vmatpush2.bf16.msra.mxu0 0
      %1378 = vmatprep.subr.bf16.mxu0 0
      %1379 = vmatpush2.bf16.msra.mxu0 0
      %1380 = vmatprep.subr.bf16.mxu0 0
      %1381 = vmatpush2.bf16.msra.mxu0 0
      %1382 = vmatprep.mubr.bf16.mxu0 0
      %1383 = vmatmul.mubr.bf16.gmra.mxu0 %v1295
      %v1384 = vpop.f32.mrf.mxu0
      %v1385 = vadd.f32 0.0, %v1384
      %v1386 = vpop.f32.mrf.mxu0
      %v1387 = vadd.f32 0.0, %v1386
      %v1388 = vpop.f32.mrf.mxu0
      %v1389 = vpop.f32.mrf.mxu0
      %1390 = vdwg.mxu0
      %v1391 = vadd.f32 %v1272, %v1344
      %v1392 = vadd.f32 %v1273, %v1346
      %v1393 = vadd.f32 %v1274, %v1385
      %v1394 = vadd.f32 %v1275, %v1387
      %s1395 = scalar_lea.vmem %s8, 24
      %v1396 = vld [vmem:[%s1395] sm:$0xf]
      %1397 = vrot.lane.b32.xlu0 %v698, 111
      %v1398 = vpop.permute.xlu0 %1397
      %1399 = vrot.lane.b32.xlu0 %v699, 111
      %v1400 = vpop.permute.xlu0 %1399
      %1401 = vrot.lane.b32.xlu0 %v700, 111
      %v1402 = vpop.permute.xlu0 %1401
      %1403 = vrot.lane.b32.xlu0 %v701, 111
      %v1404 = vpop.permute.xlu0 %1403
      %1405 = vrot.lane.b32.xlu0 %v702, 111
      %v1406 = vpop.permute.xlu0 %1405
      %vm1407 = vcmask 908288
      %v1408 = vsel %vm1407, %v1398, %v1400
      %v1409 = vsel %vm1407, %v1400, %v1402
      %v1410 = vsel %vm1407, %v1402, %v1404
      %v1411 = vsel %vm1407, %v1404, %v1406
      %v1413 = vsel %vm726, %v1396, 0
      %v1416 = vsel %vm730, %v1408, 0
      %v1419 = vsel %vm730, %v1409, 0
      %v1422 = vsel %vm730, %v1410, 0
      %v1425 = vsel %vm730, %v1411, 0
      %1427 = vmatprep.subr.bf16.mxu0 0
      %1428 = vmatpush1.bf16.msra.mxu0 0
      %1429 = vmatprep.subr.bf16.mxu0 0
      %1430 = vmatpush1.bf16.msra.mxu0 0
      %1431 = vmatprep.subr.bf16.mxu0 0
      %1432 = vmatpush1.bf16.msra.mxu0 0
      %1433 = vmatprep.subr.bf16.mxu0 0
      %1434 = vmatpush1.bf16.msra.mxu0 0
      %1435 = vmatprep.subr.bf16.mxu0 0
      %1436 = vmatpush1.bf16.msra.mxu0 0
      %1437 = vmatprep.subr.bf16.mxu0 0
      %1438 = vmatpush1.bf16.msra.mxu0 0
      %1439 = vmatprep.subr.bf16.mxu0 0
      %1440 = vmatpush1.bf16.msra.mxu0 0
      %1441 = vmatprep.subr.bf16.mxu0 %v1419
      %1442 = vmatpush1.bf16.msra.mxu0 %v1416
      %1443 = vmatprep.subr.bf16.mxu0 0
      %1444 = vmatpush2.bf16.msra.mxu0 0
      %1445 = vmatprep.subr.bf16.mxu0 0
      %1446 = vmatpush2.bf16.msra.mxu0 0
      %1447 = vmatprep.subr.bf16.mxu0 0
      %1448 = vmatpush2.bf16.msra.mxu0 0
      %1449 = vmatprep.subr.bf16.mxu0 0
      %1450 = vmatpush2.bf16.msra.mxu0 0
      %1451 = vmatprep.subr.bf16.mxu0 0
      %1452 = vmatpush2.bf16.msra.mxu0 0
      %1453 = vmatprep.subr.bf16.mxu0 0
      %1454 = vmatpush2.bf16.msra.mxu0 0
      %1455 = vmatprep.subr.bf16.mxu0 0
      %1456 = vmatpush2.bf16.msra.mxu0 0
      %1457 = vmatprep.subr.bf16.mxu0 0
      %1458 = vmatpush2.bf16.msra.mxu0 0
      %1459 = vmatprep.mubr.bf16.mxu0 0
      %1460 = vmatmul.mubr.bf16.gmra.mxu0 %v1413
      %v1461 = vpop.f32.mrf.mxu0
      %v1462 = vadd.f32 0.0, %v1461
      %v1463 = vpop.f32.mrf.mxu0
      %v1464 = vadd.f32 0.0, %v1463
      %v1465 = vpop.f32.mrf.mxu0
      %v1466 = vpop.f32.mrf.mxu0
      %1467 = vdwg.mxu0
      %1468 = vmatprep.subr.bf16.mxu0 0
      %1469 = vmatpush1.bf16.msra.mxu0 0
      %1470 = vmatprep.subr.bf16.mxu0 0
      %1471 = vmatpush1.bf16.msra.mxu0 0
      %1472 = vmatprep.subr.bf16.mxu0 0
      %1473 = vmatpush1.bf16.msra.mxu0 0
      %1474 = vmatprep.subr.bf16.mxu0 0
      %1475 = vmatpush1.bf16.msra.mxu0 0
      %1476 = vmatprep.subr.bf16.mxu0 0
      %1477 = vmatpush1.bf16.msra.mxu0 0
      %1478 = vmatprep.subr.bf16.mxu0 0
      %1479 = vmatpush1.bf16.msra.mxu0 0
      %1480 = vmatprep.subr.bf16.mxu0 0
      %1481 = vmatpush1.bf16.msra.mxu0 0
      %1482 = vmatprep.subr.bf16.mxu0 %v1425
      %1483 = vmatpush1.bf16.msra.mxu0 %v1422
      %1484 = vmatprep.subr.bf16.mxu0 0
      %1485 = vmatpush2.bf16.msra.mxu0 0
      %1486 = vmatprep.subr.bf16.mxu0 0
      %1487 = vmatpush2.bf16.msra.mxu0 0
      %1488 = vmatprep.subr.bf16.mxu0 0
      %1489 = vmatpush2.bf16.msra.mxu0 0
      %1490 = vmatprep.subr.bf16.mxu0 0
      %1491 = vmatpush2.bf16.msra.mxu0 0
      %1492 = vmatprep.subr.bf16.mxu0 0
      %1493 = vmatpush2.bf16.msra.mxu0 0
      %1494 = vmatprep.subr.bf16.mxu0 0
      %1495 = vmatpush2.bf16.msra.mxu0 0
      %1496 = vmatprep.subr.bf16.mxu0 0
      %1497 = vmatpush2.bf16.msra.mxu0 0
      %1498 = vmatprep.subr.bf16.mxu0 0
      %1499 = vmatpush2.bf16.msra.mxu0 0
      %1500 = vmatprep.mubr.bf16.mxu0 0
      %1501 = vmatmul.mubr.bf16.gmra.mxu0 %v1413
      %v1502 = vpop.f32.mrf.mxu0
      %v1503 = vadd.f32 0.0, %v1502
      %v1504 = vpop.f32.mrf.mxu0
      %v1505 = vadd.f32 0.0, %v1504
      %v1506 = vpop.f32.mrf.mxu0
      %v1507 = vpop.f32.mrf.mxu0
      %1508 = vdwg.mxu0
      %v1509 = vadd.f32 %v1391, %v1462
      %v1510 = vadd.f32 %v1392, %v1464
      %v1511 = vadd.f32 %v1393, %v1503
      %v1512 = vadd.f32 %v1394, %v1505
      %s1513 = scalar_lea.vmem %s8, 28
      %v1514 = vld [vmem:[%s1513] sm:$0xf]
      %1515 = vrot.lane.b32.xlu0 %v698, 110
      %v1516 = vpop.permute.xlu0 %1515
      %1517 = vrot.lane.b32.xlu0 %v699, 110
      %v1518 = vpop.permute.xlu0 %1517
      %1519 = vrot.lane.b32.xlu0 %v700, 110
      %v1520 = vpop.permute.xlu0 %1519
      %1521 = vrot.lane.b32.xlu0 %v701, 110
      %v1522 = vpop.permute.xlu0 %1521
      %1523 = vrot.lane.b32.xlu0 %v702, 110
      %v1524 = vpop.permute.xlu0 %1523
      %vm1525 = vcmask 900096
      %v1526 = vsel %vm1525, %v1516, %v1518
      %v1527 = vsel %vm1525, %v1518, %v1520
      %v1528 = vsel %vm1525, %v1520, %v1522
      %v1529 = vsel %vm1525, %v1522, %v1524
      %v1531 = vsel %vm726, %v1514, 0
      %v1534 = vsel %vm730, %v1526, 0
      %v1537 = vsel %vm730, %v1527, 0
      %v1540 = vsel %vm730, %v1528, 0
      %v1543 = vsel %vm730, %v1529, 0
      %1545 = vmatprep.subr.bf16.mxu0 0
      %1546 = vmatpush1.bf16.msra.mxu0 0
      %1547 = vmatprep.subr.bf16.mxu0 0
      %1548 = vmatpush1.bf16.msra.mxu0 0
      %1549 = vmatprep.subr.bf16.mxu0 0
      %1550 = vmatpush1.bf16.msra.mxu0 0
      %1551 = vmatprep.subr.bf16.mxu0 0
      %1552 = vmatpush1.bf16.msra.mxu0 0
      %1553 = vmatprep.subr.bf16.mxu0 0
      %1554 = vmatpush1.bf16.msra.mxu0 0
      %1555 = vmatprep.subr.bf16.mxu0 0
      %1556 = vmatpush1.bf16.msra.mxu0 0
      %1557 = vmatprep.subr.bf16.mxu0 0
      %1558 = vmatpush1.bf16.msra.mxu0 0
      %1559 = vmatprep.subr.bf16.mxu0 %v1537
      %1560 = vmatpush1.bf16.msra.mxu0 %v1534
      %1561 = vmatprep.subr.bf16.mxu0 0
      %1562 = vmatpush2.bf16.msra.mxu0 0
      %1563 = vmatprep.subr.bf16.mxu0 0
      %1564 = vmatpush2.bf16.msra.mxu0 0
      %1565 = vmatprep.subr.bf16.mxu0 0
      %1566 = vmatpush2.bf16.msra.mxu0 0
      %1567 = vmatprep.subr.bf16.mxu0 0
      %1568 = vmatpush2.bf16.msra.mxu0 0
      %1569 = vmatprep.subr.bf16.mxu0 0
      %1570 = vmatpush2.bf16.msra.mxu0 0
      %1571 = vmatprep.subr.bf16.mxu0 0
      %1572 = vmatpush2.bf16.msra.mxu0 0
      %1573 = vmatprep.subr.bf16.mxu0 0
      %1574 = vmatpush2.bf16.msra.mxu0 0
      %1575 = vmatprep.subr.bf16.mxu0 0
      %1576 = vmatpush2.bf16.msra.mxu0 0
      %1577 = vmatprep.mubr.bf16.mxu0 0
      %1578 = vmatmul.mubr.bf16.gmra.mxu0 %v1531
      %v1579 = vpop.f32.mrf.mxu0
      %v1580 = vadd.f32 0.0, %v1579
      %v1581 = vpop.f32.mrf.mxu0
      %v1582 = vadd.f32 0.0, %v1581
      %v1583 = vpop.f32.mrf.mxu0
      %v1584 = vpop.f32.mrf.mxu0
      %1585 = vdwg.mxu0
      %1586 = vmatprep.subr.bf16.mxu0 0
      %1587 = vmatpush1.bf16.msra.mxu0 0
      %1588 = vmatprep.subr.bf16.mxu0 0
      %1589 = vmatpush1.bf16.msra.mxu0 0
      %1590 = vmatprep.subr.bf16.mxu0 0
      %1591 = vmatpush1.bf16.msra.mxu0 0
      %1592 = vmatprep.subr.bf16.mxu0 0
      %1593 = vmatpush1.bf16.msra.mxu0 0
      %1594 = vmatprep.subr.bf16.mxu0 0
      %1595 = vmatpush1.bf16.msra.mxu0 0
      %1596 = vmatprep.subr.bf16.mxu0 0
      %1597 = vmatpush1.bf16.msra.mxu0 0
      %1598 = vmatprep.subr.bf16.mxu0 0
      %1599 = vmatpush1.bf16.msra.mxu0 0
      %1600 = vmatprep.subr.bf16.mxu0 %v1543
      %1601 = vmatpush1.bf16.msra.mxu0 %v1540
      %1602 = vmatprep.subr.bf16.mxu0 0
      %1603 = vmatpush2.bf16.msra.mxu0 0
      %1604 = vmatprep.subr.bf16.mxu0 0
      %1605 = vmatpush2.bf16.msra.mxu0 0
      %1606 = vmatprep.subr.bf16.mxu0 0
      %1607 = vmatpush2.bf16.msra.mxu0 0
      %1608 = vmatprep.subr.bf16.mxu0 0
      %1609 = vmatpush2.bf16.msra.mxu0 0
      %1610 = vmatprep.subr.bf16.mxu0 0
      %1611 = vmatpush2.bf16.msra.mxu0 0
      %1612 = vmatprep.subr.bf16.mxu0 0
      %1613 = vmatpush2.bf16.msra.mxu0 0
      %1614 = vmatprep.subr.bf16.mxu0 0
      %1615 = vmatpush2.bf16.msra.mxu0 0
      %1616 = vmatprep.subr.bf16.mxu0 0
      %1617 = vmatpush2.bf16.msra.mxu0 0
      %1618 = vmatprep.mubr.bf16.mxu0 0
      %1619 = vmatmul.mubr.bf16.gmra.mxu0 %v1531
      %v1620 = vpop.f32.mrf.mxu0
      %v1621 = vadd.f32 0.0, %v1620
      %v1622 = vpop.f32.mrf.mxu0
      %v1623 = vadd.f32 0.0, %v1622
      %v1624 = vpop.f32.mrf.mxu0
      %v1625 = vpop.f32.mrf.mxu0
      %1626 = vdwg.mxu0
      %v1627 = vadd.f32 %v1509, %v1580
      %v1628 = vadd.f32 %v1510, %v1582
      %v1629 = vadd.f32 %v1511, %v1621
      %v1630 = vadd.f32 %v1512, %v1623
      %s1631 = scalar_lea.vmem %s8, 32
      %v1632 = vld [vmem:[%s1631] sm:$0xf]
      %1633 = vrot.lane.b32.xlu0 %v698, 109
      %v1634 = vpop.permute.xlu0 %1633
      %1635 = vrot.lane.b32.xlu0 %v699, 109
      %v1636 = vpop.permute.xlu0 %1635
      %1637 = vrot.lane.b32.xlu0 %v700, 109
      %v1638 = vpop.permute.xlu0 %1637
      %1639 = vrot.lane.b32.xlu0 %v701, 109
      %v1640 = vpop.permute.xlu0 %1639
      %1641 = vrot.lane.b32.xlu0 %v702, 109
      %v1642 = vpop.permute.xlu0 %1641
      %vm1643 = vcmask 891904
      %v1644 = vsel %vm1643, %v1634, %v1636
      %v1645 = vsel %vm1643, %v1636, %v1638
      %v1646 = vsel %vm1643, %v1638, %v1640
      %v1647 = vsel %vm1643, %v1640, %v1642
      %v1649 = vsel %vm726, %v1632, 0
      %v1652 = vsel %vm730, %v1644, 0
      %v1655 = vsel %vm730, %v1645, 0
      %v1658 = vsel %vm730, %v1646, 0
      %v1661 = vsel %vm730, %v1647, 0
      %1663 = vmatprep.subr.bf16.mxu0 0
      %1664 = vmatpush1.bf16.msra.mxu0 0
      %1665 = vmatprep.subr.bf16.mxu0 0
      %1666 = vmatpush1.bf16.msra.mxu0 0
      %1667 = vmatprep.subr.bf16.mxu0 0
      %1668 = vmatpush1.bf16.msra.mxu0 0
      %1669 = vmatprep.subr.bf16.mxu0 0
      %1670 = vmatpush1.bf16.msra.mxu0 0
      %1671 = vmatprep.subr.bf16.mxu0 0
      %1672 = vmatpush1.bf16.msra.mxu0 0
      %1673 = vmatprep.subr.bf16.mxu0 0
      %1674 = vmatpush1.bf16.msra.mxu0 0
      %1675 = vmatprep.subr.bf16.mxu0 0
      %1676 = vmatpush1.bf16.msra.mxu0 0
      %1677 = vmatprep.subr.bf16.mxu0 %v1655
      %1678 = vmatpush1.bf16.msra.mxu0 %v1652
      %1679 = vmatprep.subr.bf16.mxu0 0
      %1680 = vmatpush2.bf16.msra.mxu0 0
      %1681 = vmatprep.subr.bf16.mxu0 0
      %1682 = vmatpush2.bf16.msra.mxu0 0
      %1683 = vmatprep.subr.bf16.mxu0 0
      %1684 = vmatpush2.bf16.msra.mxu0 0
      %1685 = vmatprep.subr.bf16.mxu0 0
      %1686 = vmatpush2.bf16.msra.mxu0 0
      %1687 = vmatprep.subr.bf16.mxu0 0
      %1688 = vmatpush2.bf16.msra.mxu0 0
      %1689 = vmatprep.subr.bf16.mxu0 0
      %1690 = vmatpush2.bf16.msra.mxu0 0
      %1691 = vmatprep.subr.bf16.mxu0 0
      %1692 = vmatpush2.bf16.msra.mxu0 0
      %1693 = vmatprep.subr.bf16.mxu0 0
      %1694 = vmatpush2.bf16.msra.mxu0 0
      %1695 = vmatprep.mubr.bf16.mxu0 0
      %1696 = vmatmul.mubr.bf16.gmra.mxu0 %v1649
      %v1697 = vpop.f32.mrf.mxu0
      %v1698 = vadd.f32 0.0, %v1697
      %v1699 = vpop.f32.mrf.mxu0
      %v1700 = vadd.f32 0.0, %v1699
      %v1701 = vpop.f32.mrf.mxu0
      %v1702 = vpop.f32.mrf.mxu0
      %1703 = vdwg.mxu0
      %1704 = vmatprep.subr.bf16.mxu0 0
      %1705 = vmatpush1.bf16.msra.mxu0 0
      %1706 = vmatprep.subr.bf16.mxu0 0
      %1707 = vmatpush1.bf16.msra.mxu0 0
      %1708 = vmatprep.subr.bf16.mxu0 0
      %1709 = vmatpush1.bf16.msra.mxu0 0
      %1710 = vmatprep.subr.bf16.mxu0 0
      %1711 = vmatpush1.bf16.msra.mxu0 0
      %1712 = vmatprep.subr.bf16.mxu0 0
      %1713 = vmatpush1.bf16.msra.mxu0 0
      %1714 = vmatprep.subr.bf16.mxu0 0
      %1715 = vmatpush1.bf16.msra.mxu0 0
      %1716 = vmatprep.subr.bf16.mxu0 0
      %1717 = vmatpush1.bf16.msra.mxu0 0
      %1718 = vmatprep.subr.bf16.mxu0 %v1661
      %1719 = vmatpush1.bf16.msra.mxu0 %v1658
      %1720 = vmatprep.subr.bf16.mxu0 0
      %1721 = vmatpush2.bf16.msra.mxu0 0
      %1722 = vmatprep.subr.bf16.mxu0 0
      %1723 = vmatpush2.bf16.msra.mxu0 0
      %1724 = vmatprep.subr.bf16.mxu0 0
      %1725 = vmatpush2.bf16.msra.mxu0 0
      %1726 = vmatprep.subr.bf16.mxu0 0
      %1727 = vmatpush2.bf16.msra.mxu0 0
      %1728 = vmatprep.subr.bf16.mxu0 0
      %1729 = vmatpush2.bf16.msra.mxu0 0
      %1730 = vmatprep.subr.bf16.mxu0 0
      %1731 = vmatpush2.bf16.msra.mxu0 0
      %1732 = vmatprep.subr.bf16.mxu0 0
      %1733 = vmatpush2.bf16.msra.mxu0 0
      %1734 = vmatprep.subr.bf16.mxu0 0
      %1735 = vmatpush2.bf16.msra.mxu0 0
      %1736 = vmatprep.mubr.bf16.mxu0 0
      %1737 = vmatmul.mubr.bf16.gmra.mxu0 %v1649
      %v1738 = vpop.f32.mrf.mxu0
      %v1739 = vadd.f32 0.0, %v1738
      %v1740 = vpop.f32.mrf.mxu0
      %v1741 = vadd.f32 0.0, %v1740
      %v1742 = vpop.f32.mrf.mxu0
      %v1743 = vpop.f32.mrf.mxu0
      %1744 = vdwg.mxu0
      %v1745 = vadd.f32 %v1627, %v1698
      %v1746 = vadd.f32 %v1628, %v1700
      %v1747 = vadd.f32 %v1629, %v1739
      %v1748 = vadd.f32 %v1630, %v1741
      %v1749 = vpack.c.bf16 %v1745, %v1745
      %v1750 = vpack.c.bf16 %v1746, %v1746
      %v1751 = vpack.c.bf16 %v1747, %v1747
      %v1752 = vpack.c.bf16 %v1748, %v1748
      %v1757 = vunpack.c.l.b16 %v1749
      %v1758 = vunpack.c.l.b16 %v1750
      %v1759 = vunpack.c.l.b16 %v1751
      %v1760 = vunpack.c.l.b16 %v1752
      %v1761 = vpack.c.b16 %v1758, %v1757
      %v1762 = vpack.c.b16 %v1760, %v1759
      %1765 = vst [vmem:[%s558] sm:$0xff] %v1761
      %1766 = vst [vmem:[%s558 + $0x8] sm:$0xff] %v1762
      %v1767 = vmul.f32 %v1745, %v674
      %v1768 = vmul.f32 %v1746, %v678
      %v1769 = vmul.f32 %v1747, %v682
      %v1770 = vmul.f32 %v1748, %v686
      %v1771 = vadd.f32 %v1767, %v1768
      %v1772 = vadd.f32 %v1771, %v1769
      %v1773 = vadd.f32 %v1772, %v1770
      %1774 = vadd.xlane.f32.xlu0 %v1773
      %v1775 = vpop.xlane.xlu0 %1774
      %vm1776 = vcmask 7168
      %1777 = vst.msk [vmem:[%s563] sm:$0xff] %vm1776, %v1775
      %v1778 = vmul.f32 %v1767, %v1767
      %v1779 = vmul.f32 %v1768, %v1768
      %v1780 = vmul.f32 %v1769, %v1769
      %v1781 = vmul.f32 %v1770, %v1770
      %v1782 = vadd.f32 %v1778, %v1779
      %v1783 = vadd.f32 %v1782, %v1780
      %v1784 = vadd.f32 %v1783, %v1781
      %1785 = vadd.xlane.f32.xlu0 %v1784
      %v1786 = vpop.xlane.xlu0 %1785
      %1787 = vst.msk [vmem:[%s567] sm:$0xff] %vm1776, %v1786
      %s1788 = smul.u32 4, %s23
      %p1789 = scmp.lt.s32.totalorder %s1788, 7
      %s1790 = scalar_select %p1789, %s1788, 7
      %s1791 = smul.addr %s1790, 4
      %s1792 = scalar_lea.vmem %s9, %s1791
      %p1793 = scmp.lt.s32.totalorder %s23, 1
      %s1794 = scalar_select %p1793, %s23, 1
      %s1795 = smul.addr %s1794, 8
      %s1796 = scalar_lea.vmem %s10, %s1795
      %p1797 = scmp.lt.s32.totalorder %s23, 1
      %s1798 = scalar_select %p1797, %s23, 1
      %s1799 = smul.addr %s1798, 8
      %s1800 = scalar_lea.vmem %s11, %s1799
      // Predicated region
      $region57: #{resnet_block_forward.4} parent=55 // pred_check
        %p1801 = pneg %p276
      $region58: #{resnet_block_forward.4} parent=55 // pred_check_branch
        %1803 = sbr.rel (%p1801) target = $region60
      $region59: #{resnet_block_forward.4} parent=55 // pred_region
        %s1804 = smul.u32 4, %s23
      $region60: #{resnet_block_forward.4} parent=55 // pred_fallthru
        _
      // Predicated region
      $region61: #{resnet_block_forward.4} parent=55 // pred_check
        %p1805 = pneg %p302
      $region62: #{resnet_block_forward.4} parent=55 // pred_check_branch
        %1807 = sbr.rel (%p1805) target = $region64
      $region63: #{resnet_block_forward.4} parent=55 // pred_region
        _
      $region64: #{resnet_block_forward.4} parent=55 // pred_fallthru
        _
      // Predicated region
      $region65: #{resnet_block_forward.4} parent=55 // pred_check
        %p1808 = pneg %p328
      $region66: #{resnet_block_forward.4} parent=55 // pred_check_branch
        %1810 = sbr.rel (%p1808) target = $region68
      $region67: #{resnet_block_forward.4} parent=55 // pred_region
        _
      $region68: #{resnet_block_forward.4} parent=55 // pred_fallthru
        _
    $region56: #{resnet_block_forward.4} parent=5 // pred_fallthru
      _
    %p1811 = scmp.le.s32.totalorder 2, %s18
    // Predicated region
    $region69: #{resnet_block_forward.4} parent=5 // pred_check
      %p1812 = pneg %p1811
    $region70: #{resnet_block_forward.4} parent=5 // pred_check_branch
      %1814 = sbr.rel (%p1812) target = $region72
    $region71: #{resnet_block_forward.4} parent=5 // pred_region
      %s1815 = ssub.s32 %s18, 2
      // Predicated region
      $region73: #{resnet_block_forward.4} parent=71 // pred_check
        %p1816 = pneg %p282
      $region74: #{resnet_block_forward.4} parent=71 // pred_check_branch
        %1818 = sbr.rel (%p1816) target = $region76
      $region75: #{resnet_block_forward.4} parent=71 // pred_region
        %s1819 = smul.u32 4, %s24
        %p1820 = scmp.lt.s32.totalorder %s1819, 7
        %s1821 = scalar_select %p1820, %s1819, 7
        %s1822 = smul.addr %s1821, 4
        %s1823 = scalar_lea.vmem %s9, %s1822
      $region76: #{resnet_block_forward.4} parent=71 // pred_fallthru
        _
      // Predicated region
      $region77: #{resnet_block_forward.4} parent=71 // pred_check
        %p1824 = pneg %p308
      $region78: #{resnet_block_forward.4} parent=71 // pred_check_branch
        %1826 = sbr.rel (%p1824) target = $region80
      $region79: #{resnet_block_forward.4} parent=71 // pred_region
        %p1827 = scmp.lt.s32.totalorder %s24, 1
        %s1828 = scalar_select %p1827, %s24, 1
        %s1829 = smul.addr %s1828, 8
        %s1830 = scalar_lea.vmem %s10, %s1829
      $region80: #{resnet_block_forward.4} parent=71 // pred_fallthru
        _
      // Predicated region
      $region81: #{resnet_block_forward.4} parent=71 // pred_check
        %p1831 = pneg %p334
      $region82: #{resnet_block_forward.4} parent=71 // pred_check_branch
        %1833 = sbr.rel (%p1831) target = $region84
      $region83: #{resnet_block_forward.4} parent=71 // pred_region
        %p1834 = scmp.lt.s32.totalorder %s24, 1
        %s1835 = scalar_select %p1834, %s24, 1
        %s1836 = smul.addr %s1835, 8
        %s1837 = scalar_lea.vmem %s11, %s1836
      $region84: #{resnet_block_forward.4} parent=71 // pred_fallthru
        _
    $region72: #{resnet_block_forward.4} parent=5 // pred_fallthru
      _
  $region6: #{resnet_block_forward.4} parent=0 // loop_footer
    %s22 = sadd.s32 1, %s18
  $region7: #{resnet_block_forward.4} parent=0 // loop_footer_branch
    %17 = sbr.rel target = $region3
  $region8: #{resnet_block_forward.4} parent=0 // loop_exit
    _

// kernel: resnet_block_forward.3
$region0: #{resnet_block_forward.3}
  #allocation0 [shape = 'u32[]', space=smem, size = 0x4, offset = 0x4, fixed_abs, tag = 'smem constant byte address 0x4 - core index']
  #allocation1 [shape = 'u32[144,128]{1,0:T(1,128)}', space=vmem, size = 0x12000, scoped, tag = 'internal scratch']
  %s0 = inlined_call_operand.vmem [shape: bf16[8,2048], index: 0, kind: input, shape index: {}, may-alias: {0,1,2}]
  %s1 = inlined_call_operand.vmem [shape: bf16[8,2048], index: 1, kind: input, shape index: {}, may-alias: {0,1,2}]
  %s2 = inlined_call_operand.vmem [shape: bf16[8,2048], index: 2, kind: input, shape index: {}, may-alias: {0,1,2}]
  %s3 = inlined_call_operand.vmem [shape: f32[1,2048], index: 3, kind: input, shape index: {}]
  %s4 = inlined_call_operand.vmem [shape: bf16[9,8,8], index: 4, kind: input, shape index: {}]
  %s5 = inlined_call_operand.vmem [shape: bf16[8,1024], index: 5, kind: output, shape index: {0}]
  %s6 = inlined_call_operand.vmem [shape: f32[2,8,1], index: 6, kind: output, shape index: {1}]
  %s7 = inlined_call_operand.vmem [shape: f32[2,8,1], index: 7, kind: output, shape index: {2}]
  %8 = xla_tuple %s5, %s6, %s7
  %s9 = sld [smem:[#allocation0]]
  $region69: #{resnet_block_forward.3} parent=0
    _
  %s11 = ssub.s32 1, %s9
  %s12 = scalar_select 0, %s11, %s9
  loop: start=0, step=1, limit=4
  $region2: #{resnet_block_forward.3} parent=0 // loop_pre_header
    _
  $region3: #{resnet_block_forward.3} parent=0 // loop_header
    %s14 = sphi 0, %s18
    %p15 = scmp.ge.s32.totalorder %s14, 4
    %s24 = sphi 0, %s26
    %s27 = sphi 0, %s24
    %s28 = sphi 0, %s27
    %s44 = sphi 0, %s28
    %s52 = sphi 0, %s54
    %s55 = sphi 0, %s52
    %s56 = sphi 0, %s55
    %s72 = sphi 0, %s56
    %s80 = sphi 0, %s82
    %s83 = sphi 0, %s80
    %s84 = sphi 0, %s83
    %s100 = sphi 0, %s84
    %s108 = sphi 0, %s110
    %s111 = sphi 0, %s108
    %s112 = sphi 0, %s111
    %s128 = sphi 0, %s112
    %s132 = sphi 0, %s132
    %s134 = sphi 0, %s132
    %s135 = sphi 0, %s134
    %s149 = sphi 0, %s135
    %s155 = sphi 0, %s157
    %s158 = sphi 0, %s155
    %s159 = sphi 0, %s158
    %s175 = sphi 0, %s159
    %s181 = sphi 0, %s183
    %s184 = sphi 0, %s181
    %s185 = sphi 0, %s184
    %s201 = sphi 0, %s185
    %s207 = sphi 0, %s209
    %s210 = sphi 0, %s207
    %s211 = sphi 0, %s210
    %s227 = sphi 0, %s211
  $region4: #{resnet_block_forward.3} parent=0 // loop_header_branch
    %17 = sbr.rel (%p15) target = $region8
  $region5: #{resnet_block_forward.3} parent=0 // loop_body
    %s19 = ssub.s32 %s14, 1
    %s20 = ssub.s32 %s14, 2
    %s21 = sadd.s32 %s14, 1
    %s22 = ssub.s32 %s14, %s21
    %p23 = scmp.eq.s32.totalorder %s22, 0
    %s25 = sadd.s32 %s24, 1
    %s26 = scalar_select %p23, %s24, %s25
    %p29 = pneg %p23
    %p30 = scmp.eq.s32.totalorder %s14, 1
    %p31 = por %p29, %p30
    %p32 = scmp.ne.s32.totalorder %s24, %s27
    %p33 = scmp.eq.s32.totalorder %s14, 0
    %p34 = por %p32, %p33
    %p35 = scmp.ne.s32.totalorder %s24, %s27
    %p36 = scmp.eq.s32.totalorder %s19, 1
    %p37 = por %p35, %p36
    %p38 = scmp.ne.s32.totalorder %s27, %s28
    %p39 = scmp.eq.s32.totalorder %s19, 0
    %p40 = por %p38, %p39
    %p41 = scmp.ne.s32.totalorder %s27, %s28
    %p42 = scmp.eq.s32.totalorder %s20, 1
    %p43 = por %p41, %p42
    %p45 = scmp.ne.s32.totalorder %s28, %s44
    %p46 = scmp.eq.s32.totalorder %s20, 0
    %p47 = por %p45, %p46
    %s48 = sadd.s32 %s14, 1
    %s49 = sadd.s32 %s21, 1
    %s50 = ssub.s32 %s48, %s49
    %p51 = scmp.eq.s32.totalorder %s50, 0
    %s53 = sadd.s32 %s52, 1
    %s54 = scalar_select %p51, %s52, %s53
    %p57 = pneg %p51
    %p58 = scmp.eq.s32.totalorder %s14, 1
    %p59 = por %p57, %p58
    %p60 = scmp.ne.s32.totalorder %s52, %s55
    %p61 = scmp.eq.s32.totalorder %s14, 0
    %p62 = por %p60, %p61
    %p63 = scmp.ne.s32.totalorder %s52, %s55
    %p64 = scmp.eq.s32.totalorder %s19, 1
    %p65 = por %p63, %p64
    %p66 = scmp.ne.s32.totalorder %s55, %s56
    %p67 = scmp.eq.s32.totalorder %s19, 0
    %p68 = por %p66, %p67
    %p69 = scmp.ne.s32.totalorder %s55, %s56
    %p70 = scmp.eq.s32.totalorder %s20, 1
    %p71 = por %p69, %p70
    %p73 = scmp.ne.s32.totalorder %s56, %s72
    %p74 = scmp.eq.s32.totalorder %s20, 0
    %p75 = por %p73, %p74
    %s76 = sadd.s32 %s14, 2
    %s77 = sadd.s32 %s21, 2
    %s78 = ssub.s32 %s76, %s77
    %p79 = scmp.eq.s32.totalorder %s78, 0
    %s81 = sadd.s32 %s80, 1
    %s82 = scalar_select %p79, %s80, %s81
    %p85 = pneg %p79
    %p86 = scmp.eq.s32.totalorder %s14, 1
    %p87 = por %p85, %p86
    %p88 = scmp.ne.s32.totalorder %s80, %s83
    %p89 = scmp.eq.s32.totalorder %s14, 0
    %p90 = por %p88, %p89
    %p91 = scmp.ne.s32.totalorder %s80, %s83
    %p92 = scmp.eq.s32.totalorder %s19, 1
    %p93 = por %p91, %p92
    %p94 = scmp.ne.s32.totalorder %s83, %s84
    %p95 = scmp.eq.s32.totalorder %s19, 0
    %p96 = por %p94, %p95
    %p97 = scmp.ne.s32.totalorder %s83, %s84
    %p98 = scmp.eq.s32.totalorder %s20, 1
    %p99 = por %p97, %p98
    %p101 = scmp.ne.s32.totalorder %s84, %s100
    %p102 = scmp.eq.s32.totalorder %s20, 0
    %p103 = por %p101, %p102
    %s104 = sadd.s32 %s14, 1
    %s105 = sadd.s32 %s21, 1
    %s106 = ssub.s32 %s104, %s105
    %p107 = scmp.eq.s32.totalorder %s106, 0
    %s109 = sadd.s32 %s108, 1
    %s110 = scalar_select %p107, %s108, %s109
    %p113 = pneg %p107
    %p114 = scmp.eq.s32.totalorder %s14, 1
    %p115 = por %p113, %p114
    %p116 = scmp.ne.s32.totalorder %s108, %s111
    %p117 = scmp.eq.s32.totalorder %s14, 0
    %p118 = por %p116, %p117
    %p119 = scmp.ne.s32.totalorder %s108, %s111
    %p120 = scmp.eq.s32.totalorder %s19, 1
    %p121 = por %p119, %p120
    %p122 = scmp.ne.s32.totalorder %s111, %s112
    %p123 = scmp.eq.s32.totalorder %s19, 0
    %p124 = por %p122, %p123
    %p125 = scmp.ne.s32.totalorder %s111, %s112
    %p126 = scmp.eq.s32.totalorder %s20, 1
    %p127 = por %p125, %p126
    %p129 = scmp.ne.s32.totalorder %s112, %s128
    %p130 = scmp.eq.s32.totalorder %s20, 0
    %p131 = por %p129, %p130
    %s133 = sadd.s32 %s132, 1
    %p136 = scmp.eq.s32.totalorder %s14, 1
    %p137 = scmp.ne.s32.totalorder %s132, %s134
    %p138 = scmp.eq.s32.totalorder %s14, 0
    %p139 = por %p137, %p138
    %p140 = scmp.ne.s32.totalorder %s132, %s134
    %p141 = scmp.eq.s32.totalorder %s19, 1
    %p142 = por %p140, %p141
    %p143 = scmp.ne.s32.totalorder %s134, %s135
    %p144 = scmp.eq.s32.totalorder %s19, 0
    %p145 = por %p143, %p144
    %p146 = scmp.ne.s32.totalorder %s134, %s135
    %p147 = scmp.eq.s32.totalorder %s20, 1
    %p148 = por %p146, %p147
    %p150 = scmp.ne.s32.totalorder %s135, %s149
    %p151 = scmp.eq.s32.totalorder %s20, 0
    %p152 = por %p150, %p151
    %s153 = ssub.s32 %s14, %s21
    %p154 = scmp.eq.s32.totalorder %s153, 0
    %s156 = sadd.s32 %s155, 1
    %s157 = scalar_select %p154, %s155, %s156
    %p160 = pneg %p154
    %p161 = scmp.eq.s32.totalorder %s14, 1
    %p162 = por %p160, %p161
    %p163 = scmp.ne.s32.totalorder %s155, %s158
    %p164 = scmp.eq.s32.totalorder %s14, 0
    %p165 = por %p163, %p164
    %p166 = scmp.ne.s32.totalorder %s155, %s158
    %p167 = scmp.eq.s32.totalorder %s19, 1
    %p168 = por %p166, %p167
    %p169 = scmp.ne.s32.totalorder %s158, %s159
    %p170 = scmp.eq.s32.totalorder %s19, 0
    %p171 = por %p169, %p170
    %p172 = scmp.ne.s32.totalorder %s158, %s159
    %p173 = scmp.eq.s32.totalorder %s20, 1
    %p174 = por %p172, %p173
    %p176 = scmp.ne.s32.totalorder %s159, %s175
    %p177 = scmp.eq.s32.totalorder %s20, 0
    %p178 = por %p176, %p177
    %s179 = ssub.s32 %s14, %s21
    %p180 = scmp.eq.s32.totalorder %s179, 0
    %s182 = sadd.s32 %s181, 1
    %s183 = scalar_select %p180, %s181, %s182
    %p186 = pneg %p180
    %p187 = scmp.eq.s32.totalorder %s14, 1
    %p188 = por %p186, %p187
    %p189 = scmp.ne.s32.totalorder %s181, %s184
    %p190 = scmp.eq.s32.totalorder %s14, 0
    %p191 = por %p189, %p190
    %p192 = scmp.ne.s32.totalorder %s181, %s184
    %p193 = scmp.eq.s32.totalorder %s19, 1
    %p194 = por %p192, %p193
    %p195 = scmp.ne.s32.totalorder %s184, %s185
    %p196 = scmp.eq.s32.totalorder %s19, 0
    %p197 = por %p195, %p196
    %p198 = scmp.ne.s32.totalorder %s184, %s185
    %p199 = scmp.eq.s32.totalorder %s20, 1
    %p200 = por %p198, %p199
    %p202 = scmp.ne.s32.totalorder %s185, %s201
    %p203 = scmp.eq.s32.totalorder %s20, 0
    %p204 = por %p202, %p203
    %s205 = ssub.s32 %s14, %s21
    %p206 = scmp.eq.s32.totalorder %s205, 0
    %s208 = sadd.s32 %s207, 1
    %s209 = scalar_select %p206, %s207, %s208
    %p212 = pneg %p206
    %p213 = scmp.eq.s32.totalorder %s14, 1
    %p214 = por %p212, %p213
    %p215 = scmp.ne.s32.totalorder %s207, %s210
    %p216 = scmp.eq.s32.totalorder %s14, 0
    %p217 = por %p215, %p216
    %p218 = scmp.ne.s32.totalorder %s207, %s210
    %p219 = scmp.eq.s32.totalorder %s19, 1
    %p220 = por %p218, %p219
    %p221 = scmp.ne.s32.totalorder %s210, %s211
    %p222 = scmp.eq.s32.totalorder %s19, 0
    %p223 = por %p221, %p222
    %p224 = scmp.ne.s32.totalorder %s210, %s211
    %p225 = scmp.eq.s32.totalorder %s20, 1
    %p226 = por %p224, %p225
    %p228 = scmp.ne.s32.totalorder %s211, %s227
    %p229 = scmp.eq.s32.totalorder %s20, 0
    %p230 = por %p228, %p229
    %p231 = scmp.le.s32.totalorder 1, %s14
    %p232 = scmp.lt.s32.totalorder %s14, 3
    %p233 = pnand %p231, %p232
    %p234 = pneg %p233
    // Predicated region
    $region9: #{resnet_block_forward.3} parent=5 // pred_check
      _
    $region10: #{resnet_block_forward.3} parent=5 // pred_check_branch
      %236 = sbr.rel (%p233) target = $region12
    $region11: #{resnet_block_forward.3} parent=5 // pred_region
      %s237 = ssub.s32 %s14, 1
      // Predicated region
      $region13: #{resnet_block_forward.3} parent=11 // pred_check
        %p238 = pneg %p145
      $region14: #{resnet_block_forward.3} parent=11 // pred_check_branch
        %240 = sbr.rel (%p238) target = $region16
      $region15: #{resnet_block_forward.3} parent=11 // pred_region
        _
      $region16: #{resnet_block_forward.3} parent=11 // pred_fallthru
        _
    $region12: #{resnet_block_forward.3} parent=5 // pred_fallthru
      _
    %p241 = scmp.lt.s32.totalorder %s14, 2
    // Predicated region
    $region17: #{resnet_block_forward.3} parent=5 // pred_check
      %p242 = pneg %p241
    $region18: #{resnet_block_forward.3} parent=5 // pred_check_branch
      %244 = sbr.rel (%p242) target = $region20
    $region19: #{resnet_block_forward.3} parent=5 // pred_region
      // Predicated region
      $region21: #{resnet_block_forward.3} parent=19 // pred_check
        %p245 = pneg %p34
      $region22: #{resnet_block_forward.3} parent=19 // pred_check_branch
        %247 = sbr.rel (%p245) target = $region24
      $region23: #{resnet_block_forward.3} parent=19 // pred_region
        %s248 = smul.u32 4, %s14
        %p249 = scmp.lt.s32.totalorder %s248, 15
        %s250 = scalar_select %p249, %s248, 15
        %s251 = smul.addr %s250, 4
        %s252 = scalar_lea.vmem %s0, %s251
        %s253 = smul.u32 4, %s14
      $region24: #{resnet_block_forward.3} parent=19 // pred_fallthru
        _
      // Predicated region
      $region25: #{resnet_block_forward.3} parent=19 // pred_check
        %p254 = pneg %p62
      $region26: #{resnet_block_forward.3} parent=19 // pred_check_branch
        %256 = sbr.rel (%p254) target = $region28
      $region27: #{resnet_block_forward.3} parent=19 // pred_region
        %s257 = sadd.s32 %s14, 1
        %s258 = smul.u32 4, %s257
        %p259 = scmp.lt.s32.totalorder %s258, 15
        %s260 = scalar_select %p259, %s258, 15
        %s261 = smul.addr %s260, 4
        %s262 = scalar_lea.vmem %s1, %s261
        %s263 = sadd.s32 %s14, 1
        %s264 = smul.u32 4, %s263
      $region28: #{resnet_block_forward.3} parent=19 // pred_fallthru
        _
      // Predicated region
      $region29: #{resnet_block_forward.3} parent=19 // pred_check
        %p265 = pneg %p90
      $region30: #{resnet_block_forward.3} parent=19 // pred_check_branch
        %267 = sbr.rel (%p265) target = $region32
      $region31: #{resnet_block_forward.3} parent=19 // pred_region
        %s268 = sadd.s32 %s14, 2
        %s269 = smul.u32 4, %s268
        %p270 = scmp.lt.s32.totalorder %s269, 15
        %s271 = scalar_select %p270, %s269, 15
        %s272 = smul.addr %s271, 4
        %s273 = scalar_lea.vmem %s2, %s272
        %s274 = sadd.s32 %s14, 2
        %s275 = smul.u32 4, %s274
      $region32: #{resnet_block_forward.3} parent=19 // pred_fallthru
        _
      // Predicated region
      $region33: #{resnet_block_forward.3} parent=19 // pred_check
        %p276 = pneg %p118
      $region34: #{resnet_block_forward.3} parent=19 // pred_check_branch
        %278 = sbr.rel (%p276) target = $region36
      $region35: #{resnet_block_forward.3} parent=19 // pred_region
        %s279 = sadd.s32 %s14, 1
        %s280 = smul.u32 4, %s279
        %p281 = scmp.lt.s32.totalorder %s280, 15
        %s282 = scalar_select %p281, %s280, 15
        %s283 = scalar_lea.vmem %s3, %s282
        %s284 = sadd.s32 %s14, 1
        %s285 = smul.u32 4, %s284
      $region36: #{resnet_block_forward.3} parent=19 // pred_fallthru
        _
    $region20: #{resnet_block_forward.3} parent=5 // pred_fallthru
      _
    %p286 = scmp.le.s32.totalorder 1, %s14
    %p287 = scmp.lt.s32.totalorder %s14, 3
    %p288 = pnand %p286, %p287
    %p289 = pneg %p288
    // Predicated region
    $region37: #{resnet_block_forward.3} parent=5 // pred_check
      _
    $region38: #{resnet_block_forward.3} parent=5 // pred_check_branch
      %291 = sbr.rel (%p288) target = $region40
    $region39: #{resnet_block_forward.3} parent=5 // pred_region
      %s292 = ssub.s32 %s14, 1
      %s293 = smul.u32 4, %s19
      %p294 = scmp.lt.s32.totalorder %s293, 15
      %s295 = scalar_select %p294, %s293, 15
      %s296 = smul.addr %s295, 4
      %s297 = scalar_lea.vmem %s0, %s296
      %p298 = pneg %p40
      %p299 = pneg %p37
      %s300 = sadd.s32 %s19, 1
      %s301 = smul.u32 4, %s300
      %p302 = scmp.lt.s32.totalorder %s301, 15
      %s303 = scalar_select %p302, %s301, 15
      %s304 = smul.addr %s303, 4
      %s305 = scalar_lea.vmem %s1, %s304
      %p306 = pneg %p68
      %p307 = pneg %p65
      %s308 = sadd.s32 %s19, 2
      %s309 = smul.u32 4, %s308
      %p310 = scmp.lt.s32.totalorder %s309, 15
      %s311 = scalar_select %p310, %s309, 15
      %s312 = smul.addr %s311, 4
      %s313 = scalar_lea.vmem %s2, %s312
      %p314 = pneg %p96
      %p315 = pneg %p93
      %s316 = sadd.s32 %s19, 1
      %s317 = smul.u32 4, %s316
      %p318 = scmp.lt.s32.totalorder %s317, 15
      %s319 = scalar_select %p318, %s317, 15
      %s320 = scalar_lea.vmem %s3, %s319
      %p321 = pneg %p124
      %p322 = pneg %p121
      %p323 = pneg %p145
      %p324 = pneg %p142
      %p325 = pneg %p171
      %p326 = pneg %p168
      %s327 = smul.u32 4, %s19
      %p328 = scmp.lt.s32.totalorder %s327, 7
      %s329 = scalar_select %p328, %s327, 7
      %s330 = smul.addr %s329, 4
      %s331 = scalar_lea.vmem %s5, %s330
      %p332 = pneg %p197
      %p333 = pneg %p194
      %p334 = scmp.lt.s32.totalorder %s19, 1
      %s335 = scalar_select %p334, %s19, 1
      %s336 = smul.addr %s335, 8
      %s337 = scalar_lea.vmem %s6, %s336
      %p338 = pneg %p223
      %p339 = pneg %p220
      %p340 = scmp.lt.s32.totalorder %s19, 1
      %s341 = scalar_select %p340, %s19, 1
      %s342 = smul.addr %s341, 8
      %s343 = scalar_lea.vmem %s7, %s342
      %s344 = smul.u32 4, %s19
      %p345 = scmp.lt.s32.totalorder %s344, 15
      %s346 = scalar_select %p345, %s344, 15
      %s347 = smul.addr %s346, 4
      %s348 = scalar_lea.vmem %s0, %s347
      %s349 = smul.u32 4, %s19
      %s350 = sadd.s32 %s19, 1
      %s351 = smul.u32 4, %s350
      %p352 = scmp.lt.s32.totalorder %s351, 15
      %s353 = scalar_select %p352, %s351, 15
      %s354 = smul.addr %s353, 4
      %s355 = scalar_lea.vmem %s1, %s354
      %s356 = sadd.s32 %s19, 1
      %s357 = smul.u32 4, %s356
      %s358 = sadd.s32 %s19, 2
      %s359 = smul.u32 4, %s358
      %p360 = scmp.lt.s32.totalorder %s359, 15
      %s361 = scalar_select %p360, %s359, 15
      %s362 = smul.addr %s361, 4
      %s363 = scalar_lea.vmem %s2, %s362
      %s364 = sadd.s32 %s19, 2
      %s365 = smul.u32 4, %s364
      %s366 = sadd.s32 %s19, 1
      %s367 = smul.u32 4, %s366
      %p368 = scmp.lt.s32.totalorder %s367, 15
      %s369 = scalar_select %p368, %s367, 15
      %s370 = scalar_lea.vmem %s3, %s369
      %s371 = sadd.s32 %s19, 1
      %s372 = smul.u32 4, %s371
      %s373 = smul.u32 4, %s19
      %p374 = scmp.lt.s32.totalorder %s373, 7
      %s375 = scalar_select %p374, %s373, 7
      %s376 = smul.addr %s375, 4
      %s377 = scalar_lea.vmem %s5, %s376
      %s378 = smul.u32 4, %s19
      %p379 = scmp.lt.s32.totalorder %s19, 1
      %s380 = scalar_select %p379, %s19, 1
      %s381 = smul.addr %s380, 8
      %s382 = scalar_lea.vmem %s6, %s381
      %p383 = scmp.lt.s32.totalorder %s19, 1
      %s384 = scalar_select %p383, %s19, 1
      %s385 = smul.addr %s384, 8
      %s386 = scalar_lea.vmem %s7, %s385
      %v388 = vld [vmem:[%s348 + $0x8] sm:$0xff]
      %v389 = vld [vmem:[%s355] sm:$0xff]
      %v390 = vld [vmem:[%s355 + $0x8] sm:$0xff]
      %v391 = vld [vmem:[%s363] sm:$0xff]
      %v393 = vunpack.c.h.b16 %v388
      %v394 = vpack.c.b16 %v393, %v393
      %v397 = vunpack.c.l.b16 %v389
      %v398 = vunpack.c.h.b16 %v389
      %v399 = vunpack.c.l.b16 %v390
      %v400 = vunpack.c.h.b16 %v390
      %v401 = vpack.c.b16 %v397, %v397
      %v402 = vpack.c.b16 %v398, %v398
      %v403 = vpack.c.b16 %v399, %v399
      %v404 = vpack.c.b16 %v400, %v400
      %v406 = vunpack.c.l.b16 %v391
      %v407 = vpack.c.b16 %v406, %v406
      %v408 = vld [vmem:[%s370] sm:$0xf]
      %v409 = vld [vmem:[%s4] sm:$0xf]
      %s410 = scalar_lea.vmem %s4, 4
      %v411 = vld [vmem:[%s410] sm:$0xf]
      %412 = vrot.lane.b32.xlu0 %v394, 18
      %v413 = vpop.permute.xlu0 %412
      %414 = vrot.lane.b32.xlu0 %v401, 18
      %v415 = vpop.permute.xlu0 %414
      %416 = vrot.lane.b32.xlu0 %v402, 18
      %v417 = vpop.permute.xlu0 %416
      %418 = vrot.lane.b32.xlu0 %v403, 18
      %v419 = vpop.permute.xlu0 %418
      %420 = vrot.lane.b32.xlu0 %v404, 18
      %v421 = vpop.permute.xlu0 %420
      %vm422 = vcmask 146432
      %v423 = vsel %vm422, %v413, %v415
      %v424 = vsel %vm422, %v415, %v417
      %v425 = vsel %vm422, %v417, %v419
      %v426 = vsel %vm422, %v419, %v421
      %vm427 = vcmask 64512
      %v429 = vsel %vm427, %v411, 0
      %vm431 = vcmask 1043456
      %v433 = vsel %vm431, %v423, 0
      %v436 = vsel %vm431, %v424, 0
      %v439 = vsel %vm431, %v425, 0
      %v442 = vsel %vm431, %v426, 0
      %444 = vmatprep.subr.bf16.mxu0 0
      %445 = vmatpush1.bf16.msra.mxu0 0
      %446 = vmatprep.subr.bf16.mxu0 0
      %447 = vmatpush1.bf16.msra.mxu0 0
      %448 = vmatprep.subr.bf16.mxu0 0
      %449 = vmatpush1.bf16.msra.mxu0 0
      %450 = vmatprep.subr.bf16.mxu0 0
      %451 = vmatpush1.bf16.msra.mxu0 0
      %452 = vmatprep.subr.bf16.mxu0 0
      %453 = vmatpush1.bf16.msra.mxu0 0
      %454 = vmatprep.subr.bf16.mxu0 0
      %455 = vmatpush1.bf16.msra.mxu0 0
      %456 = vmatprep.subr.bf16.mxu0 0
      %457 = vmatpush1.bf16.msra.mxu0 0
      %458 = vmatprep.subr.bf16.mxu0 %v436
      %459 = vmatpush1.bf16.msra.mxu0 %v433
      %460 = vmatprep.subr.bf16.mxu0 0
      %461 = vmatpush2.bf16.msra.mxu0 0
      %462 = vmatprep.subr.bf16.mxu0 0
      %463 = vmatpush2.bf16.msra.mxu0 0
      %464 = vmatprep.subr.bf16.mxu0 0
      %465 = vmatpush2.bf16.msra.mxu0 0
      %466 = vmatprep.subr.bf16.mxu0 0
      %467 = vmatpush2.bf16.msra.mxu0 0
      %468 = vmatprep.subr.bf16.mxu0 0
      %469 = vmatpush2.bf16.msra.mxu0 0
      %470 = vmatprep.subr.bf16.mxu0 0
      %471 = vmatpush2.bf16.msra.mxu0 0
      %472 = vmatprep.subr.bf16.mxu0 0
      %473 = vmatpush2.bf16.msra.mxu0 0
      %474 = vmatprep.subr.bf16.mxu0 0
      %475 = vmatpush2.bf16.msra.mxu0 0
      %476 = vmatprep.mubr.bf16.mxu0 0
      %477 = vmatmul.mubr.bf16.gmra.mxu0 %v429
      %v478 = vpop.f32.mrf.mxu0
      %v479 = vadd.f32 0.0, %v478
      %v480 = vpop.f32.mrf.mxu0
      %v481 = vadd.f32 0.0, %v480
      %v482 = vpop.f32.mrf.mxu0
      %v483 = vpop.f32.mrf.mxu0
      %484 = vdwg.mxu0
      %485 = vmatprep.subr.bf16.mxu0 0
      %486 = vmatpush1.bf16.msra.mxu0 0
      %487 = vmatprep.subr.bf16.mxu0 0
      %488 = vmatpush1.bf16.msra.mxu0 0
      %489 = vmatprep.subr.bf16.mxu0 0
      %490 = vmatpush1.bf16.msra.mxu0 0
      %491 = vmatprep.subr.bf16.mxu0 0
      %492 = vmatpush1.bf16.msra.mxu0 0
      %493 = vmatprep.subr.bf16.mxu0 0
      %494 = vmatpush1.bf16.msra.mxu0 0
      %495 = vmatprep.subr.bf16.mxu0 0
      %496 = vmatpush1.bf16.msra.mxu0 0
      %497 = vmatprep.subr.bf16.mxu0 0
      %498 = vmatpush1.bf16.msra.mxu0 0
      %499 = vmatprep.subr.bf16.mxu0 %v442
      %500 = vmatpush1.bf16.msra.mxu0 %v439
      %501 = vmatprep.subr.bf16.mxu0 0
      %502 = vmatpush2.bf16.msra.mxu0 0
      %503 = vmatprep.subr.bf16.mxu0 0
      %504 = vmatpush2.bf16.msra.mxu0 0
      %505 = vmatprep.subr.bf16.mxu0 0
      %506 = vmatpush2.bf16.msra.mxu0 0
      %507 = vmatprep.subr.bf16.mxu0 0
      %508 = vmatpush2.bf16.msra.mxu0 0
      %509 = vmatprep.subr.bf16.mxu0 0
      %510 = vmatpush2.bf16.msra.mxu0 0
      %511 = vmatprep.subr.bf16.mxu0 0
      %512 = vmatpush2.bf16.msra.mxu0 0
      %513 = vmatprep.subr.bf16.mxu0 0
      %514 = vmatpush2.bf16.msra.mxu0 0
      %515 = vmatprep.subr.bf16.mxu0 0
      %516 = vmatpush2.bf16.msra.mxu0 0
      %517 = vmatprep.mubr.bf16.mxu0 0
      %518 = vmatmul.mubr.bf16.gmra.mxu0 %v429
      %v519 = vpop.f32.mrf.mxu0
      %v520 = vadd.f32 0.0, %v519
      %v521 = vpop.f32.mrf.mxu0
      %v522 = vadd.f32 0.0, %v521
      %v523 = vpop.f32.mrf.mxu0
      %v524 = vpop.f32.mrf.mxu0
      %525 = vdwg.mxu0
      %526 = vrot.lane.b32.xlu0 %v394, 19
      %v527 = vpop.permute.xlu0 %526
      %528 = vrot.lane.b32.xlu0 %v401, 19
      %v529 = vpop.permute.xlu0 %528
      %530 = vrot.lane.b32.xlu0 %v402, 19
      %v531 = vpop.permute.xlu0 %530
      %532 = vrot.lane.b32.xlu0 %v403, 19
      %v533 = vpop.permute.xlu0 %532
      %534 = vrot.lane.b32.xlu0 %v404, 19
      %v535 = vpop.permute.xlu0 %534
      %vm536 = vcmask 154624
      %v537 = vsel %vm536, %v527, %v529
      %v538 = vsel %vm536, %v529, %v531
      %v539 = vsel %vm536, %v531, %v533
      %v540 = vsel %vm536, %v533, %v535
      %v542 = vsel %vm427, %v409, 0
      %v545 = vsel %vm431, %v537, 0
      %v548 = vsel %vm431, %v538, 0
      %v551 = vsel %vm431, %v539, 0
      %v554 = vsel %vm431, %v540, 0
      %556 = vmatprep.subr.bf16.mxu0 0
      %557 = vmatpush1.bf16.msra.mxu0 0
      %558 = vmatprep.subr.bf16.mxu0 0
      %559 = vmatpush1.bf16.msra.mxu0 0
      %560 = vmatprep.subr.bf16.mxu0 0
      %561 = vmatpush1.bf16.msra.mxu0 0
      %562 = vmatprep.subr.bf16.mxu0 0
      %563 = vmatpush1.bf16.msra.mxu0 0
      %564 = vmatprep.subr.bf16.mxu0 0
      %565 = vmatpush1.bf16.msra.mxu0 0
      %566 = vmatprep.subr.bf16.mxu0 0
      %567 = vmatpush1.bf16.msra.mxu0 0
      %568 = vmatprep.subr.bf16.mxu0 0
      %569 = vmatpush1.bf16.msra.mxu0 0
      %570 = vmatprep.subr.bf16.mxu0 %v548
      %571 = vmatpush1.bf16.msra.mxu0 %v545
      %572 = vmatprep.subr.bf16.mxu0 0
      %573 = vmatpush2.bf16.msra.mxu0 0
      %574 = vmatprep.subr.bf16.mxu0 0
      %575 = vmatpush2.bf16.msra.mxu0 0
      %576 = vmatprep.subr.bf16.mxu0 0
      %577 = vmatpush2.bf16.msra.mxu0 0
      %578 = vmatprep.subr.bf16.mxu0 0
      %579 = vmatpush2.bf16.msra.mxu0 0
      %580 = vmatprep.subr.bf16.mxu0 0
      %581 = vmatpush2.bf16.msra.mxu0 0
      %582 = vmatprep.subr.bf16.mxu0 0
      %583 = vmatpush2.bf16.msra.mxu0 0
      %584 = vmatprep.subr.bf16.mxu0 0
      %585 = vmatpush2.bf16.msra.mxu0 0
      %586 = vmatprep.subr.bf16.mxu0 0
      %587 = vmatpush2.bf16.msra.mxu0 0
      %588 = vmatprep.mubr.bf16.mxu0 0
      %589 = vmatmul.mubr.bf16.gmra.mxu0 %v542
      %v590 = vpop.f32.mrf.mxu0
      %v591 = vadd.f32 %v479, %v590
      %v592 = vpop.f32.mrf.mxu0
      %v593 = vadd.f32 %v481, %v592
      %v594 = vpop.f32.mrf.mxu0
      %v595 = vpop.f32.mrf.mxu0
      %596 = vdwg.mxu0
      %597 = vmatprep.subr.bf16.mxu0 0
      %598 = vmatpush1.bf16.msra.mxu0 0
      %599 = vmatprep.subr.bf16.mxu0 0
      %600 = vmatpush1.bf16.msra.mxu0 0
      %601 = vmatprep.subr.bf16.mxu0 0
      %602 = vmatpush1.bf16.msra.mxu0 0
      %603 = vmatprep.subr.bf16.mxu0 0
      %604 = vmatpush1.bf16.msra.mxu0 0
      %605 = vmatprep.subr.bf16.mxu0 0
      %606 = vmatpush1.bf16.msra.mxu0 0
      %607 = vmatprep.subr.bf16.mxu0 0
      %608 = vmatpush1.bf16.msra.mxu0 0
      %609 = vmatprep.subr.bf16.mxu0 0
      %610 = vmatpush1.bf16.msra.mxu0 0
      %611 = vmatprep.subr.bf16.mxu0 %v554
      %612 = vmatpush1.bf16.msra.mxu0 %v551
      %613 = vmatprep.subr.bf16.mxu0 0
      %614 = vmatpush2.bf16.msra.mxu0 0
      %615 = vmatprep.subr.bf16.mxu0 0
      %616 = vmatpush2.bf16.msra.mxu0 0
      %617 = vmatprep.subr.bf16.mxu0 0
      %618 = vmatpush2.bf16.msra.mxu0 0
      %619 = vmatprep.subr.bf16.mxu0 0
      %620 = vmatpush2.bf16.msra.mxu0 0
      %621 = vmatprep.subr.bf16.mxu0 0
      %622 = vmatpush2.bf16.msra.mxu0 0
      %623 = vmatprep.subr.bf16.mxu0 0
      %624 = vmatpush2.bf16.msra.mxu0 0
      %625 = vmatprep.subr.bf16.mxu0 0
      %626 = vmatpush2.bf16.msra.mxu0 0
      %627 = vmatprep.subr.bf16.mxu0 0
      %628 = vmatpush2.bf16.msra.mxu0 0
      %629 = vmatprep.mubr.bf16.mxu0 0
      %630 = vmatmul.mubr.bf16.gmra.mxu0 %v542
      %v631 = vpop.f32.mrf.mxu0
      %v632 = vadd.f32 %v520, %v631
      %v633 = vpop.f32.mrf.mxu0
      %v634 = vadd.f32 %v522, %v633
      %v635 = vpop.f32.mrf.mxu0
      %v636 = vpop.f32.mrf.mxu0
      %637 = vdwg.mxu0
      %s638 = scalar_lea.vmem %s4, 8
      %v639 = vld [vmem:[%s638] sm:$0xf]
      %640 = vrot.lane.b32.xlu0 %v394, 17
      %v641 = vpop.permute.xlu0 %640
      %642 = vrot.lane.b32.xlu0 %v401, 17
      %v643 = vpop.permute.xlu0 %642
      %644 = vrot.lane.b32.xlu0 %v402, 17
      %v645 = vpop.permute.xlu0 %644
      %646 = vrot.lane.b32.xlu0 %v403, 17
      %v647 = vpop.permute.xlu0 %646
      %648 = vrot.lane.b32.xlu0 %v404, 17
      %v649 = vpop.permute.xlu0 %648
      %vm650 = vcmask 138240
      %v651 = vsel %vm650, %v641, %v643
      %v652 = vsel %vm650, %v643, %v645
      %v653 = vsel %vm650, %v645, %v647
      %v654 = vsel %vm650, %v647, %v649
      %v656 = vsel %vm427, %v639, 0
      %v659 = vsel %vm431, %v651, 0
      %v662 = vsel %vm431, %v652, 0
      %v665 = vsel %vm431, %v653, 0
      %v668 = vsel %vm431, %v654, 0
      %670 = vmatprep.subr.bf16.mxu0 0
      %671 = vmatpush1.bf16.msra.mxu0 0
      %672 = vmatprep.subr.bf16.mxu0 0
      %673 = vmatpush1.bf16.msra.mxu0 0
      %674 = vmatprep.subr.bf16.mxu0 0
      %675 = vmatpush1.bf16.msra.mxu0 0
      %676 = vmatprep.subr.bf16.mxu0 0
      %677 = vmatpush1.bf16.msra.mxu0 0
      %678 = vmatprep.subr.bf16.mxu0 0
      %679 = vmatpush1.bf16.msra.mxu0 0
      %680 = vmatprep.subr.bf16.mxu0 0
      %681 = vmatpush1.bf16.msra.mxu0 0
      %682 = vmatprep.subr.bf16.mxu0 0
      %683 = vmatpush1.bf16.msra.mxu0 0
      %684 = vmatprep.subr.bf16.mxu0 %v662
      %685 = vmatpush1.bf16.msra.mxu0 %v659
      %686 = vmatprep.subr.bf16.mxu0 0
      %687 = vmatpush2.bf16.msra.mxu0 0
      %688 = vmatprep.subr.bf16.mxu0 0
      %689 = vmatpush2.bf16.msra.mxu0 0
      %690 = vmatprep.subr.bf16.mxu0 0
      %691 = vmatpush2.bf16.msra.mxu0 0
      %692 = vmatprep.subr.bf16.mxu0 0
      %693 = vmatpush2.bf16.msra.mxu0 0
      %694 = vmatprep.subr.bf16.mxu0 0
      %695 = vmatpush2.bf16.msra.mxu0 0
      %696 = vmatprep.subr.bf16.mxu0 0
      %697 = vmatpush2.bf16.msra.mxu0 0
      %698 = vmatprep.subr.bf16.mxu0 0
      %699 = vmatpush2.bf16.msra.mxu0 0
      %700 = vmatprep.subr.bf16.mxu0 0
      %701 = vmatpush2.bf16.msra.mxu0 0
      %702 = vmatprep.mubr.bf16.mxu0 0
      %703 = vmatmul.mubr.bf16.gmra.mxu0 %v656
      %v704 = vpop.f32.mrf.mxu0
      %v705 = vadd.f32 0.0, %v704
      %v706 = vpop.f32.mrf.mxu0
      %v707 = vadd.f32 0.0, %v706
      %v708 = vpop.f32.mrf.mxu0
      %v709 = vpop.f32.mrf.mxu0
      %710 = vdwg.mxu0
      %711 = vmatprep.subr.bf16.mxu0 0
      %712 = vmatpush1.bf16.msra.mxu0 0
      %713 = vmatprep.subr.bf16.mxu0 0
      %714 = vmatpush1.bf16.msra.mxu0 0
      %715 = vmatprep.subr.bf16.mxu0 0
      %716 = vmatpush1.bf16.msra.mxu0 0
      %717 = vmatprep.subr.bf16.mxu0 0
      %718 = vmatpush1.bf16.msra.mxu0 0
      %719 = vmatprep.subr.bf16.mxu0 0
      %720 = vmatpush1.bf16.msra.mxu0 0
      %721 = vmatprep.subr.bf16.mxu0 0
      %722 = vmatpush1.bf16.msra.mxu0 0
      %723 = vmatprep.subr.bf16.mxu0 0
      %724 = vmatpush1.bf16.msra.mxu0 0
      %725 = vmatprep.subr.bf16.mxu0 %v668
      %726 = vmatpush1.bf16.msra.mxu0 %v665
      %727 = vmatprep.subr.bf16.mxu0 0
      %728 = vmatpush2.bf16.msra.mxu0 0
      %729 = vmatprep.subr.bf16.mxu0 0
      %730 = vmatpush2.bf16.msra.mxu0 0
      %731 = vmatprep.subr.bf16.mxu0 0
      %732 = vmatpush2.bf16.msra.mxu0 0
      %733 = vmatprep.subr.bf16.mxu0 0
      %734 = vmatpush2.bf16.msra.mxu0 0
      %735 = vmatprep.subr.bf16.mxu0 0
      %736 = vmatpush2.bf16.msra.mxu0 0
      %737 = vmatprep.subr.bf16.mxu0 0
      %738 = vmatpush2.bf16.msra.mxu0 0
      %739 = vmatprep.subr.bf16.mxu0 0
      %740 = vmatpush2.bf16.msra.mxu0 0
      %741 = vmatprep.subr.bf16.mxu0 0
      %742 = vmatpush2.bf16.msra.mxu0 0
      %743 = vmatprep.mubr.bf16.mxu0 0
      %744 = vmatmul.mubr.bf16.gmra.mxu0 %v656
      %v745 = vpop.f32.mrf.mxu0
      %v746 = vadd.f32 0.0, %v745
      %v747 = vpop.f32.mrf.mxu0
      %v748 = vadd.f32 0.0, %v747
      %v749 = vpop.f32.mrf.mxu0
      %v750 = vpop.f32.mrf.mxu0
      %751 = vdwg.mxu0
      %v752 = vadd.f32 %v591, %v705
      %v753 = vadd.f32 %v593, %v707
      %v754 = vadd.f32 %v632, %v746
      %v755 = vadd.f32 %v634, %v748
      %s756 = scalar_lea.vmem %s4, 12
      %v757 = vld [vmem:[%s756] sm:$0xf]
      %758 = vrot.lane.b32.xlu0 %v394, 1
      %v759 = vpop.permute.xlu0 %758
      %760 = vrot.lane.b32.xlu0 %v401, 1
      %v761 = vpop.permute.xlu0 %760
      %762 = vrot.lane.b32.xlu0 %v402, 1
      %v763 = vpop.permute.xlu0 %762
      %764 = vrot.lane.b32.xlu0 %v403, 1
      %v765 = vpop.permute.xlu0 %764
      %766 = vrot.lane.b32.xlu0 %v404, 1
      %v767 = vpop.permute.xlu0 %766
      %vm768 = vcmask 7168
      %v769 = vsel %vm768, %v759, %v761
      %v770 = vsel %vm768, %v761, %v763
      %v771 = vsel %vm768, %v763, %v765
      %v772 = vsel %vm768, %v765, %v767
      %v774 = vsel %vm427, %v757, 0
      %v777 = vsel %vm431, %v769, 0
      %v780 = vsel %vm431, %v770, 0
      %v783 = vsel %vm431, %v771, 0
      %v786 = vsel %vm431, %v772, 0
      %788 = vmatprep.subr.bf16.mxu0 0
      %789 = vmatpush1.bf16.msra.mxu0 0
      %790 = vmatprep.subr.bf16.mxu0 0
      %791 = vmatpush1.bf16.msra.mxu0 0
      %792 = vmatprep.subr.bf16.mxu0 0
      %793 = vmatpush1.bf16.msra.mxu0 0
      %794 = vmatprep.subr.bf16.mxu0 0
      %795 = vmatpush1.bf16.msra.mxu0 0
      %796 = vmatprep.subr.bf16.mxu0 0
      %797 = vmatpush1.bf16.msra.mxu0 0
      %798 = vmatprep.subr.bf16.mxu0 0
      %799 = vmatpush1.bf16.msra.mxu0 0
      %800 = vmatprep.subr.bf16.mxu0 0
      %801 = vmatpush1.bf16.msra.mxu0 0
      %802 = vmatprep.subr.bf16.mxu0 %v780
      %803 = vmatpush1.bf16.msra.mxu0 %v777
      %804 = vmatprep.subr.bf16.mxu0 0
      %805 = vmatpush2.bf16.msra.mxu0 0
      %806 = vmatprep.subr.bf16.mxu0 0
      %807 = vmatpush2.bf16.msra.mxu0 0
      %808 = vmatprep.subr.bf16.mxu0 0
      %809 = vmatpush2.bf16.msra.mxu0 0
      %810 = vmatprep.subr.bf16.mxu0 0
      %811 = vmatpush2.bf16.msra.mxu0 0
      %812 = vmatprep.subr.bf16.mxu0 0
      %813 = vmatpush2.bf16.msra.mxu0 0
      %814 = vmatprep.subr.bf16.mxu0 0
      %815 = vmatpush2.bf16.msra.mxu0 0
      %816 = vmatprep.subr.bf16.mxu0 0
      %817 = vmatpush2.bf16.msra.mxu0 0
      %818 = vmatprep.subr.bf16.mxu0 0
      %819 = vmatpush2.bf16.msra.mxu0 0
      %820 = vmatprep.mubr.bf16.mxu0 0
      %821 = vmatmul.mubr.bf16.gmra.mxu0 %v774
      %v822 = vpop.f32.mrf.mxu0
      %v823 = vadd.f32 0.0, %v822
      %v824 = vpop.f32.mrf.mxu0
      %v825 = vadd.f32 0.0, %v824
      %v826 = vpop.f32.mrf.mxu0
      %v827 = vpop.f32.mrf.mxu0
      %828 = vdwg.mxu0
      %829 = vmatprep.subr.bf16.mxu0 0
      %830 = vmatpush1.bf16.msra.mxu0 0
      %831 = vmatprep.subr.bf16.mxu0 0
      %832 = vmatpush1.bf16.msra.mxu0 0
      %833 = vmatprep.subr.bf16.mxu0 0
      %834 = vmatpush1.bf16.msra.mxu0 0
      %835 = vmatprep.subr.bf16.mxu0 0
      %836 = vmatpush1.bf16.msra.mxu0 0
      %837 = vmatprep.subr.bf16.mxu0 0
      %838 = vmatpush1.bf16.msra.mxu0 0
      %839 = vmatprep.subr.bf16.mxu0 0
      %840 = vmatpush1.bf16.msra.mxu0 0
      %841 = vmatprep.subr.bf16.mxu0 0
      %842 = vmatpush1.bf16.msra.mxu0 0
      %843 = vmatprep.subr.bf16.mxu0 %v786
      %844 = vmatpush1.bf16.msra.mxu0 %v783
      %845 = vmatprep.subr.bf16.mxu0 0
      %846 = vmatpush2.bf16.msra.mxu0 0
      %847 = vmatprep.subr.bf16.mxu0 0
      %848 = vmatpush2.bf16.msra.mxu0 0
      %849 = vmatprep.subr.bf16.mxu0 0
      %850 = vmatpush2.bf16.msra.mxu0 0
      %851 = vmatprep.subr.bf16.mxu0 0
      %852 = vmatpush2.bf16.msra.mxu0 0
      %853 = vmatprep.subr.bf16.mxu0 0
      %854 = vmatpush2.bf16.msra.mxu0 0
      %855 = vmatprep.subr.bf16.mxu0 0
      %856 = vmatpush2.bf16.msra.mxu0 0
      %857 = vmatprep.subr.bf16.mxu0 0
      %858 = vmatpush2.bf16.msra.mxu0 0
      %859 = vmatprep.subr.bf16.mxu0 0
      %860 = vmatpush2.bf16.msra.mxu0 0
      %861 = vmatprep.mubr.bf16.mxu0 0
      %862 = vmatmul.mubr.bf16.gmra.mxu0 %v774
      %v863 = vpop.f32.mrf.mxu0
      %v864 = vadd.f32 0.0, %v863
      %v865 = vpop.f32.mrf.mxu0
      %v866 = vadd.f32 0.0, %v865
      %v867 = vpop.f32.mrf.mxu0
      %v868 = vpop.f32.mrf.mxu0
      %869 = vdwg.mxu0
      %v870 = vadd.f32 %v752, %v823
      %v871 = vadd.f32 %v753, %v825
      %v872 = vadd.f32 %v754, %v864
      %v873 = vadd.f32 %v755, %v866
      %s874 = scalar_lea.vmem %s4, 16
      %v875 = vld [vmem:[%s874] sm:$0xf]
      %v877 = vsel %vm427, %v875, 0
      %v880 = vsel %vm431, %v401, 0
      %v883 = vsel %vm431, %v402, 0
      %v886 = vsel %vm431, %v403, 0
      %v889 = vsel %vm431, %v404, 0
      %891 = vmatprep.subr.bf16.mxu0 0
      %892 = vmatpush1.bf16.msra.mxu0 0
      %893 = vmatprep.subr.bf16.mxu0 0
      %894 = vmatpush1.bf16.msra.mxu0 0
      %895 = vmatprep.subr.bf16.mxu0 0
      %896 = vmatpush1.bf16.msra.mxu0 0
      %897 = vmatprep.subr.bf16.mxu0 0
      %898 = vmatpush1.bf16.msra.mxu0 0
      %899 = vmatprep.subr.bf16.mxu0 0
      %900 = vmatpush1.bf16.msra.mxu0 0
      %901 = vmatprep.subr.bf16.mxu0 0
      %902 = vmatpush1.bf16.msra.mxu0 0
      %903 = vmatprep.subr.bf16.mxu0 0
      %904 = vmatpush1.bf16.msra.mxu0 0
      %905 = vmatprep.subr.bf16.mxu0 %v883
      %906 = vmatpush1.bf16.msra.mxu0 %v880
      %907 = vmatprep.subr.bf16.mxu0 0
      %908 = vmatpush2.bf16.msra.mxu0 0
      %909 = vmatprep.subr.bf16.mxu0 0
      %910 = vmatpush2.bf16.msra.mxu0 0
      %911 = vmatprep.subr.bf16.mxu0 0
      %912 = vmatpush2.bf16.msra.mxu0 0
      %913 = vmatprep.subr.bf16.mxu0 0
      %914 = vmatpush2.bf16.msra.mxu0 0
      %915 = vmatprep.subr.bf16.mxu0 0
      %916 = vmatpush2.bf16.msra.mxu0 0
      %917 = vmatprep.subr.bf16.mxu0 0
      %918 = vmatpush2.bf16.msra.mxu0 0
      %919 = vmatprep.subr.bf16.mxu0 0
      %920 = vmatpush2.bf16.msra.mxu0 0
      %921 = vmatprep.subr.bf16.mxu0 0
      %922 = vmatpush2.bf16.msra.mxu0 0
      %923 = vmatprep.mubr.bf16.mxu0 0
      %924 = vmatmul.mubr.bf16.gmra.mxu0 %v877
      %v925 = vpop.f32.mrf.mxu0
      %v926 = vadd.f32 0.0, %v925
      %v927 = vpop.f32.mrf.mxu0
      %v928 = vadd.f32 0.0, %v927
      %v929 = vpop.f32.mrf.mxu0
      %v930 = vpop.f32.mrf.mxu0
      %931 = vdwg.mxu0
      %932 = vmatprep.subr.bf16.mxu0 0
      %933 = vmatpush1.bf16.msra.mxu0 0
      %934 = vmatprep.subr.bf16.mxu0 0
      %935 = vmatpush1.bf16.msra.mxu0 0
      %936 = vmatprep.subr.bf16.mxu0 0
      %937 = vmatpush1.bf16.msra.mxu0 0
      %938 = vmatprep.subr.bf16.mxu0 0
      %939 = vmatpush1.bf16.msra.mxu0 0
      %940 = vmatprep.subr.bf16.mxu0 0
      %941 = vmatpush1.bf16.msra.mxu0 0
      %942 = vmatprep.subr.bf16.mxu0 0
      %943 = vmatpush1.bf16.msra.mxu0 0
      %944 = vmatprep.subr.bf16.mxu0 0
      %945 = vmatpush1.bf16.msra.mxu0 0
      %946 = vmatprep.subr.bf16.mxu0 %v889
      %947 = vmatpush1.bf16.msra.mxu0 %v886
      %948 = vmatprep.subr.bf16.mxu0 0
      %949 = vmatpush2.bf16.msra.mxu0 0
      %950 = vmatprep.subr.bf16.mxu0 0
      %951 = vmatpush2.bf16.msra.mxu0 0
      %952 = vmatprep.subr.bf16.mxu0 0
      %953 = vmatpush2.bf16.msra.mxu0 0
      %954 = vmatprep.subr.bf16.mxu0 0
      %955 = vmatpush2.bf16.msra.mxu0 0
      %956 = vmatprep.subr.bf16.mxu0 0
      %957 = vmatpush2.bf16.msra.mxu0 0
      %958 = vmatprep.subr.bf16.mxu0 0
      %959 = vmatpush2.bf16.msra.mxu0 0
      %960 = vmatprep.subr.bf16.mxu0 0
      %961 = vmatpush2.bf16.msra.mxu0 0
      %962 = vmatprep.subr.bf16.mxu0 0
      %963 = vmatpush2.bf16.msra.mxu0 0
      %964 = vmatprep.mubr.bf16.mxu0 0
      %965 = vmatmul.mubr.bf16.gmra.mxu0 %v877
      %v966 = vpop.f32.mrf.mxu0
      %v967 = vadd.f32 0.0, %v966
      %v968 = vpop.f32.mrf.mxu0
      %v969 = vadd.f32 0.0, %v968
      %v970 = vpop.f32.mrf.mxu0
      %v971 = vpop.f32.mrf.mxu0
      %972 = vdwg.mxu0
      %v973 = vadd.f32 %v870, %v926
      %v974 = vadd.f32 %v871, %v928
      %v975 = vadd.f32 %v872, %v967
      %v976 = vadd.f32 %v873, %v969
      %s977 = scalar_lea.vmem %s4, 20
      %v978 = vld [vmem:[%s977] sm:$0xf]
      %979 = vrot.lane.b32.xlu0 %v401, 127
      %v980 = vpop.permute.xlu0 %979
      %981 = vrot.lane.b32.xlu0 %v402, 127
      %v982 = vpop.permute.xlu0 %981
      %983 = vrot.lane.b32.xlu0 %v403, 127
      %v984 = vpop.permute.xlu0 %983
      %985 = vrot.lane.b32.xlu0 %v404, 127
      %v986 = vpop.permute.xlu0 %985
      %987 = vrot.lane.b32.xlu0 %v407, 127
      %v988 = vpop.permute.xlu0 %987
      %vm989 = vcmask 1039360
      %v990 = vsel %vm989, %v980, %v982
      %v991 = vsel %vm989, %v982, %v984
      %v992 = vsel %vm989, %v984, %v986
      %v993 = vsel %vm989, %v986, %v988
      %v995 = vsel %vm427, %v978, 0
      %v998 = vsel %vm431, %v990, 0
      %v1001 = vsel %vm431, %v991, 0
      %v1004 = vsel %vm431, %v992, 0
      %v1007 = vsel %vm431, %v993, 0
      %1009 = vmatprep.subr.bf16.mxu0 0
      %1010 = vmatpush1.bf16.msra.mxu0 0
      %1011 = vmatprep.subr.bf16.mxu0 0
      %1012 = vmatpush1.bf16.msra.mxu0 0
      %1013 = vmatprep.subr.bf16.mxu0 0
      %1014 = vmatpush1.bf16.msra.mxu0 0
      %1015 = vmatprep.subr.bf16.mxu0 0
      %1016 = vmatpush1.bf16.msra.mxu0 0
      %1017 = vmatprep.subr.bf16.mxu0 0
      %1018 = vmatpush1.bf16.msra.mxu0 0
      %1019 = vmatprep.subr.bf16.mxu0 0
      %1020 = vmatpush1.bf16.msra.mxu0 0
      %1021 = vmatprep.subr.bf16.mxu0 0
      %1022 = vmatpush1.bf16.msra.mxu0 0
      %1023 = vmatprep.subr.bf16.mxu0 %v1001
      %1024 = vmatpush1.bf16.msra.mxu0 %v998
      %1025 = vmatprep.subr.bf16.mxu0 0
      %1026 = vmatpush2.bf16.msra.mxu0 0
      %1027 = vmatprep.subr.bf16.mxu0 0
      %1028 = vmatpush2.bf16.msra.mxu0 0
      %1029 = vmatprep.subr.bf16.mxu0 0
      %1030 = vmatpush2.bf16.msra.mxu0 0
      %1031 = vmatprep.subr.bf16.mxu0 0
      %1032 = vmatpush2.bf16.msra.mxu0 0
      %1033 = vmatprep.subr.bf16.mxu0 0
      %1034 = vmatpush2.bf16.msra.mxu0 0
      %1035 = vmatprep.subr.bf16.mxu0 0
      %1036 = vmatpush2.bf16.msra.mxu0 0
      %1037 = vmatprep.subr.bf16.mxu0 0
      %1038 = vmatpush2.bf16.msra.mxu0 0
      %1039 = vmatprep.subr.bf16.mxu0 0
      %1040 = vmatpush2.bf16.msra.mxu0 0
      %1041 = vmatprep.mubr.bf16.mxu0 0
      %1042 = vmatmul.mubr.bf16.gmra.mxu0 %v995
      %v1043 = vpop.f32.mrf.mxu0
      %v1044 = vadd.f32 0.0, %v1043
      %v1045 = vpop.f32.mrf.mxu0
      %v1046 = vadd.f32 0.0, %v1045
      %v1047 = vpop.f32.mrf.mxu0
      %v1048 = vpop.f32.mrf.mxu0
      %1049 = vdwg.mxu0
      %1050 = vmatprep.subr.bf16.mxu0 0
      %1051 = vmatpush1.bf16.msra.mxu0 0
      %1052 = vmatprep.subr.bf16.mxu0 0
      %1053 = vmatpush1.bf16.msra.mxu0 0
      %1054 = vmatprep.subr.bf16.mxu0 0
      %1055 = vmatpush1.bf16.msra.mxu0 0
      %1056 = vmatprep.subr.bf16.mxu0 0
      %1057 = vmatpush1.bf16.msra.mxu0 0
      %1058 = vmatprep.subr.bf16.mxu0 0
      %1059 = vmatpush1.bf16.msra.mxu0 0
      %1060 = vmatprep.subr.bf16.mxu0 0
      %1061 = vmatpush1.bf16.msra.mxu0 0
      %1062 = vmatprep.subr.bf16.mxu0 0
      %1063 = vmatpush1.bf16.msra.mxu0 0
      %1064 = vmatprep.subr.bf16.mxu0 %v1007
      %1065 = vmatpush1.bf16.msra.mxu0 %v1004
      %1066 = vmatprep.subr.bf16.mxu0 0
      %1067 = vmatpush2.bf16.msra.mxu0 0
      %1068 = vmatprep.subr.bf16.mxu0 0
      %1069 = vmatpush2.bf16.msra.mxu0 0
      %1070 = vmatprep.subr.bf16.mxu0 0
      %1071 = vmatpush2.bf16.msra.mxu0 0
      %1072 = vmatprep.subr.bf16.mxu0 0
      %1073 = vmatpush2.bf16.msra.mxu0 0
      %1074 = vmatprep.subr.bf16.mxu0 0
      %1075 = vmatpush2.bf16.msra.mxu0 0
      %1076 = vmatprep.subr.bf16.mxu0 0
      %1077 = vmatpush2.bf16.msra.mxu0 0
      %1078 = vmatprep.subr.bf16.mxu0 0
      %1079 = vmatpush2.bf16.msra.mxu0 0
      %1080 = vmatprep.subr.bf16.mxu0 0
      %1081 = vmatpush2.bf16.msra.mxu0 0
      %1082 = vmatprep.mubr.bf16.mxu0 0
      %1083 = vmatmul.mubr.bf16.gmra.mxu0 %v995
      %v1084 = vpop.f32.mrf.mxu0
      %v1085 = vadd.f32 0.0, %v1084
      %v1086 = vpop.f32.mrf.mxu0
      %v1087 = vadd.f32 0.0, %v1086
      %v1088 = vpop.f32.mrf.mxu0
      %v1089 = vpop.f32.mrf.mxu0
      %1090 = vdwg.mxu0
      %v1091 = vadd.f32 %v973, %v1044
      %v1092 = vadd.f32 %v974, %v1046
      %v1093 = vadd.f32 %v975, %v1085
      %v1094 = vadd.f32 %v976, %v1087
      %s1095 = scalar_lea.vmem %s4, 24
      %v1096 = vld [vmem:[%s1095] sm:$0xf]
      %1097 = vrot.lane.b32.xlu0 %v401, 111
      %v1098 = vpop.permute.xlu0 %1097
      %1099 = vrot.lane.b32.xlu0 %v402, 111
      %v1100 = vpop.permute.xlu0 %1099
      %1101 = vrot.lane.b32.xlu0 %v403, 111
      %v1102 = vpop.permute.xlu0 %1101
      %1103 = vrot.lane.b32.xlu0 %v404, 111
      %v1104 = vpop.permute.xlu0 %1103
      %1105 = vrot.lane.b32.xlu0 %v407, 111
      %v1106 = vpop.permute.xlu0 %1105
      %vm1107 = vcmask 908288
      %v1108 = vsel %vm1107, %v1098, %v1100
      %v1109 = vsel %vm1107, %v1100, %v1102
      %v1110 = vsel %vm1107, %v1102, %v1104
      %v1111 = vsel %vm1107, %v1104, %v1106
      %v1113 = vsel %vm427, %v1096, 0
      %v1116 = vsel %vm431, %v1108, 0
      %v1119 = vsel %vm431, %v1109, 0
      %v1122 = vsel %vm431, %v1110, 0
      %v1125 = vsel %vm431, %v1111, 0
      %1127 = vmatprep.subr.bf16.mxu0 0
      %1128 = vmatpush1.bf16.msra.mxu0 0
      %1129 = vmatprep.subr.bf16.mxu0 0
      %1130 = vmatpush1.bf16.msra.mxu0 0
      %1131 = vmatprep.subr.bf16.mxu0 0
      %1132 = vmatpush1.bf16.msra.mxu0 0
      %1133 = vmatprep.subr.bf16.mxu0 0
      %1134 = vmatpush1.bf16.msra.mxu0 0
      %1135 = vmatprep.subr.bf16.mxu0 0
      %1136 = vmatpush1.bf16.msra.mxu0 0
      %1137 = vmatprep.subr.bf16.mxu0 0
      %1138 = vmatpush1.bf16.msra.mxu0 0
      %1139 = vmatprep.subr.bf16.mxu0 0
      %1140 = vmatpush1.bf16.msra.mxu0 0
      %1141 = vmatprep.subr.bf16.mxu0 %v1119
      %1142 = vmatpush1.bf16.msra.mxu0 %v1116
      %1143 = vmatprep.subr.bf16.mxu0 0
      %1144 = vmatpush2.bf16.msra.mxu0 0
      %1145 = vmatprep.subr.bf16.mxu0 0
      %1146 = vmatpush2.bf16.msra.mxu0 0
      %1147 = vmatprep.subr.bf16.mxu0 0
      %1148 = vmatpush2.bf16.msra.mxu0 0
      %1149 = vmatprep.subr.bf16.mxu0 0
      %1150 = vmatpush2.bf16.msra.mxu0 0
      %1151 = vmatprep.subr.bf16.mxu0 0
      %1152 = vmatpush2.bf16.msra.mxu0 0
      %1153 = vmatprep.subr.bf16.mxu0 0
      %1154 = vmatpush2.bf16.msra.mxu0 0
      %1155 = vmatprep.subr.bf16.mxu0 0
      %1156 = vmatpush2.bf16.msra.mxu0 0
      %1157 = vmatprep.subr.bf16.mxu0 0
      %1158 = vmatpush2.bf16.msra.mxu0 0
      %1159 = vmatprep.mubr.bf16.mxu0 0
      %1160 = vmatmul.mubr.bf16.gmra.mxu0 %v1113
      %v1161 = vpop.f32.mrf.mxu0
      %v1162 = vadd.f32 0.0, %v1161
      %v1163 = vpop.f32.mrf.mxu0
      %v1164 = vadd.f32 0.0, %v1163
      %v1165 = vpop.f32.mrf.mxu0
      %v1166 = vpop.f32.mrf.mxu0
      %1167 = vdwg.mxu0
      %1168 = vmatprep.subr.bf16.mxu0 0
      %1169 = vmatpush1.bf16.msra.mxu0 0
      %1170 = vmatprep.subr.bf16.mxu0 0
      %1171 = vmatpush1.bf16.msra.mxu0 0
      %1172 = vmatprep.subr.bf16.mxu0 0
      %1173 = vmatpush1.bf16.msra.mxu0 0
      %1174 = vmatprep.subr.bf16.mxu0 0
      %1175 = vmatpush1.bf16.msra.mxu0 0
      %1176 = vmatprep.subr.bf16.mxu0 0
      %1177 = vmatpush1.bf16.msra.mxu0 0
      %1178 = vmatprep.subr.bf16.mxu0 0
      %1179 = vmatpush1.bf16.msra.mxu0 0
      %1180 = vmatprep.subr.bf16.mxu0 0
      %1181 = vmatpush1.bf16.msra.mxu0 0
      %1182 = vmatprep.subr.bf16.mxu0 %v1125
      %1183 = vmatpush1.bf16.msra.mxu0 %v1122
      %1184 = vmatprep.subr.bf16.mxu0 0
      %1185 = vmatpush2.bf16.msra.mxu0 0
      %1186 = vmatprep.subr.bf16.mxu0 0
      %1187 = vmatpush2.bf16.msra.mxu0 0
      %1188 = vmatprep.subr.bf16.mxu0 0
      %1189 = vmatpush2.bf16.msra.mxu0 0
      %1190 = vmatprep.subr.bf16.mxu0 0
      %1191 = vmatpush2.bf16.msra.mxu0 0
      %1192 = vmatprep.subr.bf16.mxu0 0
      %1193 = vmatpush2.bf16.msra.mxu0 0
      %1194 = vmatprep.subr.bf16.mxu0 0
      %1195 = vmatpush2.bf16.msra.mxu0 0
      %1196 = vmatprep.subr.bf16.mxu0 0
      %1197 = vmatpush2.bf16.msra.mxu0 0
      %1198 = vmatprep.subr.bf16.mxu0 0
      %1199 = vmatpush2.bf16.msra.mxu0 0
      %1200 = vmatprep.mubr.bf16.mxu0 0
      %1201 = vmatmul.mubr.bf16.gmra.mxu0 %v1113
      %v1202 = vpop.f32.mrf.mxu0
      %v1203 = vadd.f32 0.0, %v1202
      %v1204 = vpop.f32.mrf.mxu0
      %v1205 = vadd.f32 0.0, %v1204
      %v1206 = vpop.f32.mrf.mxu0
      %v1207 = vpop.f32.mrf.mxu0
      %1208 = vdwg.mxu0
      %v1209 = vadd.f32 %v1091, %v1162
      %v1210 = vadd.f32 %v1092, %v1164
      %v1211 = vadd.f32 %v1093, %v1203
      %v1212 = vadd.f32 %v1094, %v1205
      %s1213 = scalar_lea.vmem %s4, 28
      %v1214 = vld [vmem:[%s1213] sm:$0xf]
      %1215 = vrot.lane.b32.xlu0 %v401, 110
      %v1216 = vpop.permute.xlu0 %1215
      %1217 = vrot.lane.b32.xlu0 %v402, 110
      %v1218 = vpop.permute.xlu0 %1217
      %1219 = vrot.lane.b32.xlu0 %v403, 110
      %v1220 = vpop.permute.xlu0 %1219
      %1221 = vrot.lane.b32.xlu0 %v404, 110
      %v1222 = vpop.permute.xlu0 %1221
      %1223 = vrot.lane.b32.xlu0 %v407, 110
      %v1224 = vpop.permute.xlu0 %1223
      %vm1225 = vcmask 900096
      %v1226 = vsel %vm1225, %v1216, %v1218
      %v1227 = vsel %vm1225, %v1218, %v1220
      %v1228 = vsel %vm1225, %v1220, %v1222
      %v1229 = vsel %vm1225, %v1222, %v1224
      %v1231 = vsel %vm427, %v1214, 0
      %v1234 = vsel %vm431, %v1226, 0
      %v1237 = vsel %vm431, %v1227, 0
      %v1240 = vsel %vm431, %v1228, 0
      %v1243 = vsel %vm431, %v1229, 0
      %1245 = vmatprep.subr.bf16.mxu0 0
      %1246 = vmatpush1.bf16.msra.mxu0 0
      %1247 = vmatprep.subr.bf16.mxu0 0
      %1248 = vmatpush1.bf16.msra.mxu0 0
      %1249 = vmatprep.subr.bf16.mxu0 0
      %1250 = vmatpush1.bf16.msra.mxu0 0
      %1251 = vmatprep.subr.bf16.mxu0 0
      %1252 = vmatpush1.bf16.msra.mxu0 0
      %1253 = vmatprep.subr.bf16.mxu0 0
      %1254 = vmatpush1.bf16.msra.mxu0 0
      %1255 = vmatprep.subr.bf16.mxu0 0
      %1256 = vmatpush1.bf16.msra.mxu0 0
      %1257 = vmatprep.subr.bf16.mxu0 0
      %1258 = vmatpush1.bf16.msra.mxu0 0
      %1259 = vmatprep.subr.bf16.mxu0 %v1237
      %1260 = vmatpush1.bf16.msra.mxu0 %v1234
      %1261 = vmatprep.subr.bf16.mxu0 0
      %1262 = vmatpush2.bf16.msra.mxu0 0
      %1263 = vmatprep.subr.bf16.mxu0 0
      %1264 = vmatpush2.bf16.msra.mxu0 0
      %1265 = vmatprep.subr.bf16.mxu0 0
      %1266 = vmatpush2.bf16.msra.mxu0 0
      %1267 = vmatprep.subr.bf16.mxu0 0
      %1268 = vmatpush2.bf16.msra.mxu0 0
      %1269 = vmatprep.subr.bf16.mxu0 0
      %1270 = vmatpush2.bf16.msra.mxu0 0
      %1271 = vmatprep.subr.bf16.mxu0 0
      %1272 = vmatpush2.bf16.msra.mxu0 0
      %1273 = vmatprep.subr.bf16.mxu0 0
      %1274 = vmatpush2.bf16.msra.mxu0 0
      %1275 = vmatprep.subr.bf16.mxu0 0
      %1276 = vmatpush2.bf16.msra.mxu0 0
      %1277 = vmatprep.mubr.bf16.mxu0 0
      %1278 = vmatmul.mubr.bf16.gmra.mxu0 %v1231
      %v1279 = vpop.f32.mrf.mxu0
      %v1280 = vadd.f32 0.0, %v1279
      %v1281 = vpop.f32.mrf.mxu0
      %v1282 = vadd.f32 0.0, %v1281
      %v1283 = vpop.f32.mrf.mxu0
      %v1284 = vpop.f32.mrf.mxu0
      %1285 = vdwg.mxu0
      %1286 = vmatprep.subr.bf16.mxu0 0
      %1287 = vmatpush1.bf16.msra.mxu0 0
      %1288 = vmatprep.subr.bf16.mxu0 0
      %1289 = vmatpush1.bf16.msra.mxu0 0
      %1290 = vmatprep.subr.bf16.mxu0 0
      %1291 = vmatpush1.bf16.msra.mxu0 0
      %1292 = vmatprep.subr.bf16.mxu0 0
      %1293 = vmatpush1.bf16.msra.mxu0 0
      %1294 = vmatprep.subr.bf16.mxu0 0
      %1295 = vmatpush1.bf16.msra.mxu0 0
      %1296 = vmatprep.subr.bf16.mxu0 0
      %1297 = vmatpush1.bf16.msra.mxu0 0
      %1298 = vmatprep.subr.bf16.mxu0 0
      %1299 = vmatpush1.bf16.msra.mxu0 0
      %1300 = vmatprep.subr.bf16.mxu0 %v1243
      %1301 = vmatpush1.bf16.msra.mxu0 %v1240
      %1302 = vmatprep.subr.bf16.mxu0 0
      %1303 = vmatpush2.bf16.msra.mxu0 0
      %1304 = vmatprep.subr.bf16.mxu0 0
      %1305 = vmatpush2.bf16.msra.mxu0 0
      %1306 = vmatprep.subr.bf16.mxu0 0
      %1307 = vmatpush2.bf16.msra.mxu0 0
      %1308 = vmatprep.subr.bf16.mxu0 0
      %1309 = vmatpush2.bf16.msra.mxu0 0
      %1310 = vmatprep.subr.bf16.mxu0 0
      %1311 = vmatpush2.bf16.msra.mxu0 0
      %1312 = vmatprep.subr.bf16.mxu0 0
      %1313 = vmatpush2.bf16.msra.mxu0 0
      %1314 = vmatprep.subr.bf16.mxu0 0
      %1315 = vmatpush2.bf16.msra.mxu0 0
      %1316 = vmatprep.subr.bf16.mxu0 0
      %1317 = vmatpush2.bf16.msra.mxu0 0
      %1318 = vmatprep.mubr.bf16.mxu0 0
      %1319 = vmatmul.mubr.bf16.gmra.mxu0 %v1231
      %v1320 = vpop.f32.mrf.mxu0
      %v1321 = vadd.f32 0.0, %v1320
      %v1322 = vpop.f32.mrf.mxu0
      %v1323 = vadd.f32 0.0, %v1322
      %v1324 = vpop.f32.mrf.mxu0
      %v1325 = vpop.f32.mrf.mxu0
      %1326 = vdwg.mxu0
      %v1327 = vadd.f32 %v1209, %v1280
      %v1328 = vadd.f32 %v1210, %v1282
      %v1329 = vadd.f32 %v1211, %v1321
      %v1330 = vadd.f32 %v1212, %v1323
      %s1331 = scalar_lea.vmem %s4, 32
      %v1332 = vld [vmem:[%s1331] sm:$0xf]
      %1333 = vrot.lane.b32.xlu0 %v401, 109
      %v1334 = vpop.permute.xlu0 %1333
      %1335 = vrot.lane.b32.xlu0 %v402, 109
      %v1336 = vpop.permute.xlu0 %1335
      %1337 = vrot.lane.b32.xlu0 %v403, 109
      %v1338 = vpop.permute.xlu0 %1337
      %1339 = vrot.lane.b32.xlu0 %v404, 109
      %v1340 = vpop.permute.xlu0 %1339
      %1341 = vrot.lane.b32.xlu0 %v407, 109
      %v1342 = vpop.permute.xlu0 %1341
      %vm1343 = vcmask 891904
      %v1344 = vsel %vm1343, %v1334, %v1336
      %v1345 = vsel %vm1343, %v1336, %v1338
      %v1346 = vsel %vm1343, %v1338, %v1340
      %v1347 = vsel %vm1343, %v1340, %v1342
      %v1349 = vsel %vm427, %v1332, 0
      %v1352 = vsel %vm431, %v1344, 0
      %v1355 = vsel %vm431, %v1345, 0
      %v1358 = vsel %vm431, %v1346, 0
      %v1361 = vsel %vm431, %v1347, 0
      %1363 = vmatprep.subr.bf16.mxu0 0
      %1364 = vmatpush1.bf16.msra.mxu0 0
      %1365 = vmatprep.subr.bf16.mxu0 0
      %1366 = vmatpush1.bf16.msra.mxu0 0
      %1367 = vmatprep.subr.bf16.mxu0 0
      %1368 = vmatpush1.bf16.msra.mxu0 0
      %1369 = vmatprep.subr.bf16.mxu0 0
      %1370 = vmatpush1.bf16.msra.mxu0 0
      %1371 = vmatprep.subr.bf16.mxu0 0
      %1372 = vmatpush1.bf16.msra.mxu0 0
      %1373 = vmatprep.subr.bf16.mxu0 0
      %1374 = vmatpush1.bf16.msra.mxu0 0
      %1375 = vmatprep.subr.bf16.mxu0 0
      %1376 = vmatpush1.bf16.msra.mxu0 0
      %1377 = vmatprep.subr.bf16.mxu0 %v1355
      %1378 = vmatpush1.bf16.msra.mxu0 %v1352
      %1379 = vmatprep.subr.bf16.mxu0 0
      %1380 = vmatpush2.bf16.msra.mxu0 0
      %1381 = vmatprep.subr.bf16.mxu0 0
      %1382 = vmatpush2.bf16.msra.mxu0 0
      %1383 = vmatprep.subr.bf16.mxu0 0
      %1384 = vmatpush2.bf16.msra.mxu0 0
      %1385 = vmatprep.subr.bf16.mxu0 0
      %1386 = vmatpush2.bf16.msra.mxu0 0
      %1387 = vmatprep.subr.bf16.mxu0 0
      %1388 = vmatpush2.bf16.msra.mxu0 0
      %1389 = vmatprep.subr.bf16.mxu0 0
      %1390 = vmatpush2.bf16.msra.mxu0 0
      %1391 = vmatprep.subr.bf16.mxu0 0
      %1392 = vmatpush2.bf16.msra.mxu0 0
      %1393 = vmatprep.subr.bf16.mxu0 0
      %1394 = vmatpush2.bf16.msra.mxu0 0
      %1395 = vmatprep.mubr.bf16.mxu0 0
      %1396 = vmatmul.mubr.bf16.gmra.mxu0 %v1349
      %v1397 = vpop.f32.mrf.mxu0
      %v1398 = vadd.f32 0.0, %v1397
      %v1399 = vpop.f32.mrf.mxu0
      %v1400 = vadd.f32 0.0, %v1399
      %v1401 = vpop.f32.mrf.mxu0
      %v1402 = vpop.f32.mrf.mxu0
      %1403 = vdwg.mxu0
      %1404 = vmatprep.subr.bf16.mxu0 0
      %1405 = vmatpush1.bf16.msra.mxu0 0
      %1406 = vmatprep.subr.bf16.mxu0 0
      %1407 = vmatpush1.bf16.msra.mxu0 0
      %1408 = vmatprep.subr.bf16.mxu0 0
      %1409 = vmatpush1.bf16.msra.mxu0 0
      %1410 = vmatprep.subr.bf16.mxu0 0
      %1411 = vmatpush1.bf16.msra.mxu0 0
      %1412 = vmatprep.subr.bf16.mxu0 0
      %1413 = vmatpush1.bf16.msra.mxu0 0
      %1414 = vmatprep.subr.bf16.mxu0 0
      %1415 = vmatpush1.bf16.msra.mxu0 0
      %1416 = vmatprep.subr.bf16.mxu0 0
      %1417 = vmatpush1.bf16.msra.mxu0 0
      %1418 = vmatprep.subr.bf16.mxu0 %v1361
      %1419 = vmatpush1.bf16.msra.mxu0 %v1358
      %1420 = vmatprep.subr.bf16.mxu0 0
      %1421 = vmatpush2.bf16.msra.mxu0 0
      %1422 = vmatprep.subr.bf16.mxu0 0
      %1423 = vmatpush2.bf16.msra.mxu0 0
      %1424 = vmatprep.subr.bf16.mxu0 0
      %1425 = vmatpush2.bf16.msra.mxu0 0
      %1426 = vmatprep.subr.bf16.mxu0 0
      %1427 = vmatpush2.bf16.msra.mxu0 0
      %1428 = vmatprep.subr.bf16.mxu0 0
      %1429 = vmatpush2.bf16.msra.mxu0 0
      %1430 = vmatprep.subr.bf16.mxu0 0
      %1431 = vmatpush2.bf16.msra.mxu0 0
      %1432 = vmatprep.subr.bf16.mxu0 0
      %1433 = vmatpush2.bf16.msra.mxu0 0
      %1434 = vmatprep.subr.bf16.mxu0 0
      %1435 = vmatpush2.bf16.msra.mxu0 0
      %1436 = vmatprep.mubr.bf16.mxu0 0
      %1437 = vmatmul.mubr.bf16.gmra.mxu0 %v1349
      %v1438 = vpop.f32.mrf.mxu0
      %v1439 = vadd.f32 0.0, %v1438
      %v1440 = vpop.f32.mrf.mxu0
      %v1441 = vadd.f32 0.0, %v1440
      %v1442 = vpop.f32.mrf.mxu0
      %v1443 = vpop.f32.mrf.mxu0
      %1444 = vdwg.mxu0
      %v1445 = vadd.f32 %v1327, %v1398
      %v1446 = vadd.f32 %v1328, %v1400
      %v1447 = vadd.f32 %v1329, %v1439
      %v1448 = vadd.f32 %v1330, %v1441
      %v1449 = vpack.c.bf16 %v1445, %v1445
      %v1450 = vpack.c.bf16 %v1446, %v1446
      %v1451 = vpack.c.bf16 %v1447, %v1447
      %v1452 = vpack.c.bf16 %v1448, %v1448
      %v1457 = vunpack.c.l.b16 %v1449
      %v1458 = vunpack.c.l.b16 %v1450
      %v1459 = vunpack.c.l.b16 %v1451
      %v1460 = vunpack.c.l.b16 %v1452
      %v1461 = vpack.c.b16 %v1458, %v1457
      %v1462 = vpack.c.b16 %v1460, %v1459
      %1465 = vst [vmem:[%s377] sm:$0xff] %v1461
      %1466 = vst [vmem:[%s377 + $0x8] sm:$0xff] %v1462
      %v1468 = vlaneseq
      %v1469 = vshrl.u32 %v1468, 7
      %v1470 = vsub.s32 0, %v1469
      %v1471 = vrot.slane %v408, %v1470
      %v1472 = vlaneseq
      %v1473 = vshrl.u32 %v1472, 7
      %v1474 = vsub.s32 1, %v1473
      %v1475 = vrot.slane %v408, %v1474
      %v1476 = vlaneseq
      %v1477 = vshrl.u32 %v1476, 7
      %v1478 = vsub.s32 2, %v1477
      %v1479 = vrot.slane %v408, %v1478
      %v1480 = vlaneseq
      %v1481 = vshrl.u32 %v1480, 7
      %v1482 = vsub.s32 3, %v1481
      %v1483 = vrot.slane %v408, %v1482
      %v1488 = vmul.f32 %v1445, %v1471
      %v1489 = vmul.f32 %v1446, %v1475
      %v1490 = vmul.f32 %v1447, %v1479
      %v1491 = vmul.f32 %v1448, %v1483
      %v1492 = vadd.f32 %v1488, %v1489
      %v1493 = vadd.f32 %v1492, %v1490
      %v1494 = vadd.f32 %v1493, %v1491
      %1495 = vadd.xlane.f32.xlu0 %v1494
      %v1496 = vpop.xlane.xlu0 %1495
      %vm1497 = vcmask 7168
      %1498 = vst.msk [vmem:[%s382] sm:$0xff] %vm1497, %v1496
      %v1499 = vmul.f32 %v1488, %v1488
      %v1500 = vmul.f32 %v1489, %v1489
      %v1501 = vmul.f32 %v1490, %v1490
      %v1502 = vmul.f32 %v1491, %v1491
      %v1503 = vadd.f32 %v1499, %v1500
      %v1504 = vadd.f32 %v1503, %v1501
      %v1505 = vadd.f32 %v1504, %v1502
      %1506 = vadd.xlane.f32.xlu0 %v1505
      %v1507 = vpop.xlane.xlu0 %1506
      %1508 = vst.msk [vmem:[%s386] sm:$0xff] %vm1497, %v1507
      %s1509 = smul.u32 4, %s19
      %p1510 = scmp.lt.s32.totalorder %s1509, 7
      %s1511 = scalar_select %p1510, %s1509, 7
      %s1512 = smul.addr %s1511, 4
      %s1513 = scalar_lea.vmem %s5, %s1512
      %p1514 = scmp.lt.s32.totalorder %s19, 1
      %s1515 = scalar_select %p1514, %s19, 1
      %s1516 = smul.addr %s1515, 8
      %s1517 = scalar_lea.vmem %s6, %s1516
      %p1518 = scmp.lt.s32.totalorder %s19, 1
      %s1519 = scalar_select %p1518, %s19, 1
      %s1520 = smul.addr %s1519, 8
      %s1521 = scalar_lea.vmem %s7, %s1520
      // Predicated region
      $region41: #{resnet_block_forward.3} parent=39 // pred_check
        %p1522 = pneg %p168
      $region42: #{resnet_block_forward.3} parent=39 // pred_check_branch
        %1524 = sbr.rel (%p1522) target = $region44
      $region43: #{resnet_block_forward.3} parent=39 // pred_region
        %s1525 = smul.u32 4, %s19
      $region44: #{resnet_block_forward.3} parent=39 // pred_fallthru
        _
      // Predicated region
      $region45: #{resnet_block_forward.3} parent=39 // pred_check
        %p1526 = pneg %p194
      $region46: #{resnet_block_forward.3} parent=39 // pred_check_branch
        %1528 = sbr.rel (%p1526) target = $region48
      $region47: #{resnet_block_forward.3} parent=39 // pred_region
        _
      $region48: #{resnet_block_forward.3} parent=39 // pred_fallthru
        _
      // Predicated region
      $region49: #{resnet_block_forward.3} parent=39 // pred_check
        %p1529 = pneg %p220
      $region50: #{resnet_block_forward.3} parent=39 // pred_check_branch
        %1531 = sbr.rel (%p1529) target = $region52
      $region51: #{resnet_block_forward.3} parent=39 // pred_region
        _
      $region52: #{resnet_block_forward.3} parent=39 // pred_fallthru
        _
    $region40: #{resnet_block_forward.3} parent=5 // pred_fallthru
      _
    %p1532 = scmp.le.s32.totalorder 2, %s14
    // Predicated region
    $region53: #{resnet_block_forward.3} parent=5 // pred_check
      %p1533 = pneg %p1532
    $region54: #{resnet_block_forward.3} parent=5 // pred_check_branch
      %1535 = sbr.rel (%p1533) target = $region56
    $region55: #{resnet_block_forward.3} parent=5 // pred_region
      %s1536 = ssub.s32 %s14, 2
      // Predicated region
      $region57: #{resnet_block_forward.3} parent=55 // pred_check
        %p1537 = pneg %p174
      $region58: #{resnet_block_forward.3} parent=55 // pred_check_branch
        %1539 = sbr.rel (%p1537) target = $region60
      $region59: #{resnet_block_forward.3} parent=55 // pred_region
        %s1540 = smul.u32 4, %s20
        %p1541 = scmp.lt.s32.totalorder %s1540, 7
        %s1542 = scalar_select %p1541, %s1540, 7
        %s1543 = smul.addr %s1542, 4
        %s1544 = scalar_lea.vmem %s5, %s1543
      $region60: #{resnet_block_forward.3} parent=55 // pred_fallthru
        _
      // Predicated region
      $region61: #{resnet_block_forward.3} parent=55 // pred_check
        %p1545 = pneg %p200
      $region62: #{resnet_block_forward.3} parent=55 // pred_check_branch
        %1547 = sbr.rel (%p1545) target = $region64
      $region63: #{resnet_block_forward.3} parent=55 // pred_region
        %p1548 = scmp.lt.s32.totalorder %s20, 1
        %s1549 = scalar_select %p1548, %s20, 1
        %s1550 = smul.addr %s1549, 8
        %s1551 = scalar_lea.vmem %s6, %s1550
      $region64: #{resnet_block_forward.3} parent=55 // pred_fallthru
        _
      // Predicated region
      $region65: #{resnet_block_forward.3} parent=55 // pred_check
        %p1552 = pneg %p226
      $region66: #{resnet_block_forward.3} parent=55 // pred_check_branch
        %1554 = sbr.rel (%p1552) target = $region68
      $region67: #{resnet_block_forward.3} parent=55 // pred_region
        %p1555 = scmp.lt.s32.totalorder %s20, 1
        %s1556 = scalar_select %p1555, %s20, 1
        %s1557 = smul.addr %s1556, 8
        %s1558 = scalar_lea.vmem %s7, %s1557
      $region68: #{resnet_block_forward.3} parent=55 // pred_fallthru
        _
    $region56: #{resnet_block_forward.3} parent=5 // pred_fallthru
      _
  $region6: #{resnet_block_forward.3} parent=0 // loop_footer
    %s18 = sadd.s32 1, %s14
  $region7: #{resnet_block_forward.3} parent=0 // loop_footer_branch
    %13 = sbr.rel target = $region3
  $region8: #{resnet_block_forward.3} parent=0 // loop_exit
    _

</llo_original>
